<compile_context>
chip_gen: v5e
topology: v5e:2x2
jax: 0.10.0
libtpu: 0.0.40
codegen_flags: <defaults>
</compile_context>

<pallas_src>
import math

import jax
import jax.numpy as jnp
from jax.experimental import pallas as pl
from jax.experimental.pallas import tpu as pltpu

F32 = jnp.float32
BF16 = jnp.bfloat16


# --------------------------------------------------------------------------- #
# compiler-param / spec helpers
# --------------------------------------------------------------------------- #
_VMEM_CAP = [None]


def _vmem_cap_bytes():
    if _VMEM_CAP[0] is None:
        try:
            _VMEM_CAP[0] = int(pltpu.get_tpu_info().vmem_capacity_bytes)
        except Exception:  # pragma: no cover - conservative fallback
            _VMEM_CAP[0] = 128 * 1024 * 1024
    return _VMEM_CAP[0]


def _compiler_params(need_bytes):
    """Size the scoped-VMEM request from the actual footprint, capped below
    physical capacity (leaves >=16 MiB headroom -> ~48 MiB cap on v7x)."""
    cap = _vmem_cap_bytes()
    limit = int(min(max(need_bytes, 32 << 20), max(cap - (16 << 20), 32 << 20)))
    return pltpu.CompilerParams(dimension_semantics=("parallel",),
                                vmem_limit_bytes=limit)


def _nbytes(arrs):
    return sum(int(math.prod(a.shape)) * a.dtype.itemsize for a in arrs)


def _wspec(shape):
    """Whole-array operand that stays resident in VMEM across grid steps."""
    nd = len(shape)
    return pl.BlockSpec(tuple(shape), lambda b: (0,) * nd)


def _bspec(bt, tail):
    """(Bt, *tail) block of a batch-major array."""
    nd = len(tail)
    return pl.BlockSpec((bt,) + tuple(tail), lambda b: (b,) + (0,) * nd)


def _choose_bt(B, per_elem_bytes, rows_per_elem, target_rows=512,
               budget_bytes=20 << 20):
    """Smallest divisor of B whose batch-tile fills the MXU M dim (>=512 rows),
    capped so per-step (double-buffered) blocks stay within a VMEM budget."""
    best = 1
    for cand in range(1, B + 1):
        if B % cand:
            continue
        if cand > 1 and cand * per_elem_bytes > budget_bytes:
            break
        best = cand
        if cand * rows_per_elem >= target_rows:
            break
    return best


# --------------------------------------------------------------------------- #
# in-kernel building blocks
# --------------------------------------------------------------------------- #
def _gelu(x):
    # tanh-form GELU (jnp.tanh -> EUP slot).  Max |err| vs. exact erf GELU ~1e-3,
    # below the bf16 matmul noise introduced elsewhere.
    c = 0.7978845608028654  # sqrt(2/pi)
    return 0.5 * x * (1.0 + jnp.tanh(c * (x + 0.044715 * x * x * x)))


def _conv1x1(h, w_ref, b_ref, rows):
    ci = h.shape[-1]
    y = jnp.dot(h.reshape(rows, ci).astype(BF16), w_ref[...],
                preferred_element_type=F32)
    return y.reshape(h.shape[:-1] + (w_ref.shape[-1],)) + b_ref[...]


def _init_pad_border(pad_ref, Bt, Hh, Ww, cmid):
    # Zero only the border slivers (rows 0 / Hh+1 and the two shifted-tap edge
    # columns); the interior is fully overwritten by every _conv3x3 call.  Done
    # once per grid step (NOT under pl.when(pid==0): under megacore "parallel"
    # sharding only one core would ever see pid==0 and the other core's scratch
    # border would stay uninitialized).
    pad_ref[:, 0:1, :, :] = jnp.zeros((Bt, 1, Ww, 3 * cmid), F32)
    pad_ref[:, Hh + 1:Hh + 2, :, :] = jnp.zeros((Bt, 1, Ww, 3 * cmid), F32)
    pad_ref[:, 1:Hh + 1, 0:1, 0:cmid] = jnp.zeros((Bt, Hh, 1, cmid), F32)
    pad_ref[:, 1:Hh + 1, Ww - 1:Ww, 2 * cmid:3 * cmid] = \
        jnp.zeros((Bt, Hh, 1, cmid), F32)


def _conv3x3(h, wcat_ref, b_ref, pad_ref, Bt, Hh, Ww):
    """Zero-padded 3x3 conv (stride 1, pad 1) over a (Bt, H, W, ci) tile.

    pad_ref[b, y, x, dx*ci + c] holds the dx-shifted, H-padded input, so the
    9-tap conv reduces to 3 MXU matmuls with K = 3*ci (one per dy), with
    M = Bt*H*W rows.  No explicit zero accumulator: dot -> add -> add.
    """
    ci = h.shape[-1]
    co = wcat_ref.shape[-1]
    rows = Bt * Hh * Ww
    pad_ref[:, 1:Hh + 1, :, ci:2 * ci] = h                          # dx=1 centre
    pad_ref[:, 1:Hh + 1, 1:Ww, 0:ci] = h[:, :, :Ww - 1, :]          # dx=0 left
    pad_ref[:, 1:Hh + 1, 0:Ww - 1, 2 * ci:3 * ci] = h[:, :, 1:, :]  # dx=2 right
    acc = None
    for dy in range(3):
        lhs = pad_ref[:, dy:dy + Hh, :, :].reshape(rows, 3 * ci).astype(BF16)
        term = jnp.dot(lhs, wcat_ref[dy], preferred_element_type=F32)
        acc = term if acc is None else acc + term
    return acc.reshape(Bt, Hh, Ww, co) + b_ref[...]


def _block_tail(h, w2_ref, b2_ref, w3_ref, b3_ref, w4_ref, b4_ref,
                pad_ref, Bt, Hh, Ww, use_3x3):
    """gelu->c2->gelu->c3->gelu->c4 (c1 is done by each kernel's prologue)."""
    rows = Bt * Hh * Ww
    if use_3x3:
        mid = lambda v, w, b: _conv3x3(v, w, b, pad_ref, Bt, Hh, Ww)
    else:
        mid = lambda v, w, b: _conv1x1(v, w, b, rows)
    h = mid(_gelu(h), w2_ref, b2_ref)
    h = mid(_gelu(h), w3_ref, b3_ref)
    return _conv1x1(_gelu(h), w4_ref, b4_ref, rows)


# --------------------------------------------------------------------------- #
# pallas_call wrappers
# --------------------------------------------------------------------------- #
def _enc_block_pallas(x, acts, e, proj_t, params, *, Bt, cmid, zdim, use_3x3):
    """enc Block (2*width -> cmid -> zdim) fused with the SWAE projections.

    Emits z (NHWC) and the z / e random projections already transposed to
    (Lp, n) per batch element so the downstream sort + distance kernel needs
    no host-side transpose.
    """
    B, Hh, Ww, width = x.shape
    n = Hh * Ww
    Lp = proj_t.shape[-1]
    rows = Bt * n

    def kernel(x_ref, a_ref, e_ref, p_ref, w1x_ref, w1a_ref, b1_ref,
               w2_ref, b2_ref, w3_ref, b3_ref, w4_ref, b4_ref,
               z_ref, zp_ref, ep_ref, *scratch):
        pad_ref = scratch[0] if use_3x3 else None
        if use_3x3:
            _init_pad_border(pad_ref, Bt, Hh, Ww, cmid)
        # c1 over the channel-concat [x, acts] as a split matmul (gelu is
        # elementwise, so gelu(cat) == cat(gelu(x), gelu(acts))).
        gx = _gelu(x_ref[...]).reshape(rows, width).astype(BF16)
        ga = _gelu(a_ref[...]).reshape(rows, width).astype(BF16)
        h = (jnp.dot(gx, w1x_ref[...], preferred_element_type=F32)
             + jnp.dot(ga, w1a_ref[...], preferred_element_type=F32))
        h = h.reshape(Bt, Hh, Ww, cmid) + b1_ref[...]
        z = _block_tail(h, w2_ref, b2_ref, w3_ref, b3_ref, w4_ref, b4_ref,
                        pad_ref, Bt, Hh, Ww, use_3x3)
        z_ref[...] = z
        # SWAE projections: two dots against the resident (zdim, Lp) projection
        # matrix, then per-batch 2D transposes (XLU) to a lane-dense (Lp, n).
        zpr = jnp.dot(z.reshape(rows, zdim).astype(BF16), p_ref[...],
                      preferred_element_type=F32)
        epr = jnp.dot(e_ref[...].reshape(rows, zdim).astype(BF16), p_ref[...],
                      preferred_element_type=F32)
        for i in range(Bt):
            zp_ref[i] = zpr[i * n:(i + 1) * n, :].T
            ep_ref[i] = epr[i * n:(i + 1) * n, :].T

    scratch = [pltpu.VMEM((Bt, Hh + 2, Ww, 3 * cmid), F32)] if use_3x3 else []
    blk_bytes = Bt * n * (2 * width + 2 * zdim + 2 * Lp) * 4
    pad_bytes = Bt * (Hh + 2) * Ww * 3 * cmid * 4 if use_3x3 else 0
    need = 2 * blk_bytes + pad_bytes + _nbytes(list(params) + [proj_t]) + (2 << 20)

    return pl.pallas_call(
        kernel,
        out_shape=(jax.ShapeDtypeStruct((B, Hh, Ww, zdim), F32),
                   jax.ShapeDtypeStruct((B, Lp, n), F32),
                   jax.ShapeDtypeStruct((B, Lp, n), F32)),
        grid=(B // Bt,),
        in_specs=[_bspec(Bt, (Hh, Ww, width)), _bspec(Bt, (Hh, Ww, width)),
                  _bspec(Bt, (n, zdim)), _wspec(proj_t.shape)]
                 + [_wspec(p.shape) for p in params],
        out_specs=(_bspec(Bt, (Hh, Ww, zdim)),
                   _bspec(Bt, (Lp, n)), _bspec(Bt, (Lp, n))),
        scratch_shapes=scratch,
        compiler_params=_compiler_params(need),
    )(x, acts, e, proj_t, *params)


def _prior_resnet_pallas(x, z, sg, drop, zw, zb, prior_params, resnet_params,
                         *, Bt, cmid, use_3x3):
    """Fused prior + z-projection + resnet:

        xpp = prior(x)            (c4 pre-sliced to the xpp channels)
        x   = x + xpp + z_proj(z * sigmoid(mask) * drop)
        out = x + resnet_block(x)

    One pallas_call, one out_ref write per step (no intermediate HBM round trip
    of x, no out_ref write/read/write pattern).
    """
    B, Hh, Ww, width = x.shape
    zdim = z.shape[-1]
    n = Hh * Ww
    rows = Bt * n

    def kernel(x_ref, z_ref, sg_ref, d_ref, zw_ref, zb_ref,
               pw1, pb1, pw2, pb2, pw3, pb3, pw4, pb4,
               rw1, rb1, rw2, rb2, rw3, rb3, rw4, rb4,
               out_ref, *scratch):
        pad_ref = scratch[0] if use_3x3 else None
        if use_3x3:
            _init_pad_border(pad_ref, Bt, Hh, Ww, cmid)
        xv = x_ref[...]
        # ----- prior block: xpp (c4 pre-sliced host-side to width channels) ---
        h = _conv1x1(_gelu(xv), pw1, pb1, rows)
        xpp = _block_tail(h, pw2, pb2, pw3, pb3, pw4, pb4,
                          pad_ref, Bt, Hh, Ww, use_3x3)
        # ----- z gating (precomputed sigmoid gate) + 1x1 projection -----------
        base = pl.program_id(0) * Bt                    # Bt-safe batch offset
        zg = z_ref[...] * sg_ref[...]
        zm = jnp.stack([zg[i] * d_ref[base + i] for i in range(Bt)], axis=0)
        zp = jnp.dot(zm.reshape(rows, zdim).astype(BF16), zw_ref[...],
                     preferred_element_type=F32).reshape(Bt, Hh, Ww, width)
        xz = xv + xpp + zp + zb_ref[...]
        # ----- resnet block (residual) ----------------------------------------
        h2 = _conv1x1(_gelu(xz), rw1, rb1, rows)
        h2 = _block_tail(h2, rw2, rb2, rw3, rb3, rw4, rb4,
                         pad_ref, Bt, Hh, Ww, use_3x3)
        out_ref[...] = xz + h2                          # single output write

    scratch = [pltpu.VMEM((Bt, Hh + 2, Ww, 3 * cmid), F32)] if use_3x3 else []
    blk_bytes = Bt * n * (2 * width + zdim) * 4
    pad_bytes = Bt * (Hh + 2) * Ww * 3 * cmid * 4 if use_3x3 else 0
    need = (2 * blk_bytes + pad_bytes
            + _nbytes(list(prior_params) + list(resnet_params) + [zw, zb, sg])
            + (2 << 20))

    return pl.pallas_call(
        kernel,
        out_shape=jax.ShapeDtypeStruct((B, Hh, Ww, width), F32),
        grid=(B // Bt,),
        in_specs=[_bspec(Bt, (Hh, Ww, width)), _bspec(Bt, (Hh, Ww, zdim)),
                  _wspec(sg.shape),
                  pl.BlockSpec(memory_space=pltpu.MemorySpace.SMEM),
                  _wspec(zw.shape), _wspec(zb.shape)]
                 + [_wspec(p.shape) for p in prior_params]
                 + [_wspec(p.shape) for p in resnet_params],
        out_specs=_bspec(Bt, (Hh, Ww, width)),
        scratch_shapes=scratch,
        compiler_params=_compiler_params(need),
    )(x, z, sg, drop, zw, zb, *prior_params, *resnet_params)


def _swae_distance_pallas(z_sorted, e_sorted, n_valid):
    """sum((z - e)^2, axis=0) / n_valid, gridded over pixel lane-tiles with a
    lane-dense (1, tn) output per step.  Inputs are (B*Lp, n)."""
    R, n = z_sorted.shape
    inv = 1.0 / float(n_valid)
    tn = n
    if n % 128 == 0:
        tn = 128
        for cand in (2048, 1024, 512, 256):
            if n % cand == 0 and R * cand * 4 * 4 <= (16 << 20):
                tn = cand
                break

    def kernel(z_ref, e_ref, out_ref):
        d = z_ref[...] - e_ref[...]
        out_ref[...] = jnp.sum(d * d, axis=0, keepdims=True) * inv

    out = pl.pallas_call(
        kernel,
        out_shape=jax.ShapeDtypeStruct((1, n), F32),
        grid=(n // tn,),
        in_specs=[pl.BlockSpec((R, tn), lambda i: (0, i))] * 2,
        out_specs=pl.BlockSpec((1, tn), lambda i: (0, i)),
        compiler_params=pltpu.CompilerParams(dimension_semantics=("parallel",)),
    )(z_sorted, e_sorted)
    return out.reshape(n)


# --------------------------------------------------------------------------- #
# module wrapper
# --------------------------------------------------------------------------- #
class DecBlockPallas:
    """JAX/Pallas re-implementation of DecBlock.forward."""

    def __init__(self, key, *, width, zdim, bottleneck_multiple, res, mixin,
                 n_blocks, n_projections=50):
        self.base = res
        self.mixin = mixin
        self.width = width
        self.zdim = zdim
        self.n_projections = n_projections
        # pad the projection count to a lane-dense multiple of 128; padded
        # columns are zero and contribute nothing to the SWAE distance.
        self.n_proj_pad = max(128, ((n_projections + 127) // 128) * 128)
        self.use_3x3 = res > 2
        cond = int(width * bottleneck_multiple)
        self.cond = cond

        keys = iter(jax.random.split(key, 32))

        def w1x1(cin, cout, scale=1.0, zero=False):
            if zero:                                  # zero_last (prior.c4)
                return jnp.zeros((cin, cout), BF16)
            return (jax.random.normal(next(keys), (cin, cout), F32)
                    * (scale / math.sqrt(cin))).astype(BF16)

        def wmid(cin, cout):
            if self.use_3x3:
                w = (jax.random.normal(next(keys), (3, 3, cin, cout), F32)
                     * (1.0 / math.sqrt(9 * cin)))
                # fold the dx taps into K: (3, 3, cin, cout) -> (3, 3*cin, cout)
                return w.reshape(3, 3 * cin, cout).astype(BF16)
            return w1x1(cin, cout)

        def bias(cout):
            return jnp.zeros((1, cout), F32)  # VDVAE get_conv uses zero bias

        # enc: Block(2*width -> cond -> 2*zdim); only the first zdim output
        # channels (z) are used -> c4 pre-sliced; c1 over cat([x, acts]) split
        # into per-input halves (gelu is elementwise, so this is exact).
        w1_full = w1x1(2 * width, cond)
        self.enc_params = (w1_full[:width], w1_full[width:], bias(cond),
                           wmid(cond, cond), bias(cond),
                           wmid(cond, cond), bias(cond),
                           w1x1(cond, 2 * zdim)[:, :zdim], bias(zdim))
        # prior: Block(width -> cond -> 2*zdim + width), zero_last=True; only
        # the trailing `width` output channels (xpp) are used -> c4 pre-sliced.
        self.prior_params = (w1x1(width, cond), bias(cond),
                             wmid(cond, cond), bias(cond),
                             wmid(cond, cond), bias(cond),
                             w1x1(cond, width, zero=True), bias(width))
        # z_proj: 1x1 (zdim -> width), weight scaled by sqrt(1/n_blocks)
        self.z_proj_w = w1x1(zdim, width, scale=math.sqrt(1.0 / n_blocks))
        self.z_proj_b = bias(width)
        # resnet: Block(width -> cond -> width), residual, c4 weight scaled
        self.resnet_params = (w1x1(width, cond), bias(cond),
                              wmid(cond, cond), bias(cond),
                              wmid(cond, cond), bias(cond),
                              w1x1(cond, width, scale=math.sqrt(1.0 / n_blocks)),
                              bias(width))
        # mask parameter: torch.ones(1, zdim, res, res) * -10  (stored NHWC)
        self.mask_param = jnp.full((1, res, res, zdim), -10.0, F32)

    def forward(self, xs, activations, drop_layer, key, get_latents=False):
        # xs / activations: dicts of NCHW arrays (same convention as PyTorch).
        acts_nchw = activations[self.base]
        x_nchw = xs.get(self.base)
        if x_nchw is None:
            x_nchw = jnp.zeros_like(acts_nchw)
        if acts_nchw.shape[0] != x_nchw.shape[0]:
            x_nchw = jnp.tile(x_nchw, (acts_nchw.shape[0], 1, 1, 1))

        x = jnp.transpose(x_nchw, (0, 2, 3, 1)).astype(F32)      # NHWC
        acts = jnp.transpose(acts_nchw, (0, 2, 3, 1)).astype(F32)

        if self.mixin is not None:
            sf = self.base // self.mixin
            mix = jnp.transpose(xs[self.mixin], (0, 2, 3, 1))[..., :x.shape[-1]]
            mix = jnp.repeat(jnp.repeat(mix, sf, axis=1), sf, axis=2)  # nearest
            x = x + mix

        B, Hh, Ww, width = x.shape
        zd = self.zdim
        n = Hh * Ww
        L, Lp = self.n_projections, self.n_proj_pad

        # batch tile: fill the MXU M dim (Bt*H*W) within a conservative VMEM
        # budget (double-buffered blocks + halo scratch).
        per_elem = n * max(2 * width + 2 * zd + 2 * Lp, 2 * width + zd) * 4 * 2
        if self.use_3x3:
            per_elem += (Hh + 2) * Ww * 3 * self.cond * 4
        Bt = _choose_bt(B, per_elem, n)

        # e ~ N(0,1) and unit-sphere projections, generated in plain JAX.
        k_e, k_p = jax.random.split(key)
        e = jax.random.normal(k_e, (B, n, zd), F32)
        proj = jax.random.normal(k_p, (L, zd), F32)
        proj = proj / jnp.linalg.norm(proj, axis=1, keepdims=True)
        proj_t = jnp.zeros((zd, Lp), F32).at[:, :L].set(jnp.transpose(proj))
        proj_t = proj_t.astype(BF16)

        # ------------------- enc + SWAE projections -------------------
        z, z_p, e_p = _enc_block_pallas(x, acts, e, proj_t, self.enc_params,
                                        Bt=Bt, cmid=self.cond, zdim=zd,
                                        use_3x3=self.use_3x3)

        # TODO(synk): torch.sort has no Pallas/Mosaic TPU lowering; the sort over
        # the batch dim stays in plain JAX between the Pallas kernels.
        z_sorted = jnp.sort(z_p, axis=0)   # sort over batch, per (proj, pixel)
        e_sorted = jnp.sort(e_p, axis=0)
        swae = _swae_distance_pallas(z_sorted.reshape(B * Lp, n),
                                     e_sorted.reshape(B * Lp, n),
                                     B * L)                      # (h*w,)

        sg = jax.nn.sigmoid(self.mask_param)   # parameter-sized; computed once
        mask_loss = jnp.mean(sg)

        # ---------- fused prior + z-projection + resnet block ----------
        drop = drop_layer.reshape(-1).astype(F32)
        x = _prior_resnet_pallas(x, z, sg, drop,
                                 self.z_proj_w, self.z_proj_b,
                                 self.prior_params, self.resnet_params,
                                 Bt=Bt, cmid=self.cond, use_3x3=self.use_3x3)

        xs = dict(xs)
        xs[self.base] = jnp.transpose(x, (0, 3, 1, 2))  # back to NCHW
        stats = dict(swae=swae, mask_loss=mask_loss)
        if get_latents:
            stats['z'] = jnp.transpose(z, (0, 3, 1, 2))  # NCHW like PyTorch
        return xs, stats


if __name__ == "__main__":
    key = jax.random.PRNGKey(0)
    k_param, k_x, k_acts, k_fwd = jax.random.split(key, 4)

    B, width, zdim, res = 2, 16, 4, 8
    block = DecBlockPallas(k_param, width=width, zdim=zdim,
                           bottleneck_multiple=0.5, res=res, mixin=None,
                           n_blocks=4)

    xs = {res: jax.random.normal(k_x, (B, width, res, res), F32)}
    activations = {res: jax.random.normal(k_acts, (B, width, res, res), F32)}
    drop_layer = jnp.array([1.0, 0.0], dtype=F32)

    xs_out, stats = block.forward(xs, activations, drop_layer, k_fwd,
                                  get_latents=True)
    jax.block_until_ready(xs_out[res])
    jax.block_until_ready(stats['swae'])
    jax.block_until_ready(stats['mask_loss'])

    assert xs_out[res].shape == (B, width, res, res)
    assert stats['swae'].shape == (res * res,)
    assert stats['z'].shape == (B, zdim, res, res)
    assert bool(jnp.isfinite(xs_out[res]).all())
    assert bool(jnp.isfinite(stats['swae']).all())
    print("KERNEL_OK")
</pallas_src>

<mosaic_0001>
module attributes {stable_mosaic.version = 11 : i64} {
  func.func @kernel(%arg0: i32, %arg1: memref<2x8x8x16xf32, #tpu.memory_space<vmem>>, %arg2: memref<2x8x8x16xf32, #tpu.memory_space<vmem>>, %arg3: memref<2x64x4xf32, #tpu.memory_space<vmem>>, %arg4: memref<4x128xbf16, #tpu.memory_space<vmem>>, %arg5: memref<16x8xbf16, #tpu.memory_space<vmem>>, %arg6: memref<16x8xbf16, #tpu.memory_space<vmem>>, %arg7: memref<1x8xf32, #tpu.memory_space<vmem>>, %arg8: memref<3x24x8xbf16, #tpu.memory_space<vmem>>, %arg9: memref<1x8xf32, #tpu.memory_space<vmem>>, %arg10: memref<3x24x8xbf16, #tpu.memory_space<vmem>>, %arg11: memref<1x8xf32, #tpu.memory_space<vmem>>, %arg12: memref<8x4xbf16, #tpu.memory_space<vmem>>, %arg13: memref<1x4xf32, #tpu.memory_space<vmem>>, %arg14: memref<2x8x8x4xf32, #tpu.memory_space<vmem>>, %arg15: memref<2x128x64xf32, #tpu.memory_space<vmem>>, %arg16: memref<2x128x64xf32, #tpu.memory_space<vmem>>, %arg17: memref<2x10x8x24xf32, #tpu.memory_space<vmem>>) attributes {dimension_semantics = [#tpu.dimension_semantics<parallel>], iteration_bounds = array<i64: 1>, scalar_prefetch = 0 : i64, scratch_operands = 1 : i64, tpu.core_type = #tpu.core_type<tc>, window_params = [{transform_indices = @transform_0, window_bounds = array<i64: 2, 8, 8, 16>}, {transform_indices = @transform_1, window_bounds = array<i64: 2, 8, 8, 16>}, {transform_indices = @transform_2, window_bounds = array<i64: 2, 64, 4>}, {pipeline_mode = #tpu.pipeline_mode<synchronous>, transform_indices = @transform_3, window_bounds = array<i64: 4, 128>}, {pipeline_mode = #tpu.pipeline_mode<synchronous>, transform_indices = @transform_4, window_bounds = array<i64: 16, 8>}, {pipeline_mode = #tpu.pipeline_mode<synchronous>, transform_indices = @transform_5, window_bounds = array<i64: 16, 8>}, {pipeline_mode = #tpu.pipeline_mode<synchronous>, transform_indices = @transform_6, window_bounds = array<i64: 1, 8>}, {pipeline_mode = #tpu.pipeline_mode<synchronous>, transform_indices = @transform_7, window_bounds = array<i64: 3, 24, 8>}, {pipeline_mode = #tpu.pipeline_mode<synchronous>, transform_indices = @transform_8, window_bounds = array<i64: 1, 8>}, {pipeline_mode = #tpu.pipeline_mode<synchronous>, transform_indices = @transform_9, window_bounds = array<i64: 3, 24, 8>}, {pipeline_mode = #tpu.pipeline_mode<synchronous>, transform_indices = @transform_10, window_bounds = array<i64: 1, 8>}, {pipeline_mode = #tpu.pipeline_mode<synchronous>, transform_indices = @transform_11, window_bounds = array<i64: 8, 4>}, {pipeline_mode = #tpu.pipeline_mode<synchronous>, transform_indices = @transform_12, window_bounds = array<i64: 1, 4>}, {transform_indices = @transform_13, window_bounds = array<i64: 2, 8, 8, 4>}, {transform_indices = @transform_14, window_bounds = array<i64: 2, 128, 64>}, {transform_indices = @transform_15, window_bounds = array<i64: 2, 128, 64>}]} {
    %cst = arith.constant 0.000000e+00 : f32
    %0 = vector.broadcast %cst : f32 to vector<2x1x8x24xf32>
    %c0 = arith.constant 0 : index
    %c0_0 = arith.constant 0 : index
    %c0_1 = arith.constant 0 : index
    %c0_2 = arith.constant 0 : index
    %1 = vector.load %arg17[%c0, %c0_0, %c0_1, %c0_2] : memref<2x10x8x24xf32, #tpu.memory_space<vmem>>, vector<2x1x8x24xf32>
    tpu.vector_store %arg17[%c0, %c0_0, %c0_1, %c0_2], %0 {strides = array<i32>} : memref<2x10x8x24xf32, #tpu.memory_space<vmem>>, vector<2x1x8x24xf32>,
    %cst_3 = arith.constant 0.000000e+00 : f32
    %2 = vector.broadcast %cst_3 : f32 to vector<2x1x8x24xf32>
    %c0_4 = arith.constant 0 : index
    %c9 = arith.constant 9 : index
    %c0_5 = arith.constant 0 : index
    %c0_6 = arith.constant 0 : index
    %3 = vector.load %arg17[%c0_4, %c9, %c0_5, %c0_6] : memref<2x10x8x24xf32, #tpu.memory_space<vmem>>, vector<2x1x8x24xf32>
    tpu.vector_store %arg17[%c0_4, %c9, %c0_5, %c0_6], %2 {strides = array<i32>} : memref<2x10x8x24xf32, #tpu.memory_space<vmem>>, vector<2x1x8x24xf32>,
    %cst_7 = arith.constant 0.000000e+00 : f32
    %4 = vector.broadcast %cst_7 : f32 to vector<2x8x1x8xf32>
    %c0_8 = arith.constant 0 : index
    %c1 = arith.constant 1 : index
    %c0_9 = arith.constant 0 : index
    %c0_10 = arith.constant 0 : index
    %5 = vector.load %arg17[%c0_8, %c1, %c0_9, %c0_10] : memref<2x10x8x24xf32, #tpu.memory_space<vmem>>, vector<2x8x1x8xf32>
    tpu.vector_store %arg17[%c0_8, %c1, %c0_9, %c0_10], %4 {strides = array<i32>} : memref<2x10x8x24xf32, #tpu.memory_space<vmem>>, vector<2x8x1x8xf32>,
    %cst_11 = arith.constant 0.000000e+00 : f32
    %6 = vector.broadcast %cst_11 : f32 to vector<2x8x1x8xf32>
    %c0_12 = arith.constant 0 : index
    %c1_13 = arith.constant 1 : index
    %c7 = arith.constant 7 : index
    %c16 = arith.constant 16 : index
    %7 = vector.load %arg17[%c0_12, %c1_13, %c7, %c16] : memref<2x10x8x24xf32, #tpu.memory_space<vmem>>, vector<2x8x1x8xf32>
    tpu.vector_store %arg17[%c0_12, %c1_13, %c7, %c16], %6 {strides = array<i32>} : memref<2x10x8x24xf32, #tpu.memory_space<vmem>>, vector<2x8x1x8xf32>,
    %c0_14 = arith.constant 0 : index
    %c0_15 = arith.constant 0 : index
    %c0_16 = arith.constant 0 : index
    %c0_17 = arith.constant 0 : index
    %8 = vector.load %arg1[%c0_14, %c0_15, %c0_16, %c0_17] : memref<2x8x8x16xf32, #tpu.memory_space<vmem>>, vector<2x8x8x16xf32>
    %cst_18 = arith.constant 5.000000e-01 : f32
    %9 = vector.broadcast %cst_18 : f32 to vector<2x8x8x16xf32>
    %10 = arith.mulf %9, %8 : vector<2x8x8x16xf32>
    %cst_19 = arith.constant 4.471500e-02 : f32
    %11 = vector.broadcast %cst_19 : f32 to vector<2x8x8x16xf32>
    %12 = arith.mulf %11, %8 : vector<2x8x8x16xf32>
    %13 = arith.mulf %12, %8 : vector<2x8x8x16xf32>
    %14 = arith.mulf %13, %8 : vector<2x8x8x16xf32>
    %15 = arith.addf %8, %14 : vector<2x8x8x16xf32>
    %cst_20 = arith.constant 0.797884583 : f32
    %16 = vector.broadcast %cst_20 : f32 to vector<2x8x8x16xf32>
    %17 = arith.mulf %16, %15 : vector<2x8x8x16xf32>
    %18 = math.tanh %17 : vector<2x8x8x16xf32>
    %cst_21 = arith.constant 1.000000e+00 : f32
    %19 = vector.broadcast %cst_21 : f32 to vector<2x8x8x16xf32>
    %20 = arith.addf %19, %18 : vector<2x8x8x16xf32>
    %21 = arith.mulf %10, %20 : vector<2x8x8x16xf32>
    %22 = vector.shape_cast %21 : vector<2x8x8x16xf32> to vector<128x16xf32>
    %23 = arith.truncf %22 : vector<128x16xf32> to vector<128x16xbf16>
    %c0_22 = arith.constant 0 : index
    %c0_23 = arith.constant 0 : index
    %c0_24 = arith.constant 0 : index
    %c0_25 = arith.constant 0 : index
    %24 = vector.load %arg2[%c0_22, %c0_23, %c0_24, %c0_25] : memref<2x8x8x16xf32, #tpu.memory_space<vmem>>, vector<2x8x8x16xf32>
    %cst_26 = arith.constant 5.000000e-01 : f32
    %25 = vector.broadcast %cst_26 : f32 to vector<2x8x8x16xf32>
    %26 = arith.mulf %25, %24 : vector<2x8x8x16xf32>
    %cst_27 = arith.constant 4.471500e-02 : f32
    %27 = vector.broadcast %cst_27 : f32 to vector<2x8x8x16xf32>
    %28 = arith.mulf %27, %24 : vector<2x8x8x16xf32>
    %29 = arith.mulf %28, %24 : vector<2x8x8x16xf32>
    %30 = arith.mulf %29, %24 : vector<2x8x8x16xf32>
    %31 = arith.addf %24, %30 : vector<2x8x8x16xf32>
    %cst_28 = arith.constant 0.797884583 : f32
    %32 = vector.broadcast %cst_28 : f32 to vector<2x8x8x16xf32>
    %33 = arith.mulf %32, %31 : vector<2x8x8x16xf32>
    %34 = math.tanh %33 : vector<2x8x8x16xf32>
    %cst_29 = arith.constant 1.000000e+00 : f32
    %35 = vector.broadcast %cst_29 : f32 to vector<2x8x8x16xf32>
    %36 = arith.addf %35, %34 : vector<2x8x8x16xf32>
    %37 = arith.mulf %26, %36 : vector<2x8x8x16xf32>
    %38 = vector.shape_cast %37 : vector<2x8x8x16xf32> to vector<128x16xf32>
    %39 = arith.truncf %38 : vector<128x16xf32> to vector<128x16xbf16>
    %c0_30 = arith.constant 0 : index
    %c0_31 = arith.constant 0 : index
    %40 = vector.load %arg5[%c0_30, %c0_31] : memref<16x8xbf16, #tpu.memory_space<vmem>>, vector<16x8xbf16>
    %cst_32 = arith.constant dense<0.000000e+00> : vector<128x8xf32>
    %41 = tpu.matmul %23, %40, %cst_32 {dimension_numbers = #tpu.dot_dimension_numbers<[1], [0], [0], [1], [0, 0, 1, 1], [], []>} : vector<128x16xbf16>, vector<16x8xbf16>, vector<128x8xf32> -> vector<128x8xf32>
    %c0_33 = arith.constant 0 : index
    %c0_34 = arith.constant 0 : index
    %42 = vector.load %arg6[%c0_33, %c0_34] : memref<16x8xbf16, #tpu.memory_space<vmem>>, vector<16x8xbf16>
    %cst_35 = arith.constant dense<0.000000e+00> : vector<128x8xf32>
    %43 = tpu.matmul %39, %42, %cst_35 {dimension_numbers = #tpu.dot_dimension_numbers<[1], [0], [0], [1], [0, 0, 1, 1], [], []>} : vector<128x16xbf16>, vector<16x8xbf16>, vector<128x8xf32> -> vector<128x8xf32>
    %44 = arith.addf %41, %43 : vector<128x8xf32>
    %45 = vector.shape_cast %44 : vector<128x8xf32> to vector<2x8x8x8xf32>
    %c0_36 = arith.constant 0 : index
    %c0_37 = arith.constant 0 : index
    %46 = vector.load %arg7[%c0_36, %c0_37] : memref<1x8xf32, #tpu.memory_space<vmem>>, vector<1x8xf32>
    %47 = vector.shape_cast %46 : vector<1x8xf32> to vector<1x1x1x8xf32>
    %48 = vector.broadcast %47 : vector<1x1x1x8xf32> to vector<2x8x8x8xf32>
    %49 = arith.addf %45, %48 : vector<2x8x8x8xf32>
    %cst_38 = arith.constant 5.000000e-01 : f32
    %50 = vector.broadcast %cst_38 : f32 to vector<2x8x8x8xf32>
    %51 = arith.mulf %50, %49 : vector<2x8x8x8xf32>
    %cst_39 = arith.constant 4.471500e-02 : f32
    %52 = vector.broadcast %cst_39 : f32 to vector<2x8x8x8xf32>
    %53 = arith.mulf %52, %49 : vector<2x8x8x8xf32>
    %54 = arith.mulf %53, %49 : vector<2x8x8x8xf32>
    %55 = arith.mulf %54, %49 : vector<2x8x8x8xf32>
    %56 = arith.addf %49, %55 : vector<2x8x8x8xf32>
    %cst_40 = arith.constant 0.797884583 : f32
    %57 = vector.broadcast %cst_40 : f32 to vector<2x8x8x8xf32>
    %58 = arith.mulf %57, %56 : vector<2x8x8x8xf32>
    %59 = math.tanh %58 : vector<2x8x8x8xf32>
    %cst_41 = arith.constant 1.000000e+00 : f32
    %60 = vector.broadcast %cst_41 : f32 to vector<2x8x8x8xf32>
    %61 = arith.addf %60, %59 : vector<2x8x8x8xf32>
    %62 = arith.mulf %51, %61 : vector<2x8x8x8xf32>
    %c0_42 = arith.constant 0 : index
    %c1_43 = arith.constant 1 : index
    %c0_44 = arith.constant 0 : index
    %c8 = arith.constant 8 : index
    %63 = vector.load %arg17[%c0_42, %c1_43, %c0_44, %c8] : memref<2x10x8x24xf32, #tpu.memory_space<vmem>>, vector<2x8x8x8xf32>
    tpu.vector_store %arg17[%c0_42, %c1_43, %c0_44, %c8], %62 {strides = array<i32>} : memref<2x10x8x24xf32, #tpu.memory_space<vmem>>, vector<2x8x8x8xf32>,
    %64 = vector.extract_strided_slice %62 {offsets = [0, 0, 0, 0], sizes = [2, 8, 7, 8], strides = [1, 1, 1, 1]} : vector<2x8x8x8xf32> to vector<2x8x7x8xf32>
    %c0_45 = arith.constant 0 : index
    %c1_46 = arith.constant 1 : index
    %c1_47 = arith.constant 1 : index
    %c0_48 = arith.constant 0 : index
    %65 = vector.load %arg17[%c0_45, %c1_46, %c1_47, %c0_48] : memref<2x10x8x24xf32, #tpu.memory_space<vmem>>, vector<2x8x7x8xf32>
    tpu.vector_store %arg17[%c0_45, %c1_46, %c1_47, %c0_48], %64 {strides = array<i32>} : memref<2x10x8x24xf32, #tpu.memory_space<vmem>>, vector<2x8x7x8xf32>,
    %66 = vector.extract_strided_slice %62 {offsets = [0, 0, 1, 0], sizes = [2, 8, 7, 8], strides = [1, 1, 1, 1]} : vector<2x8x8x8xf32> to vector<2x8x7x8xf32>
    %c0_49 = arith.constant 0 : index
    %c1_50 = arith.constant 1 : index
    %c0_51 = arith.constant 0 : index
    %c16_52 = arith.constant 16 : index
    %67 = vector.load %arg17[%c0_49, %c1_50, %c0_51, %c16_52] : memref<2x10x8x24xf32, #tpu.memory_space<vmem>>, vector<2x8x7x8xf32>
    tpu.vector_store %arg17[%c0_49, %c1_50, %c0_51, %c16_52], %66 {strides = array<i32>} : memref<2x10x8x24xf32, #tpu.memory_space<vmem>>, vector<2x8x7x8xf32>,
    %c0_53 = arith.constant 0 : index
    %c0_54 = arith.constant 0 : index
    %c0_55 = arith.constant 0 : index
    %c0_56 = arith.constant 0 : index
    %68 = vector.load %arg17[%c0_53, %c0_54, %c0_55, %c0_56] : memref<2x10x8x24xf32, #tpu.memory_space<vmem>>, vector<2x8x8x24xf32>
    %69 = vector.shape_cast %68 : vector<2x8x8x24xf32> to vector<128x24xf32>
    %70 = arith.truncf %69 : vector<128x24xf32> to vector<128x24xbf16>
    %c0_57 = arith.constant 0 : index
    %c0_58 = arith.constant 0 : index
    %c0_59 = arith.constant 0 : index
    %71 = vector.load %arg8[%c0_57, %c0_58, %c0_59] : memref<3x24x8xbf16, #tpu.memory_space<vmem>>, vector<1x24x8xbf16>
    %72 = vector.shape_cast %71 : vector<1x24x8xbf16> to vector<24x8xbf16>
    %cst_60 = arith.constant dense<0.000000e+00> : vector<128x8xf32>
    %73 = tpu.matmul %70, %72, %cst_60 {dimension_numbers = #tpu.dot_dimension_numbers<[1], [0], [0], [1], [0, 0, 1, 1], [], []>} : vector<128x24xbf16>, vector<24x8xbf16>, vector<128x8xf32> -> vector<128x8xf32>
    %c0_61 = arith.constant 0 : index
    %c1_62 = arith.constant 1 : index
    %c0_63 = arith.constant 0 : index
    %c0_64 = arith.constant 0 : index
    %74 = vector.load %arg17[%c0_61, %c1_62, %c0_63, %c0_64] : memref<2x10x8x24xf32, #tpu.memory_space<vmem>>, vector<2x8x8x24xf32>
    %75 = vector.shape_cast %74 : vector<2x8x8x24xf32> to vector<128x24xf32>
    %76 = arith.truncf %75 : vector<128x24xf32> to vector<128x24xbf16>
    %c1_65 = arith.constant 1 : index
    %c0_66 = arith.constant 0 : index
    %c0_67 = arith.constant 0 : index
    %77 = vector.load %arg8[%c1_65, %c0_66, %c0_67] : memref<3x24x8xbf16, #tpu.memory_space<vmem>>, vector<1x24x8xbf16>
    %78 = vector.shape_cast %77 : vector<1x24x8xbf16> to vector<24x8xbf16>
    %cst_68 = arith.constant dense<0.000000e+00> : vector<128x8xf32>
    %79 = tpu.matmul %76, %78, %cst_68 {dimension_numbers = #tpu.dot_dimension_numbers<[1], [0], [0], [1], [0, 0, 1, 1], [], []>} : vector<128x24xbf16>, vector<24x8xbf16>, vector<128x8xf32> -> vector<128x8xf32>
    %80 = arith.addf %73, %79 : vector<128x8xf32>
    %c0_69 = arith.constant 0 : index
    %c2 = arith.constant 2 : index
    %c0_70 = arith.constant 0 : index
    %c0_71 = arith.constant 0 : index
    %81 = vector.load %arg17[%c0_69, %c2, %c0_70, %c0_71] : memref<2x10x8x24xf32, #tpu.memory_space<vmem>>, vector<2x8x8x24xf32>
    %82 = vector.shape_cast %81 : vector<2x8x8x24xf32> to vector<128x24xf32>
    %83 = arith.truncf %82 : vector<128x24xf32> to vector<128x24xbf16>
    %c2_72 = arith.constant 2 : index
    %c0_73 = arith.constant 0 : index
    %c0_74 = arith.constant 0 : index
    %84 = vector.load %arg8[%c2_72, %c0_73, %c0_74] : memref<3x24x8xbf16, #tpu.memory_space<vmem>>, vector<1x24x8xbf16>
    %85 = vector.shape_cast %84 : vector<1x24x8xbf16> to vector<24x8xbf16>
    %cst_75 = arith.constant dense<0.000000e+00> : vector<128x8xf32>
    %86 = tpu.matmul %83, %85, %cst_75 {dimension_numbers = #tpu.dot_dimension_numbers<[1], [0], [0], [1], [0, 0, 1, 1], [], []>} : vector<128x24xbf16>, vector<24x8xbf16>, vector<128x8xf32> -> vector<128x8xf32>
    %87 = arith.addf %80, %86 : vector<128x8xf32>
    %88 = vector.shape_cast %87 : vector<128x8xf32> to vector<2x8x8x8xf32>
    %c0_76 = arith.constant 0 : index
    %c0_77 = arith.constant 0 : index
    %89 = vector.load %arg9[%c0_76, %c0_77] : memref<1x8xf32, #tpu.memory_space<vmem>>, vector<1x8xf32>
    %90 = vector.shape_cast %89 : vector<1x8xf32> to vector<1x1x1x8xf32>
    %91 = vector.broadcast %90 : vector<1x1x1x8xf32> to vector<2x8x8x8xf32>
    %92 = arith.addf %88, %91 : vector<2x8x8x8xf32>
    %cst_78 = arith.constant 5.000000e-01 : f32
    %93 = vector.broadcast %cst_78 : f32 to vector<2x8x8x8xf32>
    %94 = arith.mulf %93, %92 : vector<2x8x8x8xf32>
    %cst_79 = arith.constant 4.471500e-02 : f32
    %95 = vector.broadcast %cst_79 : f32 to vector<2x8x8x8xf32>
    %96 = arith.mulf %95, %92 : vector<2x8x8x8xf32>
    %97 = arith.mulf %96, %92 : vector<2x8x8x8xf32>
    %98 = arith.mulf %97, %92 : vector<2x8x8x8xf32>
    %99 = arith.addf %92, %98 : vector<2x8x8x8xf32>
    %cst_80 = arith.constant 0.797884583 : f32
    %100 = vector.broadcast %cst_80 : f32 to vector<2x8x8x8xf32>
    %101 = arith.mulf %100, %99 : vector<2x8x8x8xf32>
    %102 = math.tanh %101 : vector<2x8x8x8xf32>
    %cst_81 = arith.constant 1.000000e+00 : f32
    %103 = vector.broadcast %cst_81 : f32 to vector<2x8x8x8xf32>
    %104 = arith.addf %103, %102 : vector<2x8x8x8xf32>
    %105 = arith.mulf %94, %104 : vector<2x8x8x8xf32>
    %c0_82 = arith.constant 0 : index
    %c1_83 = arith.constant 1 : index
    %c0_84 = arith.constant 0 : index
    %c8_85 = arith.constant 8 : index
    %106 = vector.load %arg17[%c0_82, %c1_83, %c0_84, %c8_85] : memref<2x10x8x24xf32, #tpu.memory_space<vmem>>, vector<2x8x8x8xf32>
    tpu.vector_store %arg17[%c0_82, %c1_83, %c0_84, %c8_85], %105 {strides = array<i32>} : memref<2x10x8x24xf32, #tpu.memory_space<vmem>>, vector<2x8x8x8xf32>,
    %107 = vector.extract_strided_slice %105 {offsets = [0, 0, 0, 0], sizes = [2, 8, 7, 8], strides = [1, 1, 1, 1]} : vector<2x8x8x8xf32> to vector<2x8x7x8xf32>
    %c0_86 = arith.constant 0 : index
    %c1_87 = arith.constant 1 : index
    %c1_88 = arith.constant 1 : index
    %c0_89 = arith.constant 0 : index
    %108 = vector.load %arg17[%c0_86, %c1_87, %c1_88, %c0_89] : memref<2x10x8x24xf32, #tpu.memory_space<vmem>>, vector<2x8x7x8xf32>
    tpu.vector_store %arg17[%c0_86, %c1_87, %c1_88, %c0_89], %107 {strides = array<i32>} : memref<2x10x8x24xf32, #tpu.memory_space<vmem>>, vector<2x8x7x8xf32>,
    %109 = vector.extract_strided_slice %105 {offsets = [0, 0, 1, 0], sizes = [2, 8, 7, 8], strides = [1, 1, 1, 1]} : vector<2x8x8x8xf32> to vector<2x8x7x8xf32>
    %c0_90 = arith.constant 0 : index
    %c1_91 = arith.constant 1 : index
    %c0_92 = arith.constant 0 : index
    %c16_93 = arith.constant 16 : index
    %110 = vector.load %arg17[%c0_90, %c1_91, %c0_92, %c16_93] : memref<2x10x8x24xf32, #tpu.memory_space<vmem>>, vector<2x8x7x8xf32>
    tpu.vector_store %arg17[%c0_90, %c1_91, %c0_92, %c16_93], %109 {strides = array<i32>} : memref<2x10x8x24xf32, #tpu.memory_space<vmem>>, vector<2x8x7x8xf32>,
    %c0_94 = arith.constant 0 : index
    %c0_95 = arith.constant 0 : index
    %c0_96 = arith.constant 0 : index
    %c0_97 = arith.constant 0 : index
    %111 = vector.load %arg17[%c0_94, %c0_95, %c0_96, %c0_97] : memref<2x10x8x24xf32, #tpu.memory_space<vmem>>, vector<2x8x8x24xf32>
    %112 = vector.shape_cast %111 : vector<2x8x8x24xf32> to vector<128x24xf32>
    %113 = arith.truncf %112 : vector<128x24xf32> to vector<128x24xbf16>
    %c0_98 = arith.constant 0 : index
    %c0_99 = arith.constant 0 : index
    %c0_100 = arith.constant 0 : index
    %114 = vector.load %arg10[%c0_98, %c0_99, %c0_100] : memref<3x24x8xbf16, #tpu.memory_space<vmem>>, vector<1x24x8xbf16>
    %115 = vector.shape_cast %114 : vector<1x24x8xbf16> to vector<24x8xbf16>
    %cst_101 = arith.constant dense<0.000000e+00> : vector<128x8xf32>
    %116 = tpu.matmul %113, %115, %cst_101 {dimension_numbers = #tpu.dot_dimension_numbers<[1], [0], [0], [1], [0, 0, 1, 1], [], []>} : vector<128x24xbf16>, vector<24x8xbf16>, vector<128x8xf32> -> vector<128x8xf32>
    %c0_102 = arith.constant 0 : index
    %c1_103 = arith.constant 1 : index
    %c0_104 = arith.constant 0 : index
    %c0_105 = arith.constant 0 : index
    %117 = vector.load %arg17[%c0_102, %c1_103, %c0_104, %c0_105] : memref<2x10x8x24xf32, #tpu.memory_space<vmem>>, vector<2x8x8x24xf32>
    %118 = vector.shape_cast %117 : vector<2x8x8x24xf32> to vector<128x24xf32>
    %119 = arith.truncf %118 : vector<128x24xf32> to vector<128x24xbf16>
    %c1_106 = arith.constant 1 : index
    %c0_107 = arith.constant 0 : index
    %c0_108 = arith.constant 0 : index
    %120 = vector.load %arg10[%c1_106, %c0_107, %c0_108] : memref<3x24x8xbf16, #tpu.memory_space<vmem>>, vector<1x24x8xbf16>
    %121 = vector.shape_cast %120 : vector<1x24x8xbf16> to vector<24x8xbf16>
    %cst_109 = arith.constant dense<0.000000e+00> : vector<128x8xf32>
    %122 = tpu.matmul %119, %121, %cst_109 {dimension_numbers = #tpu.dot_dimension_numbers<[1], [0], [0], [1], [0, 0, 1, 1], [], []>} : vector<128x24xbf16>, vector<24x8xbf16>, vector<128x8xf32> -> vector<128x8xf32>
    %123 = arith.addf %116, %122 : vector<128x8xf32>
    %c0_110 = arith.constant 0 : index
    %c2_111 = arith.constant 2 : index
    %c0_112 = arith.constant 0 : index
    %c0_113 = arith.constant 0 : index
    %124 = vector.load %arg17[%c0_110, %c2_111, %c0_112, %c0_113] : memref<2x10x8x24xf32, #tpu.memory_space<vmem>>, vector<2x8x8x24xf32>
    %125 = vector.shape_cast %124 : vector<2x8x8x24xf32> to vector<128x24xf32>
    %126 = arith.truncf %125 : vector<128x24xf32> to vector<128x24xbf16>
    %c2_114 = arith.constant 2 : index
    %c0_115 = arith.constant 0 : index
    %c0_116 = arith.constant 0 : index
    %127 = vector.load %arg10[%c2_114, %c0_115, %c0_116] : memref<3x24x8xbf16, #tpu.memory_space<vmem>>, vector<1x24x8xbf16>
    %128 = vector.shape_cast %127 : vector<1x24x8xbf16> to vector<24x8xbf16>
    %cst_117 = arith.constant dense<0.000000e+00> : vector<128x8xf32>
    %129 = tpu.matmul %126, %128, %cst_117 {dimension_numbers = #tpu.dot_dimension_numbers<[1], [0], [0], [1], [0, 0, 1, 1], [], []>} : vector<128x24xbf16>, vector<24x8xbf16>, vector<128x8xf32> -> vector<128x8xf32>
    %130 = arith.addf %123, %129 : vector<128x8xf32>
    %131 = vector.shape_cast %130 : vector<128x8xf32> to vector<2x8x8x8xf32>
    %c0_118 = arith.constant 0 : index
    %c0_119 = arith.constant 0 : index
    %132 = vector.load %arg11[%c0_118, %c0_119] : memref<1x8xf32, #tpu.memory_space<vmem>>, vector<1x8xf32>
    %133 = vector.shape_cast %132 : vector<1x8xf32> to vector<1x1x1x8xf32>
    %134 = vector.broadcast %133 : vector<1x1x1x8xf32> to vector<2x8x8x8xf32>
    %135 = arith.addf %131, %134 : vector<2x8x8x8xf32>
    %cst_120 = arith.constant 5.000000e-01 : f32
    %136 = vector.broadcast %cst_120 : f32 to vector<2x8x8x8xf32>
    %137 = arith.mulf %136, %135 : vector<2x8x8x8xf32>
    %cst_121 = arith.constant 4.471500e-02 : f32
    %138 = vector.broadcast %cst_121 : f32 to vector<2x8x8x8xf32>
    %139 = arith.mulf %138, %135 : vector<2x8x8x8xf32>
    %140 = arith.mulf %139, %135 : vector<2x8x8x8xf32>
    %141 = arith.mulf %140, %135 : vector<2x8x8x8xf32>
    %142 = arith.addf %135, %141 : vector<2x8x8x8xf32>
    %cst_122 = arith.constant 0.797884583 : f32
    %143 = vector.broadcast %cst_122 : f32 to vector<2x8x8x8xf32>
    %144 = arith.mulf %143, %142 : vector<2x8x8x8xf32>
    %145 = math.tanh %144 : vector<2x8x8x8xf32>
    %cst_123 = arith.constant 1.000000e+00 : f32
    %146 = vector.broadcast %cst_123 : f32 to vector<2x8x8x8xf32>
    %147 = arith.addf %146, %145 : vector<2x8x8x8xf32>
    %148 = arith.mulf %137, %147 : vector<2x8x8x8xf32>
    %149 = vector.shape_cast %148 : vector<2x8x8x8xf32> to vector<128x8xf32>
    %150 = arith.truncf %149 : vector<128x8xf32> to vector<128x8xbf16>
    %c0_124 = arith.constant 0 : index
    %c0_125 = arith.constant 0 : index
    %151 = vector.load %arg12[%c0_124, %c0_125] : memref<8x4xbf16, #tpu.memory_space<vmem>>, vector<8x4xbf16>
    %cst_126 = arith.constant dense<0.000000e+00> : vector<128x4xf32>
    %152 = tpu.matmul %150, %151, %cst_126 {dimension_numbers = #tpu.dot_dimension_numbers<[1], [0], [0], [1], [0, 0, 1, 1], [], []>} : vector<128x8xbf16>, vector<8x4xbf16>, vector<128x4xf32> -> vector<128x4xf32>
    %153 = vector.shape_cast %152 : vector<128x4xf32> to vector<2x8x8x4xf32>
    %c0_127 = arith.constant 0 : index
    %c0_128 = arith.constant 0 : index
    %154 = vector.load %arg13[%c0_127, %c0_128] : memref<1x4xf32, #tpu.memory_space<vmem>>, vector<1x4xf32>
    %155 = vector.shape_cast %154 : vector<1x4xf32> to vector<1x1x1x4xf32>
    %156 = vector.broadcast %155 : vector<1x1x1x4xf32> to vector<2x8x8x4xf32>
    %157 = arith.addf %153, %156 : vector<2x8x8x4xf32>
    %c0_129 = arith.constant 0 : index
    %c0_130 = arith.constant 0 : index
    %c0_131 = arith.constant 0 : index
    %c0_132 = arith.constant 0 : index
    %158 = vector.load %arg14[%c0_129, %c0_130, %c0_131, %c0_132] : memref<2x8x8x4xf32, #tpu.memory_space<vmem>>, vector<2x8x8x4xf32>
    tpu.vector_store %arg14[%c0_129, %c0_130, %c0_131, %c0_132], %157 {strides = array<i32>} : memref<2x8x8x4xf32, #tpu.memory_space<vmem>>, vector<2x8x8x4xf32>,
    %159 = vector.shape_cast %157 : vector<2x8x8x4xf32> to vector<128x4xf32>
    %160 = arith.truncf %159 : vector<128x4xf32> to vector<128x4xbf16>
    %c0_133 = arith.constant 0 : index
    %c0_134 = arith.constant 0 : index
    %161 = vector.load %arg4[%c0_133, %c0_134] : memref<4x128xbf16, #tpu.memory_space<vmem>>, vector<4x128xbf16>
    %cst_135 = arith.constant dense<0.000000e+00> : vector<128x128xf32>
    %162 = tpu.matmul %160, %161, %cst_135 {dimension_numbers = #tpu.dot_dimension_numbers<[1], [0], [0], [1], [0, 0, 1, 1], [], []>} : vector<128x4xbf16>, vector<4x128xbf16>, vector<128x128xf32> -> vector<128x128xf32>
    %c0_136 = arith.constant 0 : index
    %c0_137 = arith.constant 0 : index
    %c0_138 = arith.constant 0 : index
    %163 = vector.load %arg3[%c0_136, %c0_137, %c0_138] : memref<2x64x4xf32, #tpu.memory_space<vmem>>, vector<2x64x4xf32>
    %164 = vector.shape_cast %163 : vector<2x64x4xf32> to vector<128x4xf32>
    %165 = arith.truncf %164 : vector<128x4xf32> to vector<128x4xbf16>
    %c0_139 = arith.constant 0 : index
    %c0_140 = arith.constant 0 : index
    %166 = vector.load %arg4[%c0_139, %c0_140] : memref<4x128xbf16, #tpu.memory_space<vmem>>, vector<4x128xbf16>
    %cst_141 = arith.constant dense<0.000000e+00> : vector<128x128xf32>
    %167 = tpu.matmul %165, %166, %cst_141 {dimension_numbers = #tpu.dot_dimension_numbers<[1], [0], [0], [1], [0, 0, 1, 1], [], []>} : vector<128x4xbf16>, vector<4x128xbf16>, vector<128x128xf32> -> vector<128x128xf32>
    %168 = vector.extract_strided_slice %162 {offsets = [0, 0], sizes = [64, 128], strides = [1, 1]} : vector<128x128xf32> to vector<64x128xf32>
    %169 = tpu.transpose %168, [1, 0] : vector<64x128xf32> -> vector<128x64xf32>
    %c0_142 = arith.constant 0 : index
    %c0_143 = arith.constant 0 : index
    %c0_144 = arith.constant 0 : index
    %170 = vector.load %arg15[%c0_142, %c0_143, %c0_144] : memref<2x128x64xf32, #tpu.memory_space<vmem>>, vector<1x128x64xf32>
    %171 = vector.shape_cast %170 : vector<1x128x64xf32> to vector<128x64xf32>
    %172 = vector.shape_cast %169 : vector<128x64xf32> to vector<1x128x64xf32>
    tpu.vector_store %arg15[%c0_142, %c0_143, %c0_144], %172 {strides = array<i32>} : memref<2x128x64xf32, #tpu.memory_space<vmem>>, vector<1x128x64xf32>,
    %173 = vector.extract_strided_slice %167 {offsets = [0, 0], sizes = [64, 128], strides = [1, 1]} : vector<128x128xf32> to vector<64x128xf32>
    %174 = tpu.transpose %173, [1, 0] : vector<64x128xf32> -> vector<128x64xf32>
    %c0_145 = arith.constant 0 : index
    %c0_146 = arith.constant 0 : index
    %c0_147 = arith.constant 0 : index
    %175 = vector.load %arg16[%c0_145, %c0_146, %c0_147] : memref<2x128x64xf32, #tpu.memory_space<vmem>>, vector<1x128x64xf32>
    %176 = vector.shape_cast %175 : vector<1x128x64xf32> to vector<128x64xf32>
    %177 = vector.shape_cast %174 : vector<128x64xf32> to vector<1x128x64xf32>
    tpu.vector_store %arg16[%c0_145, %c0_146, %c0_147], %177 {strides = array<i32>} : memref<2x128x64xf32, #tpu.memory_space<vmem>>, vector<1x128x64xf32>,
    %178 = vector.extract_strided_slice %162 {offsets = [64, 0], sizes = [64, 128], strides = [1, 1]} : vector<128x128xf32> to vector<64x128xf32>
    %179 = tpu.transpose %178, [1, 0] : vector<64x128xf32> -> vector<128x64xf32>
    %c1_148 = arith.constant 1 : index
    %c0_149 = arith.constant 0 : index
    %c0_150 = arith.constant 0 : index
    %180 = vector.load %arg15[%c1_148, %c0_149, %c0_150] : memref<2x128x64xf32, #tpu.memory_space<vmem>>, vector<1x128x64xf32>
    %181 = vector.shape_cast %180 : vector<1x128x64xf32> to vector<128x64xf32>
    %182 = vector.shape_cast %179 : vector<128x64xf32> to vector<1x128x64xf32>
    tpu.vector_store %arg15[%c1_148, %c0_149, %c0_150], %182 {strides = array<i32>} : memref<2x128x64xf32, #tpu.memory_space<vmem>>, vector<1x128x64xf32>,
    %183 = vector.extract_strided_slice %167 {offsets = [64, 0], sizes = [64, 128], strides = [1, 1]} : vector<128x128xf32> to vector<64x128xf32>
    %184 = tpu.transpose %183, [1, 0] : vector<64x128xf32> -> vector<128x64xf32>
    %c1_151 = arith.constant 1 : index
    %c0_152 = arith.constant 0 : index
    %c0_153 = arith.constant 0 : index
    %185 = vector.load %arg16[%c1_151, %c0_152, %c0_153] : memref<2x128x64xf32, #tpu.memory_space<vmem>>, vector<1x128x64xf32>
    %186 = vector.shape_cast %185 : vector<1x128x64xf32> to vector<128x64xf32>
    %187 = vector.shape_cast %184 : vector<128x64xf32> to vector<1x128x64xf32>
    tpu.vector_store %arg16[%c1_151, %c0_152, %c0_153], %187 {strides = array<i32>} : memref<2x128x64xf32, #tpu.memory_space<vmem>>, vector<1x128x64xf32>,
    return
  }
  func.func @transform_0(%arg0: i32) -> (i32, i32, i32, i32) {
    %c0_i32 = arith.constant 0 : i32
    %c0_i32_0 = arith.constant 0 : i32
    %c0_i32_1 = arith.constant 0 : i32
    %c0_i32_2 = arith.constant 0 : i32
    return %arg0, %c0_i32, %c0_i32_0, %c0_i32_1 : i32, i32, i32, i32
  }
  func.func @transform_1(%arg0: i32) -> (i32, i32, i32, i32) {
    %c0_i32 = arith.constant 0 : i32
    %c0_i32_0 = arith.constant 0 : i32
    %c0_i32_1 = arith.constant 0 : i32
    %c0_i32_2 = arith.constant 0 : i32
    return %arg0, %c0_i32, %c0_i32_0, %c0_i32_1 : i32, i32, i32, i32
  }
  func.func @transform_2(%arg0: i32) -> (i32, i32, i32) {
    %c0_i32 = arith.constant 0 : i32
    %c0_i32_0 = arith.constant 0 : i32
    %c0_i32_1 = arith.constant 0 : i32
    return %arg0, %c0_i32, %c0_i32_0 : i32, i32, i32
  }
  func.func @transform_3(%arg0: i32) -> (i32, i32) {
    %c0_i32 = arith.constant 0 : i32
    %c0_i32_0 = arith.constant 0 : i32
    %c0_i32_1 = arith.constant 0 : i32
    return %c0_i32, %c0_i32_0 : i32, i32
  }
  func.func @transform_4(%arg0: i32) -> (i32, i32) {
    %c0_i32 = arith.constant 0 : i32
    %c0_i32_0 = arith.constant 0 : i32
    %c0_i32_1 = arith.constant 0 : i32
    return %c0_i32, %c0_i32_0 : i32, i32
  }
  func.func @transform_5(%arg0: i32) -> (i32, i32) {
    %c0_i32 = arith.constant 0 : i32
    %c0_i32_0 = arith.constant 0 : i32
    %c0_i32_1 = arith.constant 0 : i32
    return %c0_i32, %c0_i32_0 : i32, i32
  }
  func.func @transform_6(%arg0: i32) -> (i32, i32) {
    %c0_i32 = arith.constant 0 : i32
    %c0_i32_0 = arith.constant 0 : i32
    %c0_i32_1 = arith.constant 0 : i32
    return %c0_i32, %c0_i32_0 : i32, i32
  }
  func.func @transform_7(%arg0: i32) -> (i32, i32, i32) {
    %c0_i32 = arith.constant 0 : i32
    %c0_i32_0 = arith.constant 0 : i32
    %c0_i32_1 = arith.constant 0 : i32
    %c0_i32_2 = arith.constant 0 : i32
    return %c0_i32, %c0_i32_0, %c0_i32_1 : i32, i32, i32
  }
  func.func @transform_8(%arg0: i32) -> (i32, i32) {
    %c0_i32 = arith.constant 0 : i32
    %c0_i32_0 = arith.constant 0 : i32
    %c0_i32_1 = arith.constant 0 : i32
    return %c0_i32, %c0_i32_0 : i32, i32
  }
  func.func @transform_9(%arg0: i32) -> (i32, i32, i32) {
    %c0_i32 = arith.constant 0 : i32
    %c0_i32_0 = arith.constant 0 : i32
    %c0_i32_1 = arith.constant 0 : i32
    %c0_i32_2 = arith.constant 0 : i32
    return %c0_i32, %c0_i32_0, %c0_i32_1 : i32, i32, i32
  }
  func.func @transform_10(%arg0: i32) -> (i32, i32) {
    %c0_i32 = arith.constant 0 : i32
    %c0_i32_0 = arith.constant 0 : i32
    %c0_i32_1 = arith.constant 0 : i32
    return %c0_i32, %c0_i32_0 : i32, i32
  }
  func.func @transform_11(%arg0: i32) -> (i32, i32) {
    %c0_i32 = arith.constant 0 : i32
    %c0_i32_0 = arith.constant 0 : i32
    %c0_i32_1 = arith.constant 0 : i32
    return %c0_i32, %c0_i32_0 : i32, i32
  }
  func.func @transform_12(%arg0: i32) -> (i32, i32) {
    %c0_i32 = arith.constant 0 : i32
    %c0_i32_0 = arith.constant 0 : i32
    %c0_i32_1 = arith.constant 0 : i32
    return %c0_i32, %c0_i32_0 : i32, i32
  }
  func.func @transform_13(%arg0: i32) -> (i32, i32, i32, i32) {
    %c0_i32 = arith.constant 0 : i32
    %c0_i32_0 = arith.constant 0 : i32
    %c0_i32_1 = arith.constant 0 : i32
    %c0_i32_2 = arith.constant 0 : i32
    return %arg0, %c0_i32, %c0_i32_0, %c0_i32_1 : i32, i32, i32, i32
  }
  func.func @transform_14(%arg0: i32) -> (i32, i32, i32) {
    %c0_i32 = arith.constant 0 : i32
    %c0_i32_0 = arith.constant 0 : i32
    %c0_i32_1 = arith.constant 0 : i32
    return %arg0, %c0_i32, %c0_i32_0 : i32, i32, i32
  }
  func.func @transform_15(%arg0: i32) -> (i32, i32, i32) {
    %c0_i32 = arith.constant 0 : i32
    %c0_i32_0 = arith.constant 0 : i32
    %c0_i32_1 = arith.constant 0 : i32
    return %arg0, %c0_i32, %c0_i32_0 : i32, i32, i32
  }
}

</mosaic_0001>

<llo_original>
// kernel: tpu_custom_call.1
$region0: #{tpu_custom_call.1}
  #allocation0 [shape = 'u32[]', space=smem, size = 0x4, offset = 0x4, fixed_abs, tag = 'smem constant byte address 0x4 - core index']
  #allocation1 [shape = 'u32[72,128]{1,0:T(1,128)}', space=vmem, size = 0x9000, scoped, tag = 'internal scratch']
  #allocation2 [shape = 'f32[2,10,8,24]{3,2,1,0:T(8,128)}', space=vmem, size = 0x14000, scoped, tag = 'scratch operand']
  %s0 = inlined_call_operand.vmem [shape: f32[2,8,8,16], index: 0, kind: input, shape index: {}]
  %s1 = inlined_call_operand.hbm [shape: f32[2,8,8,16], index: 1, kind: input, shape index: {}]
  %s2 = inlined_call_operand.vmem [shape: f32[2,64,4], index: 2, kind: input, shape index: {}]
  %s3 = inlined_call_operand.vmem [shape: bf16[4,128], index: 3, kind: input, shape index: {}]
  %s4 = inlined_call_operand.vmem [shape: bf16[16,8], index: 4, kind: input, shape index: {}]
  %s5 = inlined_call_operand.vmem [shape: bf16[16,8], index: 5, kind: input, shape index: {}]
  %s6 = inlined_call_operand.vmem [shape: f32[1,8], index: 6, kind: input, shape index: {}]
  %s7 = inlined_call_operand.vmem [shape: bf16[3,24,8], index: 7, kind: input, shape index: {}]
  %s8 = inlined_call_operand.vmem [shape: f32[1,8], index: 8, kind: input, shape index: {}]
  %s9 = inlined_call_operand.vmem [shape: bf16[3,24,8], index: 9, kind: input, shape index: {}]
  %s10 = inlined_call_operand.vmem [shape: f32[1,8], index: 10, kind: input, shape index: {}]
  %s11 = inlined_call_operand.vmem [shape: bf16[8,4], index: 11, kind: input, shape index: {}]
  %s12 = inlined_call_operand.vmem [shape: f32[1,4], index: 12, kind: input, shape index: {}]
  %s13 = inlined_call_operand.vmem [shape: f32[2,8,8,4], index: 13, kind: output, shape index: {0}]
  %s14 = inlined_call_operand.vmem [shape: f32[2,128,64], index: 14, kind: output, shape index: {1}]
  %s15 = inlined_call_operand.vmem [shape: f32[2,128,64], index: 15, kind: output, shape index: {2}]
  %16 = xla_tuple %s13, %s14, %s15
  %s17 = sld [smem:[#allocation0]]
  $region82: #{tpu_custom_call.1} parent=0
    _
  %s19 = ssub.s32 1, %s17
  %s20 = scalar_select 0, %s19, %s17
  $region1: #{tpu_custom_call.1} parent=0
    #allocation3 [shape = 'u8[65536]{0}', space=vmem, size = 0x10000, scoped, tag = 'input window, operand 1, single buffered']
    #allocation4 [shape = 's32[1]{0}', space=sflag, size = 0x4, scoped, tag = 'scoped memory for tpu_custom_call.1']
    %21 = vsyncpa [#allocation4], 0
    // Predicated region
    $region2: #{tpu_custom_call.1} parent=1 // pred_check
      _
    $region3: #{tpu_custom_call.1} parent=1 // pred_check_branch
      %23 = sbr.rel (0) target = $region5
    $region4: #{tpu_custom_call.1} parent=1 // pred_region
      _
    $region5: #{tpu_custom_call.1} parent=1 // pred_fallthru
      _
    // Predicated region
    $region6: #{tpu_custom_call.1} parent=1 // pred_check
      _
    $region7: #{tpu_custom_call.1} parent=1 // pred_check_branch
      %25 = sbr.rel (0) target = $region9
    $region8: #{tpu_custom_call.1} parent=1 // pred_region
      %27 = vsyncadd [#allocation4], 0
      %s28 = sshll.u32 %s1, 4
      %s29 = int_to_ptr.hbm [resolvable:$true] %s28
      %s30 = sshll.u32 [#allocation3], 4
      %s31 = int_to_ptr.vmem [resolvable:$true] %s30
      %36 = dma.hbm_to_vmem [thread:$0]  %s29, 2048, %s31, [#allocation4], 128, 128, 8
    $region9: #{tpu_custom_call.1} parent=1 // pred_fallthru
      _
    // Predicated region
    $region10: #{tpu_custom_call.1} parent=1 // pred_check
      _
    $region11: #{tpu_custom_call.1} parent=1 // pred_check_branch
      %38 = sbr.rel (0) target = $region13
    $region12: #{tpu_custom_call.1} parent=1 // pred_region
      _
    $region13: #{tpu_custom_call.1} parent=1 // pred_fallthru
      _
    // Predicated region
    $region14: #{tpu_custom_call.1} parent=1 // pred_check
      _
    $region15: #{tpu_custom_call.1} parent=1 // pred_check_branch
      %40 = sbr.rel (0) target = $region17
    $region16: #{tpu_custom_call.1} parent=1 // pred_region
      _
    $region17: #{tpu_custom_call.1} parent=1 // pred_fallthru
      _
    // Predicated region
    $region18: #{tpu_custom_call.1} parent=1 // pred_check
      _
    $region19: #{tpu_custom_call.1} parent=1 // pred_check_branch
      %42 = sbr.rel (0) target = $region21
    $region20: #{tpu_custom_call.1} parent=1 // pred_region
      _
    $region21: #{tpu_custom_call.1} parent=1 // pred_fallthru
      _
    // Predicated region
    $region22: #{tpu_custom_call.1} parent=1 // pred_check
      _
    $region23: #{tpu_custom_call.1} parent=1 // pred_check_branch
      %44 = sbr.rel (0) target = $region25
    $region24: #{tpu_custom_call.1} parent=1 // pred_region
      _
    $region25: #{tpu_custom_call.1} parent=1 // pred_fallthru
      _
    // Predicated region
    $region26: #{tpu_custom_call.1} parent=1 // pred_check
      _
    $region27: #{tpu_custom_call.1} parent=1 // pred_check_branch
      %46 = sbr.rel (0) target = $region29
    $region28: #{tpu_custom_call.1} parent=1 // pred_region
      _
    $region29: #{tpu_custom_call.1} parent=1 // pred_fallthru
      _
    // Predicated region
    $region30: #{tpu_custom_call.1} parent=1 // pred_check
      _
    $region31: #{tpu_custom_call.1} parent=1 // pred_check_branch
      %48 = sbr.rel (0) target = $region33
    $region32: #{tpu_custom_call.1} parent=1 // pred_region
      _
    $region33: #{tpu_custom_call.1} parent=1 // pred_fallthru
      _
    // Predicated region
    $region34: #{tpu_custom_call.1} parent=1 // pred_check
      _
    $region35: #{tpu_custom_call.1} parent=1 // pred_check_branch
      %50 = sbr.rel (0) target = $region37
    $region36: #{tpu_custom_call.1} parent=1 // pred_region
      _
    $region37: #{tpu_custom_call.1} parent=1 // pred_fallthru
      _
    // Predicated region
    $region38: #{tpu_custom_call.1} parent=1 // pred_check
      _
    $region39: #{tpu_custom_call.1} parent=1 // pred_check_branch
      %52 = sbr.rel (0) target = $region41
    $region40: #{tpu_custom_call.1} parent=1 // pred_region
      _
    $region41: #{tpu_custom_call.1} parent=1 // pred_fallthru
      _
    // Predicated region
    $region42: #{tpu_custom_call.1} parent=1 // pred_check
      _
    $region43: #{tpu_custom_call.1} parent=1 // pred_check_branch
      %54 = sbr.rel (0) target = $region45
    $region44: #{tpu_custom_call.1} parent=1 // pred_region
      _
    $region45: #{tpu_custom_call.1} parent=1 // pred_fallthru
      _
    // Predicated region
    $region46: #{tpu_custom_call.1} parent=1 // pred_check
      _
    $region47: #{tpu_custom_call.1} parent=1 // pred_check_branch
      %56 = sbr.rel (0) target = $region49
    $region48: #{tpu_custom_call.1} parent=1 // pred_region
      _
    $region49: #{tpu_custom_call.1} parent=1 // pred_fallthru
      _
    // Predicated region
    $region50: #{tpu_custom_call.1} parent=1 // pred_check
      _
    $region51: #{tpu_custom_call.1} parent=1 // pred_check_branch
      %58 = sbr.rel (0) target = $region53
    $region52: #{tpu_custom_call.1} parent=1 // pred_region
      _
    $region53: #{tpu_custom_call.1} parent=1 // pred_fallthru
      _
    // Predicated region
    $region54: #{tpu_custom_call.1} parent=1 // pred_check
      _
    $region55: #{tpu_custom_call.1} parent=1 // pred_check_branch
      %60 = sbr.rel (0) target = $region57
    $region56: #{tpu_custom_call.1} parent=1 // pred_region
      %62 = dma.done [#allocation4], 2048
    $region57: #{tpu_custom_call.1} parent=1 // pred_fallthru
      _
    %vm64 = vcmask 195584
    %65 = vst.msk [vmem:[#allocation2] sm:$0xff] %vm64, 0.0
    %66 = vst.msk [vmem:[#allocation2 + $0x50] sm:$0xff] %vm64, 0.0
    %s67 = scalar_lea.vmem [#allocation2], 72
    %68 = vst.msk [vmem:[%s67] sm:$0xff] %vm64, 0.0
    %69 = vst.msk [vmem:[%s67 + $0x50] sm:$0xff] %vm64, 0.0
    %s70 = scalar_lea.vmem [#allocation2], 8
    %vm71 = vcmask 57344
    %72 = vst.msk [vmem:[%s70] sm:$0x1] %vm71, 0.0
    %73 = vst.msk [vmem:[%s70 + $0x8] sm:$0x1] %vm71, 0.0
    %74 = vst.msk [vmem:[%s70 + $0x10] sm:$0x1] %vm71, 0.0
    %75 = vst.msk [vmem:[%s70 + $0x18] sm:$0x1] %vm71, 0.0
    %76 = vst.msk [vmem:[%s70 + $0x20] sm:$0x1] %vm71, 0.0
    %77 = vst.msk [vmem:[%s70 + $0x28] sm:$0x1] %vm71, 0.0
    %78 = vst.msk [vmem:[%s70 + $0x30] sm:$0x1] %vm71, 0.0
    %79 = vst.msk [vmem:[%s70 + $0x38] sm:$0x1] %vm71, 0.0
    %80 = vst.msk [vmem:[%s70 + $0x50] sm:$0x1] %vm71, 0.0
    %81 = vst.msk [vmem:[%s70 + $0x58] sm:$0x1] %vm71, 0.0
    %82 = vst.msk [vmem:[%s70 + $0x60] sm:$0x1] %vm71, 0.0
    %83 = vst.msk [vmem:[%s70 + $0x68] sm:$0x1] %vm71, 0.0
    %84 = vst.msk [vmem:[%s70 + $0x70] sm:$0x1] %vm71, 0.0
    %85 = vst.msk [vmem:[%s70 + $0x78] sm:$0x1] %vm71, 0.0
    %86 = vst.msk [vmem:[%s70 + $0x80] sm:$0x1] %vm71, 0.0
    %87 = vst.msk [vmem:[%s70 + $0x88] sm:$0x1] %vm71, 0.0
    %vm88 = vcmask 188544
    %89 = vst.msk [vmem:[%s70 + $0x7] sm:$0x1] %vm88, 0.0
    %90 = vst.msk [vmem:[%s70 + $0xf] sm:$0x1] %vm88, 0.0
    %91 = vst.msk [vmem:[%s70 + $0x17] sm:$0x1] %vm88, 0.0
    %92 = vst.msk [vmem:[%s70 + $0x1f] sm:$0x1] %vm88, 0.0
    %93 = vst.msk [vmem:[%s70 + $0x27] sm:$0x1] %vm88, 0.0
    %94 = vst.msk [vmem:[%s70 + $0x2f] sm:$0x1] %vm88, 0.0
    %95 = vst.msk [vmem:[%s70 + $0x37] sm:$0x1] %vm88, 0.0
    %96 = vst.msk [vmem:[%s70 + $0x3f] sm:$0x1] %vm88, 0.0
    %97 = vst.msk [vmem:[%s70 + $0x57] sm:$0x1] %vm88, 0.0
    %98 = vst.msk [vmem:[%s70 + $0x5f] sm:$0x1] %vm88, 0.0
    %99 = vst.msk [vmem:[%s70 + $0x67] sm:$0x1] %vm88, 0.0
    %100 = vst.msk [vmem:[%s70 + $0x6f] sm:$0x1] %vm88, 0.0
    %101 = vst.msk [vmem:[%s70 + $0x77] sm:$0x1] %vm88, 0.0
    %102 = vst.msk [vmem:[%s70 + $0x7f] sm:$0x1] %vm88, 0.0
    %103 = vst.msk [vmem:[%s70 + $0x87] sm:$0x1] %vm88, 0.0
    %104 = vst.msk [vmem:[%s70 + $0x8f] sm:$0x1] %vm88, 0.0
    %v105 = vld [vmem:[%s0] sm:$0xff]
    %v106 = vld [vmem:[%s0 + $0x8] sm:$0xff]
    %v107 = vld [vmem:[%s0 + $0x10] sm:$0xff]
    %v108 = vld [vmem:[%s0 + $0x18] sm:$0xff]
    %v109 = vld [vmem:[%s0 + $0x20] sm:$0xff]
    %v110 = vld [vmem:[%s0 + $0x28] sm:$0xff]
    %v111 = vld [vmem:[%s0 + $0x30] sm:$0xff]
    %v112 = vld [vmem:[%s0 + $0x38] sm:$0xff]
    %v113 = vld [vmem:[%s0 + $0x40] sm:$0xff]
    %v114 = vld [vmem:[%s0 + $0x48] sm:$0xff]
    %v115 = vld [vmem:[%s0 + $0x50] sm:$0xff]
    %v116 = vld [vmem:[%s0 + $0x58] sm:$0xff]
    %v117 = vld [vmem:[%s0 + $0x60] sm:$0xff]
    %v118 = vld [vmem:[%s0 + $0x68] sm:$0xff]
    %v119 = vld [vmem:[%s0 + $0x70] sm:$0xff]
    %v120 = vld [vmem:[%s0 + $0x78] sm:$0xff]
    %v121 = vmul.f32 %v105, 0.5
    %v122 = vmul.f32 %v106, 0.5
    %v123 = vmul.f32 %v107, 0.5
    %v124 = vmul.f32 %v108, 0.5
    %v125 = vmul.f32 %v109, 0.5
    %v126 = vmul.f32 %v110, 0.5
    %v127 = vmul.f32 %v111, 0.5
    %v128 = vmul.f32 %v112, 0.5
    %v129 = vmul.f32 %v113, 0.5
    %v130 = vmul.f32 %v114, 0.5
    %v131 = vmul.f32 %v115, 0.5
    %v132 = vmul.f32 %v116, 0.5
    %v133 = vmul.f32 %v117, 0.5
    %v134 = vmul.f32 %v118, 0.5
    %v135 = vmul.f32 %v119, 0.5
    %v136 = vmul.f32 %v120, 0.5
    %v137 = vmul.f32 %v105, 0.044715
    %v138 = vmul.f32 %v106, 0.044715
    %v139 = vmul.f32 %v107, 0.044715
    %v140 = vmul.f32 %v108, 0.044715
    %v141 = vmul.f32 %v109, 0.044715
    %v142 = vmul.f32 %v110, 0.044715
    %v143 = vmul.f32 %v111, 0.044715
    %v144 = vmul.f32 %v112, 0.044715
    %v145 = vmul.f32 %v113, 0.044715
    %v146 = vmul.f32 %v114, 0.044715
    %v147 = vmul.f32 %v115, 0.044715
    %v148 = vmul.f32 %v116, 0.044715
    %v149 = vmul.f32 %v117, 0.044715
    %v150 = vmul.f32 %v118, 0.044715
    %v151 = vmul.f32 %v119, 0.044715
    %v152 = vmul.f32 %v120, 0.044715
    %v153 = vmul.f32 %v137, %v105
    %v154 = vmul.f32 %v138, %v106
    %v155 = vmul.f32 %v139, %v107
    %v156 = vmul.f32 %v140, %v108
    %v157 = vmul.f32 %v141, %v109
    %v158 = vmul.f32 %v142, %v110
    %v159 = vmul.f32 %v143, %v111
    %v160 = vmul.f32 %v144, %v112
    %v161 = vmul.f32 %v145, %v113
    %v162 = vmul.f32 %v146, %v114
    %v163 = vmul.f32 %v147, %v115
    %v164 = vmul.f32 %v148, %v116
    %v165 = vmul.f32 %v149, %v117
    %v166 = vmul.f32 %v150, %v118
    %v167 = vmul.f32 %v151, %v119
    %v168 = vmul.f32 %v152, %v120
    %v169 = vmul.f32 %v153, %v105
    %v170 = vmul.f32 %v154, %v106
    %v171 = vmul.f32 %v155, %v107
    %v172 = vmul.f32 %v156, %v108
    %v173 = vmul.f32 %v157, %v109
    %v174 = vmul.f32 %v158, %v110
    %v175 = vmul.f32 %v159, %v111
    %v176 = vmul.f32 %v160, %v112
    %v177 = vmul.f32 %v161, %v113
    %v178 = vmul.f32 %v162, %v114
    %v179 = vmul.f32 %v163, %v115
    %v180 = vmul.f32 %v164, %v116
    %v181 = vmul.f32 %v165, %v117
    %v182 = vmul.f32 %v166, %v118
    %v183 = vmul.f32 %v167, %v119
    %v184 = vmul.f32 %v168, %v120
    %v185 = vadd.f32 %v105, %v169
    %v186 = vadd.f32 %v106, %v170
    %v187 = vadd.f32 %v107, %v171
    %v188 = vadd.f32 %v108, %v172
    %v189 = vadd.f32 %v109, %v173
    %v190 = vadd.f32 %v110, %v174
    %v191 = vadd.f32 %v111, %v175
    %v192 = vadd.f32 %v112, %v176
    %v193 = vadd.f32 %v113, %v177
    %v194 = vadd.f32 %v114, %v178
    %v195 = vadd.f32 %v115, %v179
    %v196 = vadd.f32 %v116, %v180
    %v197 = vadd.f32 %v117, %v181
    %v198 = vadd.f32 %v118, %v182
    %v199 = vadd.f32 %v119, %v183
    %v200 = vadd.f32 %v120, %v184
    %v201 = vmul.f32 %v185, 0.7978846
    %v202 = vmul.f32 %v186, 0.7978846
    %v203 = vmul.f32 %v187, 0.7978846
    %v204 = vmul.f32 %v188, 0.7978846
    %v205 = vmul.f32 %v189, 0.7978846
    %v206 = vmul.f32 %v190, 0.7978846
    %v207 = vmul.f32 %v191, 0.7978846
    %v208 = vmul.f32 %v192, 0.7978846
    %v209 = vmul.f32 %v193, 0.7978846
    %v210 = vmul.f32 %v194, 0.7978846
    %v211 = vmul.f32 %v195, 0.7978846
    %v212 = vmul.f32 %v196, 0.7978846
    %v213 = vmul.f32 %v197, 0.7978846
    %v214 = vmul.f32 %v198, 0.7978846
    %v215 = vmul.f32 %v199, 0.7978846
    %v216 = vmul.f32 %v200, 0.7978846
    %v217 = vtanh.pop %v201
    %v218 = vtanh.pop %v202
    %v219 = vtanh.pop %v203
    %v220 = vtanh.pop %v204
    %v221 = vtanh.pop %v205
    %v222 = vtanh.pop %v206
    %v223 = vtanh.pop %v207
    %v224 = vtanh.pop %v208
    %v225 = vtanh.pop %v209
    %v226 = vtanh.pop %v210
    %v227 = vtanh.pop %v211
    %v228 = vtanh.pop %v212
    %v229 = vtanh.pop %v213
    %v230 = vtanh.pop %v214
    %v231 = vtanh.pop %v215
    %v232 = vtanh.pop %v216
    %v233 = vadd.f32 %v217, 1.0
    %v234 = vadd.f32 %v218, 1.0
    %v235 = vadd.f32 %v219, 1.0
    %v236 = vadd.f32 %v220, 1.0
    %v237 = vadd.f32 %v221, 1.0
    %v238 = vadd.f32 %v222, 1.0
    %v239 = vadd.f32 %v223, 1.0
    %v240 = vadd.f32 %v224, 1.0
    %v241 = vadd.f32 %v225, 1.0
    %v242 = vadd.f32 %v226, 1.0
    %v243 = vadd.f32 %v227, 1.0
    %v244 = vadd.f32 %v228, 1.0
    %v245 = vadd.f32 %v229, 1.0
    %v246 = vadd.f32 %v230, 1.0
    %v247 = vadd.f32 %v231, 1.0
    %v248 = vadd.f32 %v232, 1.0
    %v249 = vmul.f32 %v121, %v233
    %v250 = vmul.f32 %v122, %v234
    %v251 = vmul.f32 %v123, %v235
    %v252 = vmul.f32 %v124, %v236
    %v253 = vmul.f32 %v125, %v237
    %v254 = vmul.f32 %v126, %v238
    %v255 = vmul.f32 %v127, %v239
    %v256 = vmul.f32 %v128, %v240
    %v257 = vmul.f32 %v129, %v241
    %v258 = vmul.f32 %v130, %v242
    %v259 = vmul.f32 %v131, %v243
    %v260 = vmul.f32 %v132, %v244
    %v261 = vmul.f32 %v133, %v245
    %v262 = vmul.f32 %v134, %v246
    %v263 = vmul.f32 %v135, %v247
    %v264 = vmul.f32 %v136, %v248
    %v265 = vpack.c.bf16 %v250, %v249
    %v266 = vpack.c.bf16 %v252, %v251
    %v267 = vpack.c.bf16 %v254, %v253
    %v268 = vpack.c.bf16 %v256, %v255
    %v269 = vpack.c.bf16 %v258, %v257
    %v270 = vpack.c.bf16 %v260, %v259
    %v271 = vpack.c.bf16 %v262, %v261
    %v272 = vpack.c.bf16 %v264, %v263
    %v273 = vld [vmem:[#allocation3] sm:$0xff]
    %v274 = vld [vmem:[#allocation3 + $0x8] sm:$0xff]
    %v275 = vld [vmem:[#allocation3 + $0x10] sm:$0xff]
    %v276 = vld [vmem:[#allocation3 + $0x18] sm:$0xff]
    %v277 = vld [vmem:[#allocation3 + $0x20] sm:$0xff]
    %v278 = vld [vmem:[#allocation3 + $0x28] sm:$0xff]
    %v279 = vld [vmem:[#allocation3 + $0x30] sm:$0xff]
    %v280 = vld [vmem:[#allocation3 + $0x38] sm:$0xff]
    %v281 = vld [vmem:[#allocation3 + $0x40] sm:$0xff]
    %v282 = vld [vmem:[#allocation3 + $0x48] sm:$0xff]
    %v283 = vld [vmem:[#allocation3 + $0x50] sm:$0xff]
    %v284 = vld [vmem:[#allocation3 + $0x58] sm:$0xff]
    %v285 = vld [vmem:[#allocation3 + $0x60] sm:$0xff]
    %v286 = vld [vmem:[#allocation3 + $0x68] sm:$0xff]
    %v287 = vld [vmem:[#allocation3 + $0x70] sm:$0xff]
    %v288 = vld [vmem:[#allocation3 + $0x78] sm:$0xff]
    %v289 = vmul.f32 %v273, 0.5
    %v290 = vmul.f32 %v274, 0.5
    %v291 = vmul.f32 %v275, 0.5
    %v292 = vmul.f32 %v276, 0.5
    %v293 = vmul.f32 %v277, 0.5
    %v294 = vmul.f32 %v278, 0.5
    %v295 = vmul.f32 %v279, 0.5
    %v296 = vmul.f32 %v280, 0.5
    %v297 = vmul.f32 %v281, 0.5
    %v298 = vmul.f32 %v282, 0.5
    %v299 = vmul.f32 %v283, 0.5
    %v300 = vmul.f32 %v284, 0.5
    %v301 = vmul.f32 %v285, 0.5
    %v302 = vmul.f32 %v286, 0.5
    %v303 = vmul.f32 %v287, 0.5
    %v304 = vmul.f32 %v288, 0.5
    %v305 = vmul.f32 %v273, 0.044715
    %v306 = vmul.f32 %v274, 0.044715
    %v307 = vmul.f32 %v275, 0.044715
    %v308 = vmul.f32 %v276, 0.044715
    %v309 = vmul.f32 %v277, 0.044715
    %v310 = vmul.f32 %v278, 0.044715
    %v311 = vmul.f32 %v279, 0.044715
    %v312 = vmul.f32 %v280, 0.044715
    %v313 = vmul.f32 %v281, 0.044715
    %v314 = vmul.f32 %v282, 0.044715
    %v315 = vmul.f32 %v283, 0.044715
    %v316 = vmul.f32 %v284, 0.044715
    %v317 = vmul.f32 %v285, 0.044715
    %v318 = vmul.f32 %v286, 0.044715
    %v319 = vmul.f32 %v287, 0.044715
    %v320 = vmul.f32 %v288, 0.044715
    %v321 = vmul.f32 %v305, %v273
    %v322 = vmul.f32 %v306, %v274
    %v323 = vmul.f32 %v307, %v275
    %v324 = vmul.f32 %v308, %v276
    %v325 = vmul.f32 %v309, %v277
    %v326 = vmul.f32 %v310, %v278
    %v327 = vmul.f32 %v311, %v279
    %v328 = vmul.f32 %v312, %v280
    %v329 = vmul.f32 %v313, %v281
    %v330 = vmul.f32 %v314, %v282
    %v331 = vmul.f32 %v315, %v283
    %v332 = vmul.f32 %v316, %v284
    %v333 = vmul.f32 %v317, %v285
    %v334 = vmul.f32 %v318, %v286
    %v335 = vmul.f32 %v319, %v287
    %v336 = vmul.f32 %v320, %v288
    %v337 = vmul.f32 %v321, %v273
    %v338 = vmul.f32 %v322, %v274
    %v339 = vmul.f32 %v323, %v275
    %v340 = vmul.f32 %v324, %v276
    %v341 = vmul.f32 %v325, %v277
    %v342 = vmul.f32 %v326, %v278
    %v343 = vmul.f32 %v327, %v279
    %v344 = vmul.f32 %v328, %v280
    %v345 = vmul.f32 %v329, %v281
    %v346 = vmul.f32 %v330, %v282
    %v347 = vmul.f32 %v331, %v283
    %v348 = vmul.f32 %v332, %v284
    %v349 = vmul.f32 %v333, %v285
    %v350 = vmul.f32 %v334, %v286
    %v351 = vmul.f32 %v335, %v287
    %v352 = vmul.f32 %v336, %v288
    %v353 = vadd.f32 %v273, %v337
    %v354 = vadd.f32 %v274, %v338
    %v355 = vadd.f32 %v275, %v339
    %v356 = vadd.f32 %v276, %v340
    %v357 = vadd.f32 %v277, %v341
    %v358 = vadd.f32 %v278, %v342
    %v359 = vadd.f32 %v279, %v343
    %v360 = vadd.f32 %v280, %v344
    %v361 = vadd.f32 %v281, %v345
    %v362 = vadd.f32 %v282, %v346
    %v363 = vadd.f32 %v283, %v347
    %v364 = vadd.f32 %v284, %v348
    %v365 = vadd.f32 %v285, %v349
    %v366 = vadd.f32 %v286, %v350
    %v367 = vadd.f32 %v287, %v351
    %v368 = vadd.f32 %v288, %v352
    %v369 = vmul.f32 %v353, 0.7978846
    %v370 = vmul.f32 %v354, 0.7978846
    %v371 = vmul.f32 %v355, 0.7978846
    %v372 = vmul.f32 %v356, 0.7978846
    %v373 = vmul.f32 %v357, 0.7978846
    %v374 = vmul.f32 %v358, 0.7978846
    %v375 = vmul.f32 %v359, 0.7978846
    %v376 = vmul.f32 %v360, 0.7978846
    %v377 = vmul.f32 %v361, 0.7978846
    %v378 = vmul.f32 %v362, 0.7978846
    %v379 = vmul.f32 %v363, 0.7978846
    %v380 = vmul.f32 %v364, 0.7978846
    %v381 = vmul.f32 %v365, 0.7978846
    %v382 = vmul.f32 %v366, 0.7978846
    %v383 = vmul.f32 %v367, 0.7978846
    %v384 = vmul.f32 %v368, 0.7978846
    %v385 = vtanh.pop %v369
    %v386 = vtanh.pop %v370
    %v387 = vtanh.pop %v371
    %v388 = vtanh.pop %v372
    %v389 = vtanh.pop %v373
    %v390 = vtanh.pop %v374
    %v391 = vtanh.pop %v375
    %v392 = vtanh.pop %v376
    %v393 = vtanh.pop %v377
    %v394 = vtanh.pop %v378
    %v395 = vtanh.pop %v379
    %v396 = vtanh.pop %v380
    %v397 = vtanh.pop %v381
    %v398 = vtanh.pop %v382
    %v399 = vtanh.pop %v383
    %v400 = vtanh.pop %v384
    %v401 = vadd.f32 %v385, 1.0
    %v402 = vadd.f32 %v386, 1.0
    %v403 = vadd.f32 %v387, 1.0
    %v404 = vadd.f32 %v388, 1.0
    %v405 = vadd.f32 %v389, 1.0
    %v406 = vadd.f32 %v390, 1.0
    %v407 = vadd.f32 %v391, 1.0
    %v408 = vadd.f32 %v392, 1.0
    %v409 = vadd.f32 %v393, 1.0
    %v410 = vadd.f32 %v394, 1.0
    %v411 = vadd.f32 %v395, 1.0
    %v412 = vadd.f32 %v396, 1.0
    %v413 = vadd.f32 %v397, 1.0
    %v414 = vadd.f32 %v398, 1.0
    %v415 = vadd.f32 %v399, 1.0
    %v416 = vadd.f32 %v400, 1.0
    %v417 = vmul.f32 %v289, %v401
    %v418 = vmul.f32 %v290, %v402
    %v419 = vmul.f32 %v291, %v403
    %v420 = vmul.f32 %v292, %v404
    %v421 = vmul.f32 %v293, %v405
    %v422 = vmul.f32 %v294, %v406
    %v423 = vmul.f32 %v295, %v407
    %v424 = vmul.f32 %v296, %v408
    %v425 = vmul.f32 %v297, %v409
    %v426 = vmul.f32 %v298, %v410
    %v427 = vmul.f32 %v299, %v411
    %v428 = vmul.f32 %v300, %v412
    %v429 = vmul.f32 %v301, %v413
    %v430 = vmul.f32 %v302, %v414
    %v431 = vmul.f32 %v303, %v415
    %v432 = vmul.f32 %v304, %v416
    %v433 = vpack.c.bf16 %v418, %v417
    %v434 = vpack.c.bf16 %v420, %v419
    %v435 = vpack.c.bf16 %v422, %v421
    %v436 = vpack.c.bf16 %v424, %v423
    %v437 = vpack.c.bf16 %v426, %v425
    %v438 = vpack.c.bf16 %v428, %v427
    %v439 = vpack.c.bf16 %v430, %v429
    %v440 = vpack.c.bf16 %v432, %v431
    %v441 = vld [vmem:[%s4] sm:$0xf]
    %v442 = vld [vmem:[%s4 + $0x4] sm:$0xf]
    %v443 = vld [vmem:[%s5] sm:$0xf]
    %v444 = vld [vmem:[%s5 + $0x4] sm:$0xf]
    %v447 = vunpack.c.l.b16 %v443
    %v448 = vunpack.c.l.b16 %v444
    %v449 = vpack.c.b16 %v448, %v447
    %vm451 = vcmask 130048
    %v453 = vsel %vm451, %v433, 0
    %v456 = vsel %vm451, %v434, 0
    %v459 = vsel %vm451, %v435, 0
    %v462 = vsel %vm451, %v436, 0
    %v465 = vsel %vm451, %v437, 0
    %v468 = vsel %vm451, %v438, 0
    %v471 = vsel %vm451, %v439, 0
    %v474 = vsel %vm451, %v440, 0
    %476 = vmatpush.bf16.msra.mxu0 0
    %477 = vmatpush.bf16.msra.mxu0 0
    %478 = vmatpush.bf16.msra.mxu0 0
    %479 = vmatpush.bf16.msra.mxu0 0
    %480 = vmatpush.bf16.msra.mxu0 0
    %481 = vmatpush.bf16.msra.mxu0 0
    %482 = vmatpush.bf16.msra.mxu0 0
    %483 = vmatpush.bf16.msra.mxu0 %v449
    %484 = vmatmul.bf16.gmra.mxu0 %v453
    %v485 = vpop.f32.mrf.mxu0
    %v486 = vadd.f32 0.0, %v485
    %v487 = vpop.f32.mrf.mxu0
    %v488 = vadd.f32 0.0, %v487
    %489 = vmatmul.bf16.gmra.mxu0 %v456
    %v490 = vpop.f32.mrf.mxu0
    %v491 = vadd.f32 0.0, %v490
    %v492 = vpop.f32.mrf.mxu0
    %v493 = vadd.f32 0.0, %v492
    %494 = vmatmul.bf16.gmra.mxu0 %v459
    %v495 = vpop.f32.mrf.mxu0
    %v496 = vadd.f32 0.0, %v495
    %v497 = vpop.f32.mrf.mxu0
    %v498 = vadd.f32 0.0, %v497
    %499 = vmatmul.bf16.gmra.mxu0 %v462
    %v500 = vpop.f32.mrf.mxu0
    %v501 = vadd.f32 0.0, %v500
    %v502 = vpop.f32.mrf.mxu0
    %v503 = vadd.f32 0.0, %v502
    %504 = vmatmul.bf16.gmra.mxu0 %v465
    %v505 = vpop.f32.mrf.mxu0
    %v506 = vadd.f32 0.0, %v505
    %v507 = vpop.f32.mrf.mxu0
    %v508 = vadd.f32 0.0, %v507
    %509 = vmatmul.bf16.gmra.mxu0 %v468
    %v510 = vpop.f32.mrf.mxu0
    %v511 = vadd.f32 0.0, %v510
    %v512 = vpop.f32.mrf.mxu0
    %v513 = vadd.f32 0.0, %v512
    %514 = vmatmul.bf16.gmra.mxu0 %v471
    %v515 = vpop.f32.mrf.mxu0
    %v516 = vadd.f32 0.0, %v515
    %v517 = vpop.f32.mrf.mxu0
    %v518 = vadd.f32 0.0, %v517
    %519 = vmatmul.bf16.gmra.mxu0 %v474
    %v520 = vpop.f32.mrf.mxu0
    %v521 = vadd.f32 0.0, %v520
    %v522 = vpop.f32.mrf.mxu0
    %v523 = vadd.f32 0.0, %v522
    %524 = vdwg.mxu0
    %v527 = vunpack.c.l.b16 %v441
    %v528 = vunpack.c.l.b16 %v442
    %v529 = vpack.c.b16 %v528, %v527
    %v532 = vsel %vm451, %v265, 0
    %v535 = vsel %vm451, %v266, 0
    %v538 = vsel %vm451, %v267, 0
    %v541 = vsel %vm451, %v268, 0
    %v544 = vsel %vm451, %v269, 0
    %v547 = vsel %vm451, %v270, 0
    %v550 = vsel %vm451, %v271, 0
    %v553 = vsel %vm451, %v272, 0
    %555 = vmatpush.bf16.msra.mxu0 0
    %556 = vmatpush.bf16.msra.mxu0 0
    %557 = vmatpush.bf16.msra.mxu0 0
    %558 = vmatpush.bf16.msra.mxu0 0
    %559 = vmatpush.bf16.msra.mxu0 0
    %560 = vmatpush.bf16.msra.mxu0 0
    %561 = vmatpush.bf16.msra.mxu0 0
    %562 = vmatpush.bf16.msra.mxu0 %v529
    %563 = vmatmul.bf16.gmra.mxu0 %v532
    %v564 = vpop.f32.mrf.mxu0
    %v565 = vadd.f32 %v486, %v564
    %v566 = vpop.f32.mrf.mxu0
    %v567 = vadd.f32 %v488, %v566
    %568 = vmatmul.bf16.gmra.mxu0 %v535
    %v569 = vpop.f32.mrf.mxu0
    %v570 = vadd.f32 %v491, %v569
    %v571 = vpop.f32.mrf.mxu0
    %v572 = vadd.f32 %v493, %v571
    %573 = vmatmul.bf16.gmra.mxu0 %v538
    %v574 = vpop.f32.mrf.mxu0
    %v575 = vadd.f32 %v496, %v574
    %v576 = vpop.f32.mrf.mxu0
    %v577 = vadd.f32 %v498, %v576
    %578 = vmatmul.bf16.gmra.mxu0 %v541
    %v579 = vpop.f32.mrf.mxu0
    %v580 = vadd.f32 %v501, %v579
    %v581 = vpop.f32.mrf.mxu0
    %v582 = vadd.f32 %v503, %v581
    %583 = vmatmul.bf16.gmra.mxu0 %v544
    %v584 = vpop.f32.mrf.mxu0
    %v585 = vadd.f32 %v506, %v584
    %v586 = vpop.f32.mrf.mxu0
    %v587 = vadd.f32 %v508, %v586
    %588 = vmatmul.bf16.gmra.mxu0 %v547
    %v589 = vpop.f32.mrf.mxu0
    %v590 = vadd.f32 %v511, %v589
    %v591 = vpop.f32.mrf.mxu0
    %v592 = vadd.f32 %v513, %v591
    %593 = vmatmul.bf16.gmra.mxu0 %v550
    %v594 = vpop.f32.mrf.mxu0
    %v595 = vadd.f32 %v516, %v594
    %v596 = vpop.f32.mrf.mxu0
    %v597 = vadd.f32 %v518, %v596
    %598 = vmatmul.bf16.gmra.mxu0 %v553
    %v599 = vpop.f32.mrf.mxu0
    %v600 = vadd.f32 %v521, %v599
    %v601 = vpop.f32.mrf.mxu0
    %v602 = vadd.f32 %v523, %v601
    %603 = vdwg.mxu0
    %v604 = vld [vmem:[%s6] sm:$0x1]
    %v606 = vperm.slane %v604, 0
    %v608 = vadd.f32 %v565, %v606
    %v609 = vadd.f32 %v567, %v606
    %v610 = vadd.f32 %v570, %v606
    %v611 = vadd.f32 %v572, %v606
    %v612 = vadd.f32 %v575, %v606
    %v613 = vadd.f32 %v577, %v606
    %v614 = vadd.f32 %v580, %v606
    %v615 = vadd.f32 %v582, %v606
    %v616 = vadd.f32 %v585, %v606
    %v617 = vadd.f32 %v587, %v606
    %v618 = vadd.f32 %v590, %v606
    %v619 = vadd.f32 %v592, %v606
    %v620 = vadd.f32 %v595, %v606
    %v621 = vadd.f32 %v597, %v606
    %v622 = vadd.f32 %v600, %v606
    %v623 = vadd.f32 %v602, %v606
    %v624 = vmul.f32 %v608, 0.5
    %v625 = vmul.f32 %v609, 0.5
    %v626 = vmul.f32 %v610, 0.5
    %v627 = vmul.f32 %v611, 0.5
    %v628 = vmul.f32 %v612, 0.5
    %v629 = vmul.f32 %v613, 0.5
    %v630 = vmul.f32 %v614, 0.5
    %v631 = vmul.f32 %v615, 0.5
    %v632 = vmul.f32 %v616, 0.5
    %v633 = vmul.f32 %v617, 0.5
    %v634 = vmul.f32 %v618, 0.5
    %v635 = vmul.f32 %v619, 0.5
    %v636 = vmul.f32 %v620, 0.5
    %v637 = vmul.f32 %v621, 0.5
    %v638 = vmul.f32 %v622, 0.5
    %v639 = vmul.f32 %v623, 0.5
    %v640 = vmul.f32 %v608, 0.044715
    %v641 = vmul.f32 %v609, 0.044715
    %v642 = vmul.f32 %v610, 0.044715
    %v643 = vmul.f32 %v611, 0.044715
    %v644 = vmul.f32 %v612, 0.044715
    %v645 = vmul.f32 %v613, 0.044715
    %v646 = vmul.f32 %v614, 0.044715
    %v647 = vmul.f32 %v615, 0.044715
    %v648 = vmul.f32 %v616, 0.044715
    %v649 = vmul.f32 %v617, 0.044715
    %v650 = vmul.f32 %v618, 0.044715
    %v651 = vmul.f32 %v619, 0.044715
    %v652 = vmul.f32 %v620, 0.044715
    %v653 = vmul.f32 %v621, 0.044715
    %v654 = vmul.f32 %v622, 0.044715
    %v655 = vmul.f32 %v623, 0.044715
    %v656 = vmul.f32 %v640, %v608
    %v657 = vmul.f32 %v641, %v609
    %v658 = vmul.f32 %v642, %v610
    %v659 = vmul.f32 %v643, %v611
    %v660 = vmul.f32 %v644, %v612
    %v661 = vmul.f32 %v645, %v613
    %v662 = vmul.f32 %v646, %v614
    %v663 = vmul.f32 %v647, %v615
    %v664 = vmul.f32 %v648, %v616
    %v665 = vmul.f32 %v649, %v617
    %v666 = vmul.f32 %v650, %v618
    %v667 = vmul.f32 %v651, %v619
    %v668 = vmul.f32 %v652, %v620
    %v669 = vmul.f32 %v653, %v621
    %v670 = vmul.f32 %v654, %v622
    %v671 = vmul.f32 %v655, %v623
    %v672 = vmul.f32 %v656, %v608
    %v673 = vmul.f32 %v657, %v609
    %v674 = vmul.f32 %v658, %v610
    %v675 = vmul.f32 %v659, %v611
    %v676 = vmul.f32 %v660, %v612
    %v677 = vmul.f32 %v661, %v613
    %v678 = vmul.f32 %v662, %v614
    %v679 = vmul.f32 %v663, %v615
    %v680 = vmul.f32 %v664, %v616
    %v681 = vmul.f32 %v665, %v617
    %v682 = vmul.f32 %v666, %v618
    %v683 = vmul.f32 %v667, %v619
    %v684 = vmul.f32 %v668, %v620
    %v685 = vmul.f32 %v669, %v621
    %v686 = vmul.f32 %v670, %v622
    %v687 = vmul.f32 %v671, %v623
    %v688 = vadd.f32 %v608, %v672
    %v689 = vadd.f32 %v609, %v673
    %v690 = vadd.f32 %v610, %v674
    %v691 = vadd.f32 %v611, %v675
    %v692 = vadd.f32 %v612, %v676
    %v693 = vadd.f32 %v613, %v677
    %v694 = vadd.f32 %v614, %v678
    %v695 = vadd.f32 %v615, %v679
    %v696 = vadd.f32 %v616, %v680
    %v697 = vadd.f32 %v617, %v681
    %v698 = vadd.f32 %v618, %v682
    %v699 = vadd.f32 %v619, %v683
    %v700 = vadd.f32 %v620, %v684
    %v701 = vadd.f32 %v621, %v685
    %v702 = vadd.f32 %v622, %v686
    %v703 = vadd.f32 %v623, %v687
    %v704 = vmul.f32 %v688, 0.7978846
    %v705 = vmul.f32 %v689, 0.7978846
    %v706 = vmul.f32 %v690, 0.7978846
    %v707 = vmul.f32 %v691, 0.7978846
    %v708 = vmul.f32 %v692, 0.7978846
    %v709 = vmul.f32 %v693, 0.7978846
    %v710 = vmul.f32 %v694, 0.7978846
    %v711 = vmul.f32 %v695, 0.7978846
    %v712 = vmul.f32 %v696, 0.7978846
    %v713 = vmul.f32 %v697, 0.7978846
    %v714 = vmul.f32 %v698, 0.7978846
    %v715 = vmul.f32 %v699, 0.7978846
    %v716 = vmul.f32 %v700, 0.7978846
    %v717 = vmul.f32 %v701, 0.7978846
    %v718 = vmul.f32 %v702, 0.7978846
    %v719 = vmul.f32 %v703, 0.7978846
    %v720 = vtanh.pop %v704
    %v721 = vtanh.pop %v705
    %v722 = vtanh.pop %v706
    %v723 = vtanh.pop %v707
    %v724 = vtanh.pop %v708
    %v725 = vtanh.pop %v709
    %v726 = vtanh.pop %v710
    %v727 = vtanh.pop %v711
    %v728 = vtanh.pop %v712
    %v729 = vtanh.pop %v713
    %v730 = vtanh.pop %v714
    %v731 = vtanh.pop %v715
    %v732 = vtanh.pop %v716
    %v733 = vtanh.pop %v717
    %v734 = vtanh.pop %v718
    %v735 = vtanh.pop %v719
    %v736 = vadd.f32 %v720, 1.0
    %v737 = vadd.f32 %v721, 1.0
    %v738 = vadd.f32 %v722, 1.0
    %v739 = vadd.f32 %v723, 1.0
    %v740 = vadd.f32 %v724, 1.0
    %v741 = vadd.f32 %v725, 1.0
    %v742 = vadd.f32 %v726, 1.0
    %v743 = vadd.f32 %v727, 1.0
    %v744 = vadd.f32 %v728, 1.0
    %v745 = vadd.f32 %v729, 1.0
    %v746 = vadd.f32 %v730, 1.0
    %v747 = vadd.f32 %v731, 1.0
    %v748 = vadd.f32 %v732, 1.0
    %v749 = vadd.f32 %v733, 1.0
    %v750 = vadd.f32 %v734, 1.0
    %v751 = vadd.f32 %v735, 1.0
    %v752 = vmul.f32 %v624, %v736
    %v753 = vmul.f32 %v625, %v737
    %v754 = vmul.f32 %v626, %v738
    %v755 = vmul.f32 %v627, %v739
    %v756 = vmul.f32 %v628, %v740
    %v757 = vmul.f32 %v629, %v741
    %v758 = vmul.f32 %v630, %v742
    %v759 = vmul.f32 %v631, %v743
    %v760 = vmul.f32 %v632, %v744
    %v761 = vmul.f32 %v633, %v745
    %v762 = vmul.f32 %v634, %v746
    %v763 = vmul.f32 %v635, %v747
    %v764 = vmul.f32 %v636, %v748
    %v765 = vmul.f32 %v637, %v749
    %v766 = vmul.f32 %v638, %v750
    %v767 = vmul.f32 %v639, %v751
    %784 = vrot.lane.b32.xlu0 %v752, 8
    %v785 = vpop.permute.xlu0 %784
    %786 = vrot.lane.b32.xlu0 %v753, 8
    %v787 = vpop.permute.xlu0 %786
    %788 = vrot.lane.b32.xlu0 %v754, 8
    %v789 = vpop.permute.xlu0 %788
    %790 = vrot.lane.b32.xlu0 %v755, 8
    %v791 = vpop.permute.xlu0 %790
    %792 = vrot.lane.b32.xlu0 %v756, 8
    %v793 = vpop.permute.xlu0 %792
    %794 = vrot.lane.b32.xlu0 %v757, 8
    %v795 = vpop.permute.xlu0 %794
    %796 = vrot.lane.b32.xlu0 %v758, 8
    %v797 = vpop.permute.xlu0 %796
    %798 = vrot.lane.b32.xlu0 %v759, 8
    %v799 = vpop.permute.xlu0 %798
    %800 = vrot.lane.b32.xlu0 %v760, 8
    %v801 = vpop.permute.xlu0 %800
    %802 = vrot.lane.b32.xlu0 %v761, 8
    %v803 = vpop.permute.xlu0 %802
    %804 = vrot.lane.b32.xlu0 %v762, 8
    %v805 = vpop.permute.xlu0 %804
    %806 = vrot.lane.b32.xlu0 %v763, 8
    %v807 = vpop.permute.xlu0 %806
    %808 = vrot.lane.b32.xlu0 %v764, 8
    %v809 = vpop.permute.xlu0 %808
    %810 = vrot.lane.b32.xlu0 %v765, 8
    %v811 = vpop.permute.xlu0 %810
    %812 = vrot.lane.b32.xlu0 %v766, 8
    %v813 = vpop.permute.xlu0 %812
    %814 = vrot.lane.b32.xlu0 %v767, 8
    %v815 = vpop.permute.xlu0 %814
    %vm832 = vcmask 130112
    %833 = vst.msk [vmem:[%s70] sm:$0xff] %vm832, %v785
    %834 = vst.msk [vmem:[%s70 + $0x8] sm:$0xff] %vm832, %v787
    %835 = vst.msk [vmem:[%s70 + $0x10] sm:$0xff] %vm832, %v789
    %836 = vst.msk [vmem:[%s70 + $0x18] sm:$0xff] %vm832, %v791
    %837 = vst.msk [vmem:[%s70 + $0x20] sm:$0xff] %vm832, %v793
    %838 = vst.msk [vmem:[%s70 + $0x28] sm:$0xff] %vm832, %v795
    %839 = vst.msk [vmem:[%s70 + $0x30] sm:$0xff] %vm832, %v797
    %840 = vst.msk [vmem:[%s70 + $0x38] sm:$0xff] %vm832, %v799
    %841 = vst.msk [vmem:[%s70 + $0x50] sm:$0xff] %vm832, %v801
    %842 = vst.msk [vmem:[%s70 + $0x58] sm:$0xff] %vm832, %v803
    %843 = vst.msk [vmem:[%s70 + $0x60] sm:$0xff] %vm832, %v805
    %844 = vst.msk [vmem:[%s70 + $0x68] sm:$0xff] %vm832, %v807
    %845 = vst.msk [vmem:[%s70 + $0x70] sm:$0xff] %vm832, %v809
    %846 = vst.msk [vmem:[%s70 + $0x78] sm:$0xff] %vm832, %v811
    %847 = vst.msk [vmem:[%s70 + $0x80] sm:$0xff] %vm832, %v813
    %848 = vst.msk [vmem:[%s70 + $0x88] sm:$0xff] %vm832, %v815
    %vm849 = vcmask 63488
    %850 = vst.msk [vmem:[%s70 + $0x1] sm:$0x7f] %vm849, %v752
    %851 = vst.msk [vmem:[%s70 + $0x9] sm:$0x7f] %vm849, %v753
    %852 = vst.msk [vmem:[%s70 + $0x11] sm:$0x7f] %vm849, %v754
    %853 = vst.msk [vmem:[%s70 + $0x19] sm:$0x7f] %vm849, %v755
    %854 = vst.msk [vmem:[%s70 + $0x21] sm:$0x7f] %vm849, %v756
    %855 = vst.msk [vmem:[%s70 + $0x29] sm:$0x7f] %vm849, %v757
    %856 = vst.msk [vmem:[%s70 + $0x31] sm:$0x7f] %vm849, %v758
    %857 = vst.msk [vmem:[%s70 + $0x39] sm:$0x7f] %vm849, %v759
    %858 = vst.msk [vmem:[%s70 + $0x51] sm:$0x7f] %vm849, %v760
    %859 = vst.msk [vmem:[%s70 + $0x59] sm:$0x7f] %vm849, %v761
    %860 = vst.msk [vmem:[%s70 + $0x61] sm:$0x7f] %vm849, %v762
    %861 = vst.msk [vmem:[%s70 + $0x69] sm:$0x7f] %vm849, %v763
    %862 = vst.msk [vmem:[%s70 + $0x71] sm:$0x7f] %vm849, %v764
    %863 = vst.msk [vmem:[%s70 + $0x79] sm:$0x7f] %vm849, %v765
    %864 = vst.msk [vmem:[%s70 + $0x81] sm:$0x7f] %vm849, %v766
    %865 = vst.msk [vmem:[%s70 + $0x89] sm:$0x7f] %vm849, %v767
    %866 = vrot.lane.b32.xlu0 %v752, 16
    %v867 = vpop.permute.xlu0 %866
    %868 = vrot.lane.b32.xlu0 %v753, 16
    %v869 = vpop.permute.xlu0 %868
    %870 = vrot.lane.b32.xlu0 %v754, 16
    %v871 = vpop.permute.xlu0 %870
    %872 = vrot.lane.b32.xlu0 %v755, 16
    %v873 = vpop.permute.xlu0 %872
    %874 = vrot.lane.b32.xlu0 %v756, 16
    %v875 = vpop.permute.xlu0 %874
    %876 = vrot.lane.b32.xlu0 %v757, 16
    %v877 = vpop.permute.xlu0 %876
    %878 = vrot.lane.b32.xlu0 %v758, 16
    %v879 = vpop.permute.xlu0 %878
    %880 = vrot.lane.b32.xlu0 %v759, 16
    %v881 = vpop.permute.xlu0 %880
    %882 = vrot.lane.b32.xlu0 %v760, 16
    %v883 = vpop.permute.xlu0 %882
    %884 = vrot.lane.b32.xlu0 %v761, 16
    %v885 = vpop.permute.xlu0 %884
    %886 = vrot.lane.b32.xlu0 %v762, 16
    %v887 = vpop.permute.xlu0 %886
    %888 = vrot.lane.b32.xlu0 %v763, 16
    %v889 = vpop.permute.xlu0 %888
    %890 = vrot.lane.b32.xlu0 %v764, 16
    %v891 = vpop.permute.xlu0 %890
    %892 = vrot.lane.b32.xlu0 %v765, 16
    %v893 = vpop.permute.xlu0 %892
    %894 = vrot.lane.b32.xlu0 %v766, 16
    %v895 = vpop.permute.xlu0 %894
    %896 = vrot.lane.b32.xlu0 %v767, 16
    %v897 = vpop.permute.xlu0 %896
    %vm914 = vcmask 195713
    %915 = vst.msk [vmem:[%s70 - $0x1] sm:$0xfe] %vm914, %v867
    %916 = vst.msk [vmem:[%s70 + $0x7] sm:$0xfe] %vm914, %v869
    %917 = vst.msk [vmem:[%s70 + $0xf] sm:$0xfe] %vm914, %v871
    %918 = vst.msk [vmem:[%s70 + $0x17] sm:$0xfe] %vm914, %v873
    %919 = vst.msk [vmem:[%s70 + $0x1f] sm:$0xfe] %vm914, %v875
    %920 = vst.msk [vmem:[%s70 + $0x27] sm:$0xfe] %vm914, %v877
    %921 = vst.msk [vmem:[%s70 + $0x2f] sm:$0xfe] %vm914, %v879
    %922 = vst.msk [vmem:[%s70 + $0x37] sm:$0xfe] %vm914, %v881
    %923 = vst.msk [vmem:[%s70 + $0x4f] sm:$0xfe] %vm914, %v883
    %924 = vst.msk [vmem:[%s70 + $0x57] sm:$0xfe] %vm914, %v885
    %925 = vst.msk [vmem:[%s70 + $0x5f] sm:$0xfe] %vm914, %v887
    %926 = vst.msk [vmem:[%s70 + $0x67] sm:$0xfe] %vm914, %v889
    %927 = vst.msk [vmem:[%s70 + $0x6f] sm:$0xfe] %vm914, %v891
    %928 = vst.msk [vmem:[%s70 + $0x77] sm:$0xfe] %vm914, %v893
    %929 = vst.msk [vmem:[%s70 + $0x7f] sm:$0xfe] %vm914, %v895
    %930 = vst.msk [vmem:[%s70 + $0x87] sm:$0xfe] %vm914, %v897
    %v931 = vld [vmem:[#allocation2] sm:$0xff]
    %v932 = vld [vmem:[#allocation2 + $0x8] sm:$0xff]
    %v933 = vld [vmem:[#allocation2 + $0x10] sm:$0xff]
    %v934 = vld [vmem:[#allocation2 + $0x18] sm:$0xff]
    %v935 = vld [vmem:[#allocation2 + $0x20] sm:$0xff]
    %v936 = vld [vmem:[#allocation2 + $0x28] sm:$0xff]
    %v937 = vld [vmem:[#allocation2 + $0x30] sm:$0xff]
    %v938 = vld [vmem:[#allocation2 + $0x38] sm:$0xff]
    %v939 = vld [vmem:[#allocation2 + $0x50] sm:$0xff]
    %v940 = vld [vmem:[#allocation2 + $0x58] sm:$0xff]
    %v941 = vld [vmem:[#allocation2 + $0x60] sm:$0xff]
    %v942 = vld [vmem:[#allocation2 + $0x68] sm:$0xff]
    %v943 = vld [vmem:[#allocation2 + $0x70] sm:$0xff]
    %v944 = vld [vmem:[#allocation2 + $0x78] sm:$0xff]
    %v945 = vld [vmem:[#allocation2 + $0x80] sm:$0xff]
    %v946 = vld [vmem:[#allocation2 + $0x88] sm:$0xff]
    %v947 = vpack.c.bf16 %v932, %v931
    %v948 = vpack.c.bf16 %v934, %v933
    %v949 = vpack.c.bf16 %v936, %v935
    %v950 = vpack.c.bf16 %v938, %v937
    %v951 = vpack.c.bf16 %v940, %v939
    %v952 = vpack.c.bf16 %v942, %v941
    %v953 = vpack.c.bf16 %v944, %v943
    %v954 = vpack.c.bf16 %v946, %v945
    %v955 = vld [vmem:[%s7] sm:$0xf]
    %v956 = vld [vmem:[%s7 + $0x4] sm:$0xf]
    %v957 = vld [vmem:[%s7 + $0x8] sm:$0xf]
    %v958 = vld [vmem:[%s70] sm:$0xff]
    %v959 = vld [vmem:[%s70 + $0x8] sm:$0xff]
    %v960 = vld [vmem:[%s70 + $0x10] sm:$0xff]
    %v961 = vld [vmem:[%s70 + $0x18] sm:$0xff]
    %v962 = vld [vmem:[%s70 + $0x20] sm:$0xff]
    %v963 = vld [vmem:[%s70 + $0x28] sm:$0xff]
    %v964 = vld [vmem:[%s70 + $0x30] sm:$0xff]
    %v965 = vld [vmem:[%s70 + $0x38] sm:$0xff]
    %v966 = vld [vmem:[%s70 + $0x50] sm:$0xff]
    %v967 = vld [vmem:[%s70 + $0x58] sm:$0xff]
    %v968 = vld [vmem:[%s70 + $0x60] sm:$0xff]
    %v969 = vld [vmem:[%s70 + $0x68] sm:$0xff]
    %v970 = vld [vmem:[%s70 + $0x70] sm:$0xff]
    %v971 = vld [vmem:[%s70 + $0x78] sm:$0xff]
    %v972 = vld [vmem:[%s70 + $0x80] sm:$0xff]
    %v973 = vld [vmem:[%s70 + $0x88] sm:$0xff]
    %v974 = vpack.c.bf16 %v959, %v958
    %v975 = vpack.c.bf16 %v961, %v960
    %v976 = vpack.c.bf16 %v963, %v962
    %v977 = vpack.c.bf16 %v965, %v964
    %v978 = vpack.c.bf16 %v967, %v966
    %v979 = vpack.c.bf16 %v969, %v968
    %v980 = vpack.c.bf16 %v971, %v970
    %v981 = vpack.c.bf16 %v973, %v972
    %s982 = scalar_lea.vmem %s7, 12
    %v983 = vld [vmem:[%s982] sm:$0xf]
    %v984 = vld [vmem:[%s982 + $0x4] sm:$0xf]
    %v985 = vld [vmem:[%s982 + $0x8] sm:$0xf]
    %v989 = vunpack.c.l.b16 %v983
    %v990 = vunpack.c.l.b16 %v984
    %v991 = vunpack.c.l.b16 %v985
    %v992 = vpack.c.b16 %v990, %v989
    %v993 = vpack.c.b16 %v991, %v991
    %v996 = vsel %vm64, %v974, 0
    %v999 = vsel %vm64, %v975, 0
    %v1002 = vsel %vm64, %v976, 0
    %v1005 = vsel %vm64, %v977, 0
    %v1008 = vsel %vm64, %v978, 0
    %v1011 = vsel %vm64, %v979, 0
    %v1014 = vsel %vm64, %v980, 0
    %v1017 = vsel %vm64, %v981, 0
    %vm1019 = vcmask 1043456
    %v1021 = vsel %vm1019, %v993, 0
    %1023 = vmatpush.bf16.msra.mxu0 0
    %1024 = vmatpush.bf16.msra.mxu0 0
    %1025 = vmatpush.bf16.msra.mxu0 0
    %1026 = vmatpush.bf16.msra.mxu0 0
    %1027 = vmatpush.bf16.msra.mxu0 0
    %1028 = vmatpush.bf16.msra.mxu0 0
    %1029 = vmatpush.bf16.msra.mxu0 %v1021
    %1030 = vmatpush.bf16.msra.mxu0 %v992
    %1031 = vmatmul.bf16.gmra.mxu0 %v996
    %v1032 = vpop.f32.mrf.mxu0
    %v1033 = vadd.f32 0.0, %v1032
    %v1034 = vpop.f32.mrf.mxu0
    %v1035 = vadd.f32 0.0, %v1034
    %1036 = vmatmul.bf16.gmra.mxu0 %v999
    %v1037 = vpop.f32.mrf.mxu0
    %v1038 = vadd.f32 0.0, %v1037
    %v1039 = vpop.f32.mrf.mxu0
    %v1040 = vadd.f32 0.0, %v1039
    %1041 = vmatmul.bf16.gmra.mxu0 %v1002
    %v1042 = vpop.f32.mrf.mxu0
    %v1043 = vadd.f32 0.0, %v1042
    %v1044 = vpop.f32.mrf.mxu0
    %v1045 = vadd.f32 0.0, %v1044
    %1046 = vmatmul.bf16.gmra.mxu0 %v1005
    %v1047 = vpop.f32.mrf.mxu0
    %v1048 = vadd.f32 0.0, %v1047
    %v1049 = vpop.f32.mrf.mxu0
    %v1050 = vadd.f32 0.0, %v1049
    %1051 = vmatmul.bf16.gmra.mxu0 %v1008
    %v1052 = vpop.f32.mrf.mxu0
    %v1053 = vadd.f32 0.0, %v1052
    %v1054 = vpop.f32.mrf.mxu0
    %v1055 = vadd.f32 0.0, %v1054
    %1056 = vmatmul.bf16.gmra.mxu0 %v1011
    %v1057 = vpop.f32.mrf.mxu0
    %v1058 = vadd.f32 0.0, %v1057
    %v1059 = vpop.f32.mrf.mxu0
    %v1060 = vadd.f32 0.0, %v1059
    %1061 = vmatmul.bf16.gmra.mxu0 %v1014
    %v1062 = vpop.f32.mrf.mxu0
    %v1063 = vadd.f32 0.0, %v1062
    %v1064 = vpop.f32.mrf.mxu0
    %v1065 = vadd.f32 0.0, %v1064
    %1066 = vmatmul.bf16.gmra.mxu0 %v1017
    %v1067 = vpop.f32.mrf.mxu0
    %v1068 = vadd.f32 0.0, %v1067
    %v1069 = vpop.f32.mrf.mxu0
    %v1070 = vadd.f32 0.0, %v1069
    %1071 = vdwg.mxu0
    %v1075 = vunpack.c.l.b16 %v955
    %v1076 = vunpack.c.l.b16 %v956
    %v1077 = vunpack.c.l.b16 %v957
    %v1078 = vpack.c.b16 %v1076, %v1075
    %v1079 = vpack.c.b16 %v1077, %v1077
    %v1082 = vsel %vm64, %v947, 0
    %v1085 = vsel %vm64, %v948, 0
    %v1088 = vsel %vm64, %v949, 0
    %v1091 = vsel %vm64, %v950, 0
    %v1094 = vsel %vm64, %v951, 0
    %v1097 = vsel %vm64, %v952, 0
    %v1100 = vsel %vm64, %v953, 0
    %v1103 = vsel %vm64, %v954, 0
    %v1106 = vsel %vm1019, %v1079, 0
    %1108 = vmatpush.bf16.msra.mxu0 0
    %1109 = vmatpush.bf16.msra.mxu0 0
    %1110 = vmatpush.bf16.msra.mxu0 0
    %1111 = vmatpush.bf16.msra.mxu0 0
    %1112 = vmatpush.bf16.msra.mxu0 0
    %1113 = vmatpush.bf16.msra.mxu0 0
    %1114 = vmatpush.bf16.msra.mxu0 %v1106
    %1115 = vmatpush.bf16.msra.mxu0 %v1078
    %1116 = vmatmul.bf16.gmra.mxu0 %v1082
    %v1117 = vpop.f32.mrf.mxu0
    %v1118 = vadd.f32 %v1033, %v1117
    %v1119 = vpop.f32.mrf.mxu0
    %v1120 = vadd.f32 %v1035, %v1119
    %1121 = vmatmul.bf16.gmra.mxu0 %v1085
    %v1122 = vpop.f32.mrf.mxu0
    %v1123 = vadd.f32 %v1038, %v1122
    %v1124 = vpop.f32.mrf.mxu0
    %v1125 = vadd.f32 %v1040, %v1124
    %1126 = vmatmul.bf16.gmra.mxu0 %v1088
    %v1127 = vpop.f32.mrf.mxu0
    %v1128 = vadd.f32 %v1043, %v1127
    %v1129 = vpop.f32.mrf.mxu0
    %v1130 = vadd.f32 %v1045, %v1129
    %1131 = vmatmul.bf16.gmra.mxu0 %v1091
    %v1132 = vpop.f32.mrf.mxu0
    %v1133 = vadd.f32 %v1048, %v1132
    %v1134 = vpop.f32.mrf.mxu0
    %v1135 = vadd.f32 %v1050, %v1134
    %1136 = vmatmul.bf16.gmra.mxu0 %v1094
    %v1137 = vpop.f32.mrf.mxu0
    %v1138 = vadd.f32 %v1053, %v1137
    %v1139 = vpop.f32.mrf.mxu0
    %v1140 = vadd.f32 %v1055, %v1139
    %1141 = vmatmul.bf16.gmra.mxu0 %v1097
    %v1142 = vpop.f32.mrf.mxu0
    %v1143 = vadd.f32 %v1058, %v1142
    %v1144 = vpop.f32.mrf.mxu0
    %v1145 = vadd.f32 %v1060, %v1144
    %1146 = vmatmul.bf16.gmra.mxu0 %v1100
    %v1147 = vpop.f32.mrf.mxu0
    %v1148 = vadd.f32 %v1063, %v1147
    %v1149 = vpop.f32.mrf.mxu0
    %v1150 = vadd.f32 %v1065, %v1149
    %1151 = vmatmul.bf16.gmra.mxu0 %v1103
    %v1152 = vpop.f32.mrf.mxu0
    %v1153 = vadd.f32 %v1068, %v1152
    %v1154 = vpop.f32.mrf.mxu0
    %v1155 = vadd.f32 %v1070, %v1154
    %1156 = vdwg.mxu0
    %s1157 = scalar_lea.vmem [#allocation2], 16
    %v1158 = vld [vmem:[%s1157] sm:$0xff]
    %v1159 = vld [vmem:[%s1157 + $0x8] sm:$0xff]
    %v1160 = vld [vmem:[%s1157 + $0x10] sm:$0xff]
    %v1161 = vld [vmem:[%s1157 + $0x18] sm:$0xff]
    %v1162 = vld [vmem:[%s1157 + $0x20] sm:$0xff]
    %v1163 = vld [vmem:[%s1157 + $0x28] sm:$0xff]
    %v1164 = vld [vmem:[%s1157 + $0x30] sm:$0xff]
    %v1165 = vld [vmem:[%s1157 + $0x38] sm:$0xff]
    %v1166 = vld [vmem:[%s1157 + $0x50] sm:$0xff]
    %v1167 = vld [vmem:[%s1157 + $0x58] sm:$0xff]
    %v1168 = vld [vmem:[%s1157 + $0x60] sm:$0xff]
    %v1169 = vld [vmem:[%s1157 + $0x68] sm:$0xff]
    %v1170 = vld [vmem:[%s1157 + $0x70] sm:$0xff]
    %v1171 = vld [vmem:[%s1157 + $0x78] sm:$0xff]
    %v1172 = vld [vmem:[%s1157 + $0x80] sm:$0xff]
    %v1173 = vld [vmem:[%s1157 + $0x88] sm:$0xff]
    %v1174 = vpack.c.bf16 %v1159, %v1158
    %v1175 = vpack.c.bf16 %v1161, %v1160
    %v1176 = vpack.c.bf16 %v1163, %v1162
    %v1177 = vpack.c.bf16 %v1165, %v1164
    %v1178 = vpack.c.bf16 %v1167, %v1166
    %v1179 = vpack.c.bf16 %v1169, %v1168
    %v1180 = vpack.c.bf16 %v1171, %v1170
    %v1181 = vpack.c.bf16 %v1173, %v1172
    %s1182 = scalar_lea.vmem %s7, 24
    %v1183 = vld [vmem:[%s1182] sm:$0xf]
    %v1184 = vld [vmem:[%s1182 + $0x4] sm:$0xf]
    %v1185 = vld [vmem:[%s1182 + $0x8] sm:$0xf]
    %v1189 = vunpack.c.l.b16 %v1183
    %v1190 = vunpack.c.l.b16 %v1184
    %v1191 = vunpack.c.l.b16 %v1185
    %v1192 = vpack.c.b16 %v1190, %v1189
    %v1193 = vpack.c.b16 %v1191, %v1191
    %v1196 = vsel %vm64, %v1174, 0
    %v1199 = vsel %vm64, %v1175, 0
    %v1202 = vsel %vm64, %v1176, 0
    %v1205 = vsel %vm64, %v1177, 0
    %v1208 = vsel %vm64, %v1178, 0
    %v1211 = vsel %vm64, %v1179, 0
    %v1214 = vsel %vm64, %v1180, 0
    %v1217 = vsel %vm64, %v1181, 0
    %v1220 = vsel %vm1019, %v1193, 0
    %1222 = vmatpush.bf16.msra.mxu0 0
    %1223 = vmatpush.bf16.msra.mxu0 0
    %1224 = vmatpush.bf16.msra.mxu0 0
    %1225 = vmatpush.bf16.msra.mxu0 0
    %1226 = vmatpush.bf16.msra.mxu0 0
    %1227 = vmatpush.bf16.msra.mxu0 0
    %1228 = vmatpush.bf16.msra.mxu0 %v1220
    %1229 = vmatpush.bf16.msra.mxu0 %v1192
    %1230 = vmatmul.bf16.gmra.mxu0 %v1196
    %v1231 = vpop.f32.mrf.mxu0
    %v1232 = vadd.f32 0.0, %v1231
    %v1233 = vpop.f32.mrf.mxu0
    %v1234 = vadd.f32 0.0, %v1233
    %1235 = vmatmul.bf16.gmra.mxu0 %v1199
    %v1236 = vpop.f32.mrf.mxu0
    %v1237 = vadd.f32 0.0, %v1236
    %v1238 = vpop.f32.mrf.mxu0
    %v1239 = vadd.f32 0.0, %v1238
    %1240 = vmatmul.bf16.gmra.mxu0 %v1202
    %v1241 = vpop.f32.mrf.mxu0
    %v1242 = vadd.f32 0.0, %v1241
    %v1243 = vpop.f32.mrf.mxu0
    %v1244 = vadd.f32 0.0, %v1243
    %1245 = vmatmul.bf16.gmra.mxu0 %v1205
    %v1246 = vpop.f32.mrf.mxu0
    %v1247 = vadd.f32 0.0, %v1246
    %v1248 = vpop.f32.mrf.mxu0
    %v1249 = vadd.f32 0.0, %v1248
    %1250 = vmatmul.bf16.gmra.mxu0 %v1208
    %v1251 = vpop.f32.mrf.mxu0
    %v1252 = vadd.f32 0.0, %v1251
    %v1253 = vpop.f32.mrf.mxu0
    %v1254 = vadd.f32 0.0, %v1253
    %1255 = vmatmul.bf16.gmra.mxu0 %v1211
    %v1256 = vpop.f32.mrf.mxu0
    %v1257 = vadd.f32 0.0, %v1256
    %v1258 = vpop.f32.mrf.mxu0
    %v1259 = vadd.f32 0.0, %v1258
    %1260 = vmatmul.bf16.gmra.mxu0 %v1214
    %v1261 = vpop.f32.mrf.mxu0
    %v1262 = vadd.f32 0.0, %v1261
    %v1263 = vpop.f32.mrf.mxu0
    %v1264 = vadd.f32 0.0, %v1263
    %1265 = vmatmul.bf16.gmra.mxu0 %v1217
    %v1266 = vpop.f32.mrf.mxu0
    %v1267 = vadd.f32 0.0, %v1266
    %v1268 = vpop.f32.mrf.mxu0
    %v1269 = vadd.f32 0.0, %v1268
    %1270 = vdwg.mxu0
    %v1271 = vadd.f32 %v1118, %v1232
    %v1272 = vadd.f32 %v1120, %v1234
    %v1273 = vadd.f32 %v1123, %v1237
    %v1274 = vadd.f32 %v1125, %v1239
    %v1275 = vadd.f32 %v1128, %v1242
    %v1276 = vadd.f32 %v1130, %v1244
    %v1277 = vadd.f32 %v1133, %v1247
    %v1278 = vadd.f32 %v1135, %v1249
    %v1279 = vadd.f32 %v1138, %v1252
    %v1280 = vadd.f32 %v1140, %v1254
    %v1281 = vadd.f32 %v1143, %v1257
    %v1282 = vadd.f32 %v1145, %v1259
    %v1283 = vadd.f32 %v1148, %v1262
    %v1284 = vadd.f32 %v1150, %v1264
    %v1285 = vadd.f32 %v1153, %v1267
    %v1286 = vadd.f32 %v1155, %v1269
    %v1287 = vld [vmem:[%s8] sm:$0x1]
    %v1289 = vperm.slane %v1287, 0
    %v1291 = vadd.f32 %v1271, %v1289
    %v1292 = vadd.f32 %v1272, %v1289
    %v1293 = vadd.f32 %v1273, %v1289
    %v1294 = vadd.f32 %v1274, %v1289
    %v1295 = vadd.f32 %v1275, %v1289
    %v1296 = vadd.f32 %v1276, %v1289
    %v1297 = vadd.f32 %v1277, %v1289
    %v1298 = vadd.f32 %v1278, %v1289
    %v1299 = vadd.f32 %v1279, %v1289
    %v1300 = vadd.f32 %v1280, %v1289
    %v1301 = vadd.f32 %v1281, %v1289
    %v1302 = vadd.f32 %v1282, %v1289
    %v1303 = vadd.f32 %v1283, %v1289
    %v1304 = vadd.f32 %v1284, %v1289
    %v1305 = vadd.f32 %v1285, %v1289
    %v1306 = vadd.f32 %v1286, %v1289
    %v1307 = vmul.f32 %v1291, 0.5
    %v1308 = vmul.f32 %v1292, 0.5
    %v1309 = vmul.f32 %v1293, 0.5
    %v1310 = vmul.f32 %v1294, 0.5
    %v1311 = vmul.f32 %v1295, 0.5
    %v1312 = vmul.f32 %v1296, 0.5
    %v1313 = vmul.f32 %v1297, 0.5
    %v1314 = vmul.f32 %v1298, 0.5
    %v1315 = vmul.f32 %v1299, 0.5
    %v1316 = vmul.f32 %v1300, 0.5
    %v1317 = vmul.f32 %v1301, 0.5
    %v1318 = vmul.f32 %v1302, 0.5
    %v1319 = vmul.f32 %v1303, 0.5
    %v1320 = vmul.f32 %v1304, 0.5
    %v1321 = vmul.f32 %v1305, 0.5
    %v1322 = vmul.f32 %v1306, 0.5
    %v1323 = vmul.f32 %v1291, 0.044715
    %v1324 = vmul.f32 %v1292, 0.044715
    %v1325 = vmul.f32 %v1293, 0.044715
    %v1326 = vmul.f32 %v1294, 0.044715
    %v1327 = vmul.f32 %v1295, 0.044715
    %v1328 = vmul.f32 %v1296, 0.044715
    %v1329 = vmul.f32 %v1297, 0.044715
    %v1330 = vmul.f32 %v1298, 0.044715
    %v1331 = vmul.f32 %v1299, 0.044715
    %v1332 = vmul.f32 %v1300, 0.044715
    %v1333 = vmul.f32 %v1301, 0.044715
    %v1334 = vmul.f32 %v1302, 0.044715
    %v1335 = vmul.f32 %v1303, 0.044715
    %v1336 = vmul.f32 %v1304, 0.044715
    %v1337 = vmul.f32 %v1305, 0.044715
    %v1338 = vmul.f32 %v1306, 0.044715
    %v1339 = vmul.f32 %v1323, %v1291
    %v1340 = vmul.f32 %v1324, %v1292
    %v1341 = vmul.f32 %v1325, %v1293
    %v1342 = vmul.f32 %v1326, %v1294
    %v1343 = vmul.f32 %v1327, %v1295
    %v1344 = vmul.f32 %v1328, %v1296
    %v1345 = vmul.f32 %v1329, %v1297
    %v1346 = vmul.f32 %v1330, %v1298
    %v1347 = vmul.f32 %v1331, %v1299
    %v1348 = vmul.f32 %v1332, %v1300
    %v1349 = vmul.f32 %v1333, %v1301
    %v1350 = vmul.f32 %v1334, %v1302
    %v1351 = vmul.f32 %v1335, %v1303
    %v1352 = vmul.f32 %v1336, %v1304
    %v1353 = vmul.f32 %v1337, %v1305
    %v1354 = vmul.f32 %v1338, %v1306
    %v1355 = vmul.f32 %v1339, %v1291
    %v1356 = vmul.f32 %v1340, %v1292
    %v1357 = vmul.f32 %v1341, %v1293
    %v1358 = vmul.f32 %v1342, %v1294
    %v1359 = vmul.f32 %v1343, %v1295
    %v1360 = vmul.f32 %v1344, %v1296
    %v1361 = vmul.f32 %v1345, %v1297
    %v1362 = vmul.f32 %v1346, %v1298
    %v1363 = vmul.f32 %v1347, %v1299
    %v1364 = vmul.f32 %v1348, %v1300
    %v1365 = vmul.f32 %v1349, %v1301
    %v1366 = vmul.f32 %v1350, %v1302
    %v1367 = vmul.f32 %v1351, %v1303
    %v1368 = vmul.f32 %v1352, %v1304
    %v1369 = vmul.f32 %v1353, %v1305
    %v1370 = vmul.f32 %v1354, %v1306
    %v1371 = vadd.f32 %v1291, %v1355
    %v1372 = vadd.f32 %v1292, %v1356
    %v1373 = vadd.f32 %v1293, %v1357
    %v1374 = vadd.f32 %v1294, %v1358
    %v1375 = vadd.f32 %v1295, %v1359
    %v1376 = vadd.f32 %v1296, %v1360
    %v1377 = vadd.f32 %v1297, %v1361
    %v1378 = vadd.f32 %v1298, %v1362
    %v1379 = vadd.f32 %v1299, %v1363
    %v1380 = vadd.f32 %v1300, %v1364
    %v1381 = vadd.f32 %v1301, %v1365
    %v1382 = vadd.f32 %v1302, %v1366
    %v1383 = vadd.f32 %v1303, %v1367
    %v1384 = vadd.f32 %v1304, %v1368
    %v1385 = vadd.f32 %v1305, %v1369
    %v1386 = vadd.f32 %v1306, %v1370
    %v1387 = vmul.f32 %v1371, 0.7978846
    %v1388 = vmul.f32 %v1372, 0.7978846
    %v1389 = vmul.f32 %v1373, 0.7978846
    %v1390 = vmul.f32 %v1374, 0.7978846
    %v1391 = vmul.f32 %v1375, 0.7978846
    %v1392 = vmul.f32 %v1376, 0.7978846
    %v1393 = vmul.f32 %v1377, 0.7978846
    %v1394 = vmul.f32 %v1378, 0.7978846
    %v1395 = vmul.f32 %v1379, 0.7978846
    %v1396 = vmul.f32 %v1380, 0.7978846
    %v1397 = vmul.f32 %v1381, 0.7978846
    %v1398 = vmul.f32 %v1382, 0.7978846
    %v1399 = vmul.f32 %v1383, 0.7978846
    %v1400 = vmul.f32 %v1384, 0.7978846
    %v1401 = vmul.f32 %v1385, 0.7978846
    %v1402 = vmul.f32 %v1386, 0.7978846
    %v1403 = vtanh.pop %v1387
    %v1404 = vtanh.pop %v1388
    %v1405 = vtanh.pop %v1389
    %v1406 = vtanh.pop %v1390
    %v1407 = vtanh.pop %v1391
    %v1408 = vtanh.pop %v1392
    %v1409 = vtanh.pop %v1393
    %v1410 = vtanh.pop %v1394
    %v1411 = vtanh.pop %v1395
    %v1412 = vtanh.pop %v1396
    %v1413 = vtanh.pop %v1397
    %v1414 = vtanh.pop %v1398
    %v1415 = vtanh.pop %v1399
    %v1416 = vtanh.pop %v1400
    %v1417 = vtanh.pop %v1401
    %v1418 = vtanh.pop %v1402
    %v1419 = vadd.f32 %v1403, 1.0
    %v1420 = vadd.f32 %v1404, 1.0
    %v1421 = vadd.f32 %v1405, 1.0
    %v1422 = vadd.f32 %v1406, 1.0
    %v1423 = vadd.f32 %v1407, 1.0
    %v1424 = vadd.f32 %v1408, 1.0
    %v1425 = vadd.f32 %v1409, 1.0
    %v1426 = vadd.f32 %v1410, 1.0
    %v1427 = vadd.f32 %v1411, 1.0
    %v1428 = vadd.f32 %v1412, 1.0
    %v1429 = vadd.f32 %v1413, 1.0
    %v1430 = vadd.f32 %v1414, 1.0
    %v1431 = vadd.f32 %v1415, 1.0
    %v1432 = vadd.f32 %v1416, 1.0
    %v1433 = vadd.f32 %v1417, 1.0
    %v1434 = vadd.f32 %v1418, 1.0
    %v1435 = vmul.f32 %v1307, %v1419
    %v1436 = vmul.f32 %v1308, %v1420
    %v1437 = vmul.f32 %v1309, %v1421
    %v1438 = vmul.f32 %v1310, %v1422
    %v1439 = vmul.f32 %v1311, %v1423
    %v1440 = vmul.f32 %v1312, %v1424
    %v1441 = vmul.f32 %v1313, %v1425
    %v1442 = vmul.f32 %v1314, %v1426
    %v1443 = vmul.f32 %v1315, %v1427
    %v1444 = vmul.f32 %v1316, %v1428
    %v1445 = vmul.f32 %v1317, %v1429
    %v1446 = vmul.f32 %v1318, %v1430
    %v1447 = vmul.f32 %v1319, %v1431
    %v1448 = vmul.f32 %v1320, %v1432
    %v1449 = vmul.f32 %v1321, %v1433
    %v1450 = vmul.f32 %v1322, %v1434
    %1467 = vrot.lane.b32.xlu0 %v1435, 8
    %v1468 = vpop.permute.xlu0 %1467
    %1469 = vrot.lane.b32.xlu0 %v1436, 8
    %v1470 = vpop.permute.xlu0 %1469
    %1471 = vrot.lane.b32.xlu0 %v1437, 8
    %v1472 = vpop.permute.xlu0 %1471
    %1473 = vrot.lane.b32.xlu0 %v1438, 8
    %v1474 = vpop.permute.xlu0 %1473
    %1475 = vrot.lane.b32.xlu0 %v1439, 8
    %v1476 = vpop.permute.xlu0 %1475
    %1477 = vrot.lane.b32.xlu0 %v1440, 8
    %v1478 = vpop.permute.xlu0 %1477
    %1479 = vrot.lane.b32.xlu0 %v1441, 8
    %v1480 = vpop.permute.xlu0 %1479
    %1481 = vrot.lane.b32.xlu0 %v1442, 8
    %v1482 = vpop.permute.xlu0 %1481
    %1483 = vrot.lane.b32.xlu0 %v1443, 8
    %v1484 = vpop.permute.xlu0 %1483
    %1485 = vrot.lane.b32.xlu0 %v1444, 8
    %v1486 = vpop.permute.xlu0 %1485
    %1487 = vrot.lane.b32.xlu0 %v1445, 8
    %v1488 = vpop.permute.xlu0 %1487
    %1489 = vrot.lane.b32.xlu0 %v1446, 8
    %v1490 = vpop.permute.xlu0 %1489
    %1491 = vrot.lane.b32.xlu0 %v1447, 8
    %v1492 = vpop.permute.xlu0 %1491
    %1493 = vrot.lane.b32.xlu0 %v1448, 8
    %v1494 = vpop.permute.xlu0 %1493
    %1495 = vrot.lane.b32.xlu0 %v1449, 8
    %v1496 = vpop.permute.xlu0 %1495
    %1497 = vrot.lane.b32.xlu0 %v1450, 8
    %v1498 = vpop.permute.xlu0 %1497
    %1515 = vst.msk [vmem:[%s70] sm:$0xff] %vm832, %v1468
    %1516 = vst.msk [vmem:[%s70 + $0x8] sm:$0xff] %vm832, %v1470
    %1517 = vst.msk [vmem:[%s70 + $0x10] sm:$0xff] %vm832, %v1472
    %1518 = vst.msk [vmem:[%s70 + $0x18] sm:$0xff] %vm832, %v1474
    %1519 = vst.msk [vmem:[%s70 + $0x20] sm:$0xff] %vm832, %v1476
    %1520 = vst.msk [vmem:[%s70 + $0x28] sm:$0xff] %vm832, %v1478
    %1521 = vst.msk [vmem:[%s70 + $0x30] sm:$0xff] %vm832, %v1480
    %1522 = vst.msk [vmem:[%s70 + $0x38] sm:$0xff] %vm832, %v1482
    %1523 = vst.msk [vmem:[%s70 + $0x50] sm:$0xff] %vm832, %v1484
    %1524 = vst.msk [vmem:[%s70 + $0x58] sm:$0xff] %vm832, %v1486
    %1525 = vst.msk [vmem:[%s70 + $0x60] sm:$0xff] %vm832, %v1488
    %1526 = vst.msk [vmem:[%s70 + $0x68] sm:$0xff] %vm832, %v1490
    %1527 = vst.msk [vmem:[%s70 + $0x70] sm:$0xff] %vm832, %v1492
    %1528 = vst.msk [vmem:[%s70 + $0x78] sm:$0xff] %vm832, %v1494
    %1529 = vst.msk [vmem:[%s70 + $0x80] sm:$0xff] %vm832, %v1496
    %1530 = vst.msk [vmem:[%s70 + $0x88] sm:$0xff] %vm832, %v1498
    %1531 = vst.msk [vmem:[%s70 + $0x1] sm:$0x7f] %vm849, %v1435
    %1532 = vst.msk [vmem:[%s70 + $0x9] sm:$0x7f] %vm849, %v1436
    %1533 = vst.msk [vmem:[%s70 + $0x11] sm:$0x7f] %vm849, %v1437
    %1534 = vst.msk [vmem:[%s70 + $0x19] sm:$0x7f] %vm849, %v1438
    %1535 = vst.msk [vmem:[%s70 + $0x21] sm:$0x7f] %vm849, %v1439
    %1536 = vst.msk [vmem:[%s70 + $0x29] sm:$0x7f] %vm849, %v1440
    %1537 = vst.msk [vmem:[%s70 + $0x31] sm:$0x7f] %vm849, %v1441
    %1538 = vst.msk [vmem:[%s70 + $0x39] sm:$0x7f] %vm849, %v1442
    %1539 = vst.msk [vmem:[%s70 + $0x51] sm:$0x7f] %vm849, %v1443
    %1540 = vst.msk [vmem:[%s70 + $0x59] sm:$0x7f] %vm849, %v1444
    %1541 = vst.msk [vmem:[%s70 + $0x61] sm:$0x7f] %vm849, %v1445
    %1542 = vst.msk [vmem:[%s70 + $0x69] sm:$0x7f] %vm849, %v1446
    %1543 = vst.msk [vmem:[%s70 + $0x71] sm:$0x7f] %vm849, %v1447
    %1544 = vst.msk [vmem:[%s70 + $0x79] sm:$0x7f] %vm849, %v1448
    %1545 = vst.msk [vmem:[%s70 + $0x81] sm:$0x7f] %vm849, %v1449
    %1546 = vst.msk [vmem:[%s70 + $0x89] sm:$0x7f] %vm849, %v1450
    %1547 = vrot.lane.b32.xlu0 %v1435, 16
    %v1548 = vpop.permute.xlu0 %1547
    %1549 = vrot.lane.b32.xlu0 %v1436, 16
    %v1550 = vpop.permute.xlu0 %1549
    %1551 = vrot.lane.b32.xlu0 %v1437, 16
    %v1552 = vpop.permute.xlu0 %1551
    %1553 = vrot.lane.b32.xlu0 %v1438, 16
    %v1554 = vpop.permute.xlu0 %1553
    %1555 = vrot.lane.b32.xlu0 %v1439, 16
    %v1556 = vpop.permute.xlu0 %1555
    %1557 = vrot.lane.b32.xlu0 %v1440, 16
    %v1558 = vpop.permute.xlu0 %1557
    %1559 = vrot.lane.b32.xlu0 %v1441, 16
    %v1560 = vpop.permute.xlu0 %1559
    %1561 = vrot.lane.b32.xlu0 %v1442, 16
    %v1562 = vpop.permute.xlu0 %1561
    %1563 = vrot.lane.b32.xlu0 %v1443, 16
    %v1564 = vpop.permute.xlu0 %1563
    %1565 = vrot.lane.b32.xlu0 %v1444, 16
    %v1566 = vpop.permute.xlu0 %1565
    %1567 = vrot.lane.b32.xlu0 %v1445, 16
    %v1568 = vpop.permute.xlu0 %1567
    %1569 = vrot.lane.b32.xlu0 %v1446, 16
    %v1570 = vpop.permute.xlu0 %1569
    %1571 = vrot.lane.b32.xlu0 %v1447, 16
    %v1572 = vpop.permute.xlu0 %1571
    %1573 = vrot.lane.b32.xlu0 %v1448, 16
    %v1574 = vpop.permute.xlu0 %1573
    %1575 = vrot.lane.b32.xlu0 %v1449, 16
    %v1576 = vpop.permute.xlu0 %1575
    %1577 = vrot.lane.b32.xlu0 %v1450, 16
    %v1578 = vpop.permute.xlu0 %1577
    %1595 = vst.msk [vmem:[%s70 - $0x1] sm:$0xfe] %vm914, %v1548
    %1596 = vst.msk [vmem:[%s70 + $0x7] sm:$0xfe] %vm914, %v1550
    %1597 = vst.msk [vmem:[%s70 + $0xf] sm:$0xfe] %vm914, %v1552
    %1598 = vst.msk [vmem:[%s70 + $0x17] sm:$0xfe] %vm914, %v1554
    %1599 = vst.msk [vmem:[%s70 + $0x1f] sm:$0xfe] %vm914, %v1556
    %1600 = vst.msk [vmem:[%s70 + $0x27] sm:$0xfe] %vm914, %v1558
    %1601 = vst.msk [vmem:[%s70 + $0x2f] sm:$0xfe] %vm914, %v1560
    %1602 = vst.msk [vmem:[%s70 + $0x37] sm:$0xfe] %vm914, %v1562
    %1603 = vst.msk [vmem:[%s70 + $0x4f] sm:$0xfe] %vm914, %v1564
    %1604 = vst.msk [vmem:[%s70 + $0x57] sm:$0xfe] %vm914, %v1566
    %1605 = vst.msk [vmem:[%s70 + $0x5f] sm:$0xfe] %vm914, %v1568
    %1606 = vst.msk [vmem:[%s70 + $0x67] sm:$0xfe] %vm914, %v1570
    %1607 = vst.msk [vmem:[%s70 + $0x6f] sm:$0xfe] %vm914, %v1572
    %1608 = vst.msk [vmem:[%s70 + $0x77] sm:$0xfe] %vm914, %v1574
    %1609 = vst.msk [vmem:[%s70 + $0x7f] sm:$0xfe] %vm914, %v1576
    %1610 = vst.msk [vmem:[%s70 + $0x87] sm:$0xfe] %vm914, %v1578
    %v1611 = vld [vmem:[#allocation2] sm:$0xff]
    %v1612 = vld [vmem:[#allocation2 + $0x8] sm:$0xff]
    %v1613 = vld [vmem:[#allocation2 + $0x10] sm:$0xff]
    %v1614 = vld [vmem:[#allocation2 + $0x18] sm:$0xff]
    %v1615 = vld [vmem:[#allocation2 + $0x20] sm:$0xff]
    %v1616 = vld [vmem:[#allocation2 + $0x28] sm:$0xff]
    %v1617 = vld [vmem:[#allocation2 + $0x30] sm:$0xff]
    %v1618 = vld [vmem:[#allocation2 + $0x38] sm:$0xff]
    %v1619 = vld [vmem:[#allocation2 + $0x50] sm:$0xff]
    %v1620 = vld [vmem:[#allocation2 + $0x58] sm:$0xff]
    %v1621 = vld [vmem:[#allocation2 + $0x60] sm:$0xff]
    %v1622 = vld [vmem:[#allocation2 + $0x68] sm:$0xff]
    %v1623 = vld [vmem:[#allocation2 + $0x70] sm:$0xff]
    %v1624 = vld [vmem:[#allocation2 + $0x78] sm:$0xff]
    %v1625 = vld [vmem:[#allocation2 + $0x80] sm:$0xff]
    %v1626 = vld [vmem:[#allocation2 + $0x88] sm:$0xff]
    %v1627 = vpack.c.bf16 %v1612, %v1611
    %v1628 = vpack.c.bf16 %v1614, %v1613
    %v1629 = vpack.c.bf16 %v1616, %v1615
    %v1630 = vpack.c.bf16 %v1618, %v1617
    %v1631 = vpack.c.bf16 %v1620, %v1619
    %v1632 = vpack.c.bf16 %v1622, %v1621
    %v1633 = vpack.c.bf16 %v1624, %v1623
    %v1634 = vpack.c.bf16 %v1626, %v1625
    %v1635 = vld [vmem:[%s9] sm:$0xf]
    %v1636 = vld [vmem:[%s9 + $0x4] sm:$0xf]
    %v1637 = vld [vmem:[%s9 + $0x8] sm:$0xf]
    %v1638 = vld [vmem:[%s70] sm:$0xff]
    %v1639 = vld [vmem:[%s70 + $0x8] sm:$0xff]
    %v1640 = vld [vmem:[%s70 + $0x10] sm:$0xff]
    %v1641 = vld [vmem:[%s70 + $0x18] sm:$0xff]
    %v1642 = vld [vmem:[%s70 + $0x20] sm:$0xff]
    %v1643 = vld [vmem:[%s70 + $0x28] sm:$0xff]
    %v1644 = vld [vmem:[%s70 + $0x30] sm:$0xff]
    %v1645 = vld [vmem:[%s70 + $0x38] sm:$0xff]
    %v1646 = vld [vmem:[%s70 + $0x50] sm:$0xff]
    %v1647 = vld [vmem:[%s70 + $0x58] sm:$0xff]
    %v1648 = vld [vmem:[%s70 + $0x60] sm:$0xff]
    %v1649 = vld [vmem:[%s70 + $0x68] sm:$0xff]
    %v1650 = vld [vmem:[%s70 + $0x70] sm:$0xff]
    %v1651 = vld [vmem:[%s70 + $0x78] sm:$0xff]
    %v1652 = vld [vmem:[%s70 + $0x80] sm:$0xff]
    %v1653 = vld [vmem:[%s70 + $0x88] sm:$0xff]
    %v1654 = vpack.c.bf16 %v1639, %v1638
    %v1655 = vpack.c.bf16 %v1641, %v1640
    %v1656 = vpack.c.bf16 %v1643, %v1642
    %v1657 = vpack.c.bf16 %v1645, %v1644
    %v1658 = vpack.c.bf16 %v1647, %v1646
    %v1659 = vpack.c.bf16 %v1649, %v1648
    %v1660 = vpack.c.bf16 %v1651, %v1650
    %v1661 = vpack.c.bf16 %v1653, %v1652
    %s1662 = scalar_lea.vmem %s9, 12
    %v1663 = vld [vmem:[%s1662] sm:$0xf]
    %v1664 = vld [vmem:[%s1662 + $0x4] sm:$0xf]
    %v1665 = vld [vmem:[%s1662 + $0x8] sm:$0xf]
    %v1669 = vunpack.c.l.b16 %v1663
    %v1670 = vunpack.c.l.b16 %v1664
    %v1671 = vunpack.c.l.b16 %v1665
    %v1672 = vpack.c.b16 %v1670, %v1669
    %v1673 = vpack.c.b16 %v1671, %v1671
    %v1676 = vsel %vm64, %v1654, 0
    %v1679 = vsel %vm64, %v1655, 0
    %v1682 = vsel %vm64, %v1656, 0
    %v1685 = vsel %vm64, %v1657, 0
    %v1688 = vsel %vm64, %v1658, 0
    %v1691 = vsel %vm64, %v1659, 0
    %v1694 = vsel %vm64, %v1660, 0
    %v1697 = vsel %vm64, %v1661, 0
    %v1700 = vsel %vm1019, %v1673, 0
    %1702 = vmatpush.bf16.msra.mxu0 0
    %1703 = vmatpush.bf16.msra.mxu0 0
    %1704 = vmatpush.bf16.msra.mxu0 0
    %1705 = vmatpush.bf16.msra.mxu0 0
    %1706 = vmatpush.bf16.msra.mxu0 0
    %1707 = vmatpush.bf16.msra.mxu0 0
    %1708 = vmatpush.bf16.msra.mxu0 %v1700
    %1709 = vmatpush.bf16.msra.mxu0 %v1672
    %1710 = vmatmul.bf16.gmra.mxu0 %v1676
    %v1711 = vpop.f32.mrf.mxu0
    %v1712 = vadd.f32 0.0, %v1711
    %v1713 = vpop.f32.mrf.mxu0
    %v1714 = vadd.f32 0.0, %v1713
    %1715 = vmatmul.bf16.gmra.mxu0 %v1679
    %v1716 = vpop.f32.mrf.mxu0
    %v1717 = vadd.f32 0.0, %v1716
    %v1718 = vpop.f32.mrf.mxu0
    %v1719 = vadd.f32 0.0, %v1718
    %1720 = vmatmul.bf16.gmra.mxu0 %v1682
    %v1721 = vpop.f32.mrf.mxu0
    %v1722 = vadd.f32 0.0, %v1721
    %v1723 = vpop.f32.mrf.mxu0
    %v1724 = vadd.f32 0.0, %v1723
    %1725 = vmatmul.bf16.gmra.mxu0 %v1685
    %v1726 = vpop.f32.mrf.mxu0
    %v1727 = vadd.f32 0.0, %v1726
    %v1728 = vpop.f32.mrf.mxu0
    %v1729 = vadd.f32 0.0, %v1728
    %1730 = vmatmul.bf16.gmra.mxu0 %v1688
    %v1731 = vpop.f32.mrf.mxu0
    %v1732 = vadd.f32 0.0, %v1731
    %v1733 = vpop.f32.mrf.mxu0
    %v1734 = vadd.f32 0.0, %v1733
    %1735 = vmatmul.bf16.gmra.mxu0 %v1691
    %v1736 = vpop.f32.mrf.mxu0
    %v1737 = vadd.f32 0.0, %v1736
    %v1738 = vpop.f32.mrf.mxu0
    %v1739 = vadd.f32 0.0, %v1738
    %1740 = vmatmul.bf16.gmra.mxu0 %v1694
    %v1741 = vpop.f32.mrf.mxu0
    %v1742 = vadd.f32 0.0, %v1741
    %v1743 = vpop.f32.mrf.mxu0
    %v1744 = vadd.f32 0.0, %v1743
    %1745 = vmatmul.bf16.gmra.mxu0 %v1697
    %v1746 = vpop.f32.mrf.mxu0
    %v1747 = vadd.f32 0.0, %v1746
    %v1748 = vpop.f32.mrf.mxu0
    %v1749 = vadd.f32 0.0, %v1748
    %1750 = vdwg.mxu0
    %v1754 = vunpack.c.l.b16 %v1635
    %v1755 = vunpack.c.l.b16 %v1636
    %v1756 = vunpack.c.l.b16 %v1637
    %v1757 = vpack.c.b16 %v1755, %v1754
    %v1758 = vpack.c.b16 %v1756, %v1756
    %v1761 = vsel %vm64, %v1627, 0
    %v1764 = vsel %vm64, %v1628, 0
    %v1767 = vsel %vm64, %v1629, 0
    %v1770 = vsel %vm64, %v1630, 0
    %v1773 = vsel %vm64, %v1631, 0
    %v1776 = vsel %vm64, %v1632, 0
    %v1779 = vsel %vm64, %v1633, 0
    %v1782 = vsel %vm64, %v1634, 0
    %v1785 = vsel %vm1019, %v1758, 0
    %1787 = vmatpush.bf16.msra.mxu0 0
    %1788 = vmatpush.bf16.msra.mxu0 0
    %1789 = vmatpush.bf16.msra.mxu0 0
    %1790 = vmatpush.bf16.msra.mxu0 0
    %1791 = vmatpush.bf16.msra.mxu0 0
    %1792 = vmatpush.bf16.msra.mxu0 0
    %1793 = vmatpush.bf16.msra.mxu0 %v1785
    %1794 = vmatpush.bf16.msra.mxu0 %v1757
    %1795 = vmatmul.bf16.gmra.mxu0 %v1761
    %v1796 = vpop.f32.mrf.mxu0
    %v1797 = vadd.f32 %v1712, %v1796
    %v1798 = vpop.f32.mrf.mxu0
    %v1799 = vadd.f32 %v1714, %v1798
    %1800 = vmatmul.bf16.gmra.mxu0 %v1764
    %v1801 = vpop.f32.mrf.mxu0
    %v1802 = vadd.f32 %v1717, %v1801
    %v1803 = vpop.f32.mrf.mxu0
    %v1804 = vadd.f32 %v1719, %v1803
    %1805 = vmatmul.bf16.gmra.mxu0 %v1767
    %v1806 = vpop.f32.mrf.mxu0
    %v1807 = vadd.f32 %v1722, %v1806
    %v1808 = vpop.f32.mrf.mxu0
    %v1809 = vadd.f32 %v1724, %v1808
    %1810 = vmatmul.bf16.gmra.mxu0 %v1770
    %v1811 = vpop.f32.mrf.mxu0
    %v1812 = vadd.f32 %v1727, %v1811
    %v1813 = vpop.f32.mrf.mxu0
    %v1814 = vadd.f32 %v1729, %v1813
    %1815 = vmatmul.bf16.gmra.mxu0 %v1773
    %v1816 = vpop.f32.mrf.mxu0
    %v1817 = vadd.f32 %v1732, %v1816
    %v1818 = vpop.f32.mrf.mxu0
    %v1819 = vadd.f32 %v1734, %v1818
    %1820 = vmatmul.bf16.gmra.mxu0 %v1776
    %v1821 = vpop.f32.mrf.mxu0
    %v1822 = vadd.f32 %v1737, %v1821
    %v1823 = vpop.f32.mrf.mxu0
    %v1824 = vadd.f32 %v1739, %v1823
    %1825 = vmatmul.bf16.gmra.mxu0 %v1779
    %v1826 = vpop.f32.mrf.mxu0
    %v1827 = vadd.f32 %v1742, %v1826
    %v1828 = vpop.f32.mrf.mxu0
    %v1829 = vadd.f32 %v1744, %v1828
    %1830 = vmatmul.bf16.gmra.mxu0 %v1782
    %v1831 = vpop.f32.mrf.mxu0
    %v1832 = vadd.f32 %v1747, %v1831
    %v1833 = vpop.f32.mrf.mxu0
    %v1834 = vadd.f32 %v1749, %v1833
    %1835 = vdwg.mxu0
    %v1836 = vld [vmem:[%s1157] sm:$0xff]
    %v1837 = vld [vmem:[%s1157 + $0x8] sm:$0xff]
    %v1838 = vld [vmem:[%s1157 + $0x10] sm:$0xff]
    %v1839 = vld [vmem:[%s1157 + $0x18] sm:$0xff]
    %v1840 = vld [vmem:[%s1157 + $0x20] sm:$0xff]
    %v1841 = vld [vmem:[%s1157 + $0x28] sm:$0xff]
    %v1842 = vld [vmem:[%s1157 + $0x30] sm:$0xff]
    %v1843 = vld [vmem:[%s1157 + $0x38] sm:$0xff]
    %v1844 = vld [vmem:[%s1157 + $0x50] sm:$0xff]
    %v1845 = vld [vmem:[%s1157 + $0x58] sm:$0xff]
    %v1846 = vld [vmem:[%s1157 + $0x60] sm:$0xff]
    %v1847 = vld [vmem:[%s1157 + $0x68] sm:$0xff]
    %v1848 = vld [vmem:[%s1157 + $0x70] sm:$0xff]
    %v1849 = vld [vmem:[%s1157 + $0x78] sm:$0xff]
    %v1850 = vld [vmem:[%s1157 + $0x80] sm:$0xff]
    %v1851 = vld [vmem:[%s1157 + $0x88] sm:$0xff]
    %v1852 = vpack.c.bf16 %v1837, %v1836
    %v1853 = vpack.c.bf16 %v1839, %v1838
    %v1854 = vpack.c.bf16 %v1841, %v1840
    %v1855 = vpack.c.bf16 %v1843, %v1842
    %v1856 = vpack.c.bf16 %v1845, %v1844
    %v1857 = vpack.c.bf16 %v1847, %v1846
    %v1858 = vpack.c.bf16 %v1849, %v1848
    %v1859 = vpack.c.bf16 %v1851, %v1850
    %s1860 = scalar_lea.vmem %s9, 24
    %v1861 = vld [vmem:[%s1860] sm:$0xf]
    %v1862 = vld [vmem:[%s1860 + $0x4] sm:$0xf]
    %v1863 = vld [vmem:[%s1860 + $0x8] sm:$0xf]
    %v1867 = vunpack.c.l.b16 %v1861
    %v1868 = vunpack.c.l.b16 %v1862
    %v1869 = vunpack.c.l.b16 %v1863
    %v1870 = vpack.c.b16 %v1868, %v1867
    %v1871 = vpack.c.b16 %v1869, %v1869
    %v1874 = vsel %vm64, %v1852, 0
    %v1877 = vsel %vm64, %v1853, 0
    %v1880 = vsel %vm64, %v1854, 0
    %v1883 = vsel %vm64, %v1855, 0
    %v1886 = vsel %vm64, %v1856, 0
    %v1889 = vsel %vm64, %v1857, 0
    %v1892 = vsel %vm64, %v1858, 0
    %v1895 = vsel %vm64, %v1859, 0
    %v1898 = vsel %vm1019, %v1871, 0
    %1900 = vmatpush.bf16.msra.mxu0 0
    %1901 = vmatpush.bf16.msra.mxu0 0
    %1902 = vmatpush.bf16.msra.mxu0 0
    %1903 = vmatpush.bf16.msra.mxu0 0
    %1904 = vmatpush.bf16.msra.mxu0 0
    %1905 = vmatpush.bf16.msra.mxu0 0
    %1906 = vmatpush.bf16.msra.mxu0 %v1898
    %1907 = vmatpush.bf16.msra.mxu0 %v1870
    %1908 = vmatmul.bf16.gmra.mxu0 %v1874
    %v1909 = vpop.f32.mrf.mxu0
    %v1910 = vadd.f32 0.0, %v1909
    %v1911 = vpop.f32.mrf.mxu0
    %v1912 = vadd.f32 0.0, %v1911
    %1913 = vmatmul.bf16.gmra.mxu0 %v1877
    %v1914 = vpop.f32.mrf.mxu0
    %v1915 = vadd.f32 0.0, %v1914
    %v1916 = vpop.f32.mrf.mxu0
    %v1917 = vadd.f32 0.0, %v1916
    %1918 = vmatmul.bf16.gmra.mxu0 %v1880
    %v1919 = vpop.f32.mrf.mxu0
    %v1920 = vadd.f32 0.0, %v1919
    %v1921 = vpop.f32.mrf.mxu0
    %v1922 = vadd.f32 0.0, %v1921
    %1923 = vmatmul.bf16.gmra.mxu0 %v1883
    %v1924 = vpop.f32.mrf.mxu0
    %v1925 = vadd.f32 0.0, %v1924
    %v1926 = vpop.f32.mrf.mxu0
    %v1927 = vadd.f32 0.0, %v1926
    %1928 = vmatmul.bf16.gmra.mxu0 %v1886
    %v1929 = vpop.f32.mrf.mxu0
    %v1930 = vadd.f32 0.0, %v1929
    %v1931 = vpop.f32.mrf.mxu0
    %v1932 = vadd.f32 0.0, %v1931
    %1933 = vmatmul.bf16.gmra.mxu0 %v1889
    %v1934 = vpop.f32.mrf.mxu0
    %v1935 = vadd.f32 0.0, %v1934
    %v1936 = vpop.f32.mrf.mxu0
    %v1937 = vadd.f32 0.0, %v1936
    %1938 = vmatmul.bf16.gmra.mxu0 %v1892
    %v1939 = vpop.f32.mrf.mxu0
    %v1940 = vadd.f32 0.0, %v1939
    %v1941 = vpop.f32.mrf.mxu0
    %v1942 = vadd.f32 0.0, %v1941
    %1943 = vmatmul.bf16.gmra.mxu0 %v1895
    %v1944 = vpop.f32.mrf.mxu0
    %v1945 = vadd.f32 0.0, %v1944
    %v1946 = vpop.f32.mrf.mxu0
    %v1947 = vadd.f32 0.0, %v1946
    %1948 = vdwg.mxu0
    %v1949 = vadd.f32 %v1797, %v1910
    %v1950 = vadd.f32 %v1799, %v1912
    %v1951 = vadd.f32 %v1802, %v1915
    %v1952 = vadd.f32 %v1804, %v1917
    %v1953 = vadd.f32 %v1807, %v1920
    %v1954 = vadd.f32 %v1809, %v1922
    %v1955 = vadd.f32 %v1812, %v1925
    %v1956 = vadd.f32 %v1814, %v1927
    %v1957 = vadd.f32 %v1817, %v1930
    %v1958 = vadd.f32 %v1819, %v1932
    %v1959 = vadd.f32 %v1822, %v1935
    %v1960 = vadd.f32 %v1824, %v1937
    %v1961 = vadd.f32 %v1827, %v1940
    %v1962 = vadd.f32 %v1829, %v1942
    %v1963 = vadd.f32 %v1832, %v1945
    %v1964 = vadd.f32 %v1834, %v1947
    %v1965 = vld [vmem:[%s10] sm:$0x1]
    %v1967 = vperm.slane %v1965, 0
    %v1969 = vadd.f32 %v1949, %v1967
    %v1970 = vadd.f32 %v1950, %v1967
    %v1971 = vadd.f32 %v1951, %v1967
    %v1972 = vadd.f32 %v1952, %v1967
    %v1973 = vadd.f32 %v1953, %v1967
    %v1974 = vadd.f32 %v1954, %v1967
    %v1975 = vadd.f32 %v1955, %v1967
    %v1976 = vadd.f32 %v1956, %v1967
    %v1977 = vadd.f32 %v1957, %v1967
    %v1978 = vadd.f32 %v1958, %v1967
    %v1979 = vadd.f32 %v1959, %v1967
    %v1980 = vadd.f32 %v1960, %v1967
    %v1981 = vadd.f32 %v1961, %v1967
    %v1982 = vadd.f32 %v1962, %v1967
    %v1983 = vadd.f32 %v1963, %v1967
    %v1984 = vadd.f32 %v1964, %v1967
    %v1985 = vmul.f32 %v1969, 0.5
    %v1986 = vmul.f32 %v1970, 0.5
    %v1987 = vmul.f32 %v1971, 0.5
    %v1988 = vmul.f32 %v1972, 0.5
    %v1989 = vmul.f32 %v1973, 0.5
    %v1990 = vmul.f32 %v1974, 0.5
    %v1991 = vmul.f32 %v1975, 0.5
    %v1992 = vmul.f32 %v1976, 0.5
    %v1993 = vmul.f32 %v1977, 0.5
    %v1994 = vmul.f32 %v1978, 0.5
    %v1995 = vmul.f32 %v1979, 0.5
    %v1996 = vmul.f32 %v1980, 0.5
    %v1997 = vmul.f32 %v1981, 0.5
    %v1998 = vmul.f32 %v1982, 0.5
    %v1999 = vmul.f32 %v1983, 0.5
    %v2000 = vmul.f32 %v1984, 0.5
    %v2001 = vmul.f32 %v1969, 0.044715
    %v2002 = vmul.f32 %v1970, 0.044715
    %v2003 = vmul.f32 %v1971, 0.044715
    %v2004 = vmul.f32 %v1972, 0.044715
    %v2005 = vmul.f32 %v1973, 0.044715
    %v2006 = vmul.f32 %v1974, 0.044715
    %v2007 = vmul.f32 %v1975, 0.044715
    %v2008 = vmul.f32 %v1976, 0.044715
    %v2009 = vmul.f32 %v1977, 0.044715
    %v2010 = vmul.f32 %v1978, 0.044715
    %v2011 = vmul.f32 %v1979, 0.044715
    %v2012 = vmul.f32 %v1980, 0.044715
    %v2013 = vmul.f32 %v1981, 0.044715
    %v2014 = vmul.f32 %v1982, 0.044715
    %v2015 = vmul.f32 %v1983, 0.044715
    %v2016 = vmul.f32 %v1984, 0.044715
    %v2017 = vmul.f32 %v2001, %v1969
    %v2018 = vmul.f32 %v2002, %v1970
    %v2019 = vmul.f32 %v2003, %v1971
    %v2020 = vmul.f32 %v2004, %v1972
    %v2021 = vmul.f32 %v2005, %v1973
    %v2022 = vmul.f32 %v2006, %v1974
    %v2023 = vmul.f32 %v2007, %v1975
    %v2024 = vmul.f32 %v2008, %v1976
    %v2025 = vmul.f32 %v2009, %v1977
    %v2026 = vmul.f32 %v2010, %v1978
    %v2027 = vmul.f32 %v2011, %v1979
    %v2028 = vmul.f32 %v2012, %v1980
    %v2029 = vmul.f32 %v2013, %v1981
    %v2030 = vmul.f32 %v2014, %v1982
    %v2031 = vmul.f32 %v2015, %v1983
    %v2032 = vmul.f32 %v2016, %v1984
    %v2033 = vmul.f32 %v2017, %v1969
    %v2034 = vmul.f32 %v2018, %v1970
    %v2035 = vmul.f32 %v2019, %v1971
    %v2036 = vmul.f32 %v2020, %v1972
    %v2037 = vmul.f32 %v2021, %v1973
    %v2038 = vmul.f32 %v2022, %v1974
    %v2039 = vmul.f32 %v2023, %v1975
    %v2040 = vmul.f32 %v2024, %v1976
    %v2041 = vmul.f32 %v2025, %v1977
    %v2042 = vmul.f32 %v2026, %v1978
    %v2043 = vmul.f32 %v2027, %v1979
    %v2044 = vmul.f32 %v2028, %v1980
    %v2045 = vmul.f32 %v2029, %v1981
    %v2046 = vmul.f32 %v2030, %v1982
    %v2047 = vmul.f32 %v2031, %v1983
    %v2048 = vmul.f32 %v2032, %v1984
    %v2049 = vadd.f32 %v1969, %v2033
    %v2050 = vadd.f32 %v1970, %v2034
    %v2051 = vadd.f32 %v1971, %v2035
    %v2052 = vadd.f32 %v1972, %v2036
    %v2053 = vadd.f32 %v1973, %v2037
    %v2054 = vadd.f32 %v1974, %v2038
    %v2055 = vadd.f32 %v1975, %v2039
    %v2056 = vadd.f32 %v1976, %v2040
    %v2057 = vadd.f32 %v1977, %v2041
    %v2058 = vadd.f32 %v1978, %v2042
    %v2059 = vadd.f32 %v1979, %v2043
    %v2060 = vadd.f32 %v1980, %v2044
    %v2061 = vadd.f32 %v1981, %v2045
    %v2062 = vadd.f32 %v1982, %v2046
    %v2063 = vadd.f32 %v1983, %v2047
    %v2064 = vadd.f32 %v1984, %v2048
    %v2065 = vmul.f32 %v2049, 0.7978846
    %v2066 = vmul.f32 %v2050, 0.7978846
    %v2067 = vmul.f32 %v2051, 0.7978846
    %v2068 = vmul.f32 %v2052, 0.7978846
    %v2069 = vmul.f32 %v2053, 0.7978846
    %v2070 = vmul.f32 %v2054, 0.7978846
    %v2071 = vmul.f32 %v2055, 0.7978846
    %v2072 = vmul.f32 %v2056, 0.7978846
    %v2073 = vmul.f32 %v2057, 0.7978846
    %v2074 = vmul.f32 %v2058, 0.7978846
    %v2075 = vmul.f32 %v2059, 0.7978846
    %v2076 = vmul.f32 %v2060, 0.7978846
    %v2077 = vmul.f32 %v2061, 0.7978846
    %v2078 = vmul.f32 %v2062, 0.7978846
    %v2079 = vmul.f32 %v2063, 0.7978846
    %v2080 = vmul.f32 %v2064, 0.7978846
    %v2081 = vtanh.pop %v2065
    %v2082 = vtanh.pop %v2066
    %v2083 = vtanh.pop %v2067
    %v2084 = vtanh.pop %v2068
    %v2085 = vtanh.pop %v2069
    %v2086 = vtanh.pop %v2070
    %v2087 = vtanh.pop %v2071
    %v2088 = vtanh.pop %v2072
    %v2089 = vtanh.pop %v2073
    %v2090 = vtanh.pop %v2074
    %v2091 = vtanh.pop %v2075
    %v2092 = vtanh.pop %v2076
    %v2093 = vtanh.pop %v2077
    %v2094 = vtanh.pop %v2078
    %v2095 = vtanh.pop %v2079
    %v2096 = vtanh.pop %v2080
    %v2097 = vadd.f32 %v2081, 1.0
    %v2098 = vadd.f32 %v2082, 1.0
    %v2099 = vadd.f32 %v2083, 1.0
    %v2100 = vadd.f32 %v2084, 1.0
    %v2101 = vadd.f32 %v2085, 1.0
    %v2102 = vadd.f32 %v2086, 1.0
    %v2103 = vadd.f32 %v2087, 1.0
    %v2104 = vadd.f32 %v2088, 1.0
    %v2105 = vadd.f32 %v2089, 1.0
    %v2106 = vadd.f32 %v2090, 1.0
    %v2107 = vadd.f32 %v2091, 1.0
    %v2108 = vadd.f32 %v2092, 1.0
    %v2109 = vadd.f32 %v2093, 1.0
    %v2110 = vadd.f32 %v2094, 1.0
    %v2111 = vadd.f32 %v2095, 1.0
    %v2112 = vadd.f32 %v2096, 1.0
    %v2113 = vmul.f32 %v1985, %v2097
    %v2114 = vmul.f32 %v1986, %v2098
    %v2115 = vmul.f32 %v1987, %v2099
    %v2116 = vmul.f32 %v1988, %v2100
    %v2117 = vmul.f32 %v1989, %v2101
    %v2118 = vmul.f32 %v1990, %v2102
    %v2119 = vmul.f32 %v1991, %v2103
    %v2120 = vmul.f32 %v1992, %v2104
    %v2121 = vmul.f32 %v1993, %v2105
    %v2122 = vmul.f32 %v1994, %v2106
    %v2123 = vmul.f32 %v1995, %v2107
    %v2124 = vmul.f32 %v1996, %v2108
    %v2125 = vmul.f32 %v1997, %v2109
    %v2126 = vmul.f32 %v1998, %v2110
    %v2127 = vmul.f32 %v1999, %v2111
    %v2128 = vmul.f32 %v2000, %v2112
    %v2129 = vpack.c.bf16 %v2114, %v2113
    %v2130 = vpack.c.bf16 %v2116, %v2115
    %v2131 = vpack.c.bf16 %v2118, %v2117
    %v2132 = vpack.c.bf16 %v2120, %v2119
    %v2133 = vpack.c.bf16 %v2122, %v2121
    %v2134 = vpack.c.bf16 %v2124, %v2123
    %v2135 = vpack.c.bf16 %v2126, %v2125
    %v2136 = vpack.c.bf16 %v2128, %v2127
    %v2137 = vld [vmem:[%s11] sm:$0xf]
    %vm2138 = vcmask 64512
    %v2140 = vsel %vm2138, %v2129, 0
    %v2143 = vsel %vm2138, %v2130, 0
    %v2146 = vsel %vm2138, %v2131, 0
    %v2149 = vsel %vm2138, %v2132, 0
    %v2152 = vsel %vm2138, %v2133, 0
    %v2155 = vsel %vm2138, %v2134, 0
    %v2158 = vsel %vm2138, %v2135, 0
    %v2161 = vsel %vm2138, %v2136, 0
    %v2164 = vsel %vm1019, %v2137, 0
    %2166 = vmatpush.bf16.msra.mxu0 0
    %2167 = vmatpush.bf16.msra.mxu0 0
    %2168 = vmatpush.bf16.msra.mxu0 0
    %2169 = vmatpush.bf16.msra.mxu0 0
    %2170 = vmatpush.bf16.msra.mxu0 0
    %2171 = vmatpush.bf16.msra.mxu0 0
    %2172 = vmatpush.bf16.msra.mxu0 0
    %2173 = vmatpush.bf16.msra.mxu0 %v2164
    %2174 = vmatmul.bf16.gmra.mxu0 %v2140
    %v2175 = vpop.f32.mrf.mxu0
    %v2176 = vadd.f32 0.0, %v2175
    %v2177 = vpop.f32.mrf.mxu0
    %v2178 = vadd.f32 0.0, %v2177
    %2179 = vmatmul.bf16.gmra.mxu0 %v2143
    %v2180 = vpop.f32.mrf.mxu0
    %v2181 = vadd.f32 0.0, %v2180
    %v2182 = vpop.f32.mrf.mxu0
    %v2183 = vadd.f32 0.0, %v2182
    %2184 = vmatmul.bf16.gmra.mxu0 %v2146
    %v2185 = vpop.f32.mrf.mxu0
    %v2186 = vadd.f32 0.0, %v2185
    %v2187 = vpop.f32.mrf.mxu0
    %v2188 = vadd.f32 0.0, %v2187
    %2189 = vmatmul.bf16.gmra.mxu0 %v2149
    %v2190 = vpop.f32.mrf.mxu0
    %v2191 = vadd.f32 0.0, %v2190
    %v2192 = vpop.f32.mrf.mxu0
    %v2193 = vadd.f32 0.0, %v2192
    %2194 = vmatmul.bf16.gmra.mxu0 %v2152
    %v2195 = vpop.f32.mrf.mxu0
    %v2196 = vadd.f32 0.0, %v2195
    %v2197 = vpop.f32.mrf.mxu0
    %v2198 = vadd.f32 0.0, %v2197
    %2199 = vmatmul.bf16.gmra.mxu0 %v2155
    %v2200 = vpop.f32.mrf.mxu0
    %v2201 = vadd.f32 0.0, %v2200
    %v2202 = vpop.f32.mrf.mxu0
    %v2203 = vadd.f32 0.0, %v2202
    %2204 = vmatmul.bf16.gmra.mxu0 %v2158
    %v2205 = vpop.f32.mrf.mxu0
    %v2206 = vadd.f32 0.0, %v2205
    %v2207 = vpop.f32.mrf.mxu0
    %v2208 = vadd.f32 0.0, %v2207
    %2209 = vmatmul.bf16.gmra.mxu0 %v2161
    %v2210 = vpop.f32.mrf.mxu0
    %v2211 = vadd.f32 0.0, %v2210
    %v2212 = vpop.f32.mrf.mxu0
    %v2213 = vadd.f32 0.0, %v2212
    %2214 = vdwg.mxu0
    %v2215 = vld [vmem:[%s12] sm:$0x1]
    %v2217 = vperm.slane %v2215, 0
    %v2219 = vadd.f32 %v2176, %v2217
    %v2220 = vadd.f32 %v2178, %v2217
    %v2221 = vadd.f32 %v2181, %v2217
    %v2222 = vadd.f32 %v2183, %v2217
    %v2223 = vadd.f32 %v2186, %v2217
    %v2224 = vadd.f32 %v2188, %v2217
    %v2225 = vadd.f32 %v2191, %v2217
    %v2226 = vadd.f32 %v2193, %v2217
    %v2227 = vadd.f32 %v2196, %v2217
    %v2228 = vadd.f32 %v2198, %v2217
    %v2229 = vadd.f32 %v2201, %v2217
    %v2230 = vadd.f32 %v2203, %v2217
    %v2231 = vadd.f32 %v2206, %v2217
    %v2232 = vadd.f32 %v2208, %v2217
    %v2233 = vadd.f32 %v2211, %v2217
    %v2234 = vadd.f32 %v2213, %v2217
    %vm2235 = vcmask 31744
    %2236 = vst.msk [vmem:[%s13] sm:$0xff] %vm2235, %v2219
    %2237 = vst.msk [vmem:[%s13 + $0x8] sm:$0xff] %vm2235, %v2220
    %2238 = vst.msk [vmem:[%s13 + $0x10] sm:$0xff] %vm2235, %v2221
    %2239 = vst.msk [vmem:[%s13 + $0x18] sm:$0xff] %vm2235, %v2222
    %2240 = vst.msk [vmem:[%s13 + $0x20] sm:$0xff] %vm2235, %v2223
    %2241 = vst.msk [vmem:[%s13 + $0x28] sm:$0xff] %vm2235, %v2224
    %2242 = vst.msk [vmem:[%s13 + $0x30] sm:$0xff] %vm2235, %v2225
    %2243 = vst.msk [vmem:[%s13 + $0x38] sm:$0xff] %vm2235, %v2226
    %2244 = vst.msk [vmem:[%s13 + $0x40] sm:$0xff] %vm2235, %v2227
    %2245 = vst.msk [vmem:[%s13 + $0x48] sm:$0xff] %vm2235, %v2228
    %2246 = vst.msk [vmem:[%s13 + $0x50] sm:$0xff] %vm2235, %v2229
    %2247 = vst.msk [vmem:[%s13 + $0x58] sm:$0xff] %vm2235, %v2230
    %2248 = vst.msk [vmem:[%s13 + $0x60] sm:$0xff] %vm2235, %v2231
    %2249 = vst.msk [vmem:[%s13 + $0x68] sm:$0xff] %vm2235, %v2232
    %2250 = vst.msk [vmem:[%s13 + $0x70] sm:$0xff] %vm2235, %v2233
    %2251 = vst.msk [vmem:[%s13 + $0x78] sm:$0xff] %vm2235, %v2234
    %v2252 = vpack.c.bf16 %v2220, %v2219
    %v2253 = vpack.c.bf16 %v2222, %v2221
    %v2254 = vpack.c.bf16 %v2224, %v2223
    %v2255 = vpack.c.bf16 %v2226, %v2225
    %v2256 = vpack.c.bf16 %v2228, %v2227
    %v2257 = vpack.c.bf16 %v2230, %v2229
    %v2258 = vpack.c.bf16 %v2232, %v2231
    %v2259 = vpack.c.bf16 %v2234, %v2233
    %v2260 = vld [vmem:[%s3] sm:$0x3]
    %v2262 = vsel %vm2235, %v2252, 0
    %v2265 = vsel %vm2235, %v2253, 0
    %v2268 = vsel %vm2235, %v2254, 0
    %v2271 = vsel %vm2235, %v2255, 0
    %v2274 = vsel %vm2235, %v2256, 0
    %v2277 = vsel %vm2235, %v2257, 0
    %v2280 = vsel %vm2235, %v2258, 0
    %v2283 = vsel %vm2235, %v2259, 0
    %vm2285 = vcmask 1041408
    %v2287 = vsel %vm2285, %v2260, 0
    %2289 = vmatpush.bf16.msra.mxu0 0
    %2290 = vmatpush.bf16.msra.mxu0 0
    %2291 = vmatpush.bf16.msra.mxu0 0
    %2292 = vmatpush.bf16.msra.mxu0 0
    %2293 = vmatpush.bf16.msra.mxu0 0
    %2294 = vmatpush.bf16.msra.mxu0 0
    %2295 = vmatpush.bf16.msra.mxu0 0
    %2296 = vmatpush.bf16.msra.mxu0 %v2287
    %2297 = vmatmul.bf16.gmra.mxu0 %v2262
    %v2298 = vpop.f32.mrf.mxu0
    %v2299 = vadd.f32 0.0, %v2298
    %v2300 = vpop.f32.mrf.mxu0
    %v2301 = vadd.f32 0.0, %v2300
    %2302 = vmatmul.bf16.gmra.mxu0 %v2265
    %v2303 = vpop.f32.mrf.mxu0
    %v2304 = vadd.f32 0.0, %v2303
    %v2305 = vpop.f32.mrf.mxu0
    %v2306 = vadd.f32 0.0, %v2305
    %2307 = vmatmul.bf16.gmra.mxu0 %v2268
    %v2308 = vpop.f32.mrf.mxu0
    %v2309 = vadd.f32 0.0, %v2308
    %v2310 = vpop.f32.mrf.mxu0
    %v2311 = vadd.f32 0.0, %v2310
    %2312 = vmatmul.bf16.gmra.mxu0 %v2271
    %v2313 = vpop.f32.mrf.mxu0
    %v2314 = vadd.f32 0.0, %v2313
    %v2315 = vpop.f32.mrf.mxu0
    %v2316 = vadd.f32 0.0, %v2315
    %2317 = vmatmul.bf16.gmra.mxu0 %v2274
    %v2318 = vpop.f32.mrf.mxu0
    %v2319 = vadd.f32 0.0, %v2318
    %v2320 = vpop.f32.mrf.mxu0
    %v2321 = vadd.f32 0.0, %v2320
    %2322 = vmatmul.bf16.gmra.mxu0 %v2277
    %v2323 = vpop.f32.mrf.mxu0
    %v2324 = vadd.f32 0.0, %v2323
    %v2325 = vpop.f32.mrf.mxu0
    %v2326 = vadd.f32 0.0, %v2325
    %2327 = vmatmul.bf16.gmra.mxu0 %v2280
    %v2328 = vpop.f32.mrf.mxu0
    %v2329 = vadd.f32 0.0, %v2328
    %v2330 = vpop.f32.mrf.mxu0
    %v2331 = vadd.f32 0.0, %v2330
    %2332 = vmatmul.bf16.gmra.mxu0 %v2283
    %v2333 = vpop.f32.mrf.mxu0
    %v2334 = vadd.f32 0.0, %v2333
    %v2335 = vpop.f32.mrf.mxu0
    %v2336 = vadd.f32 0.0, %v2335
    %2337 = vdwg.mxu0
    %v2338 = vld [vmem:[%s2] sm:$0xff]
    %v2339 = vld [vmem:[%s2 + $0x8] sm:$0xff]
    %v2340 = vld [vmem:[%s2 + $0x10] sm:$0xff]
    %v2341 = vld [vmem:[%s2 + $0x18] sm:$0xff]
    %v2342 = vld [vmem:[%s2 + $0x20] sm:$0xff]
    %v2343 = vld [vmem:[%s2 + $0x28] sm:$0xff]
    %v2344 = vld [vmem:[%s2 + $0x30] sm:$0xff]
    %v2345 = vld [vmem:[%s2 + $0x38] sm:$0xff]
    %v2346 = vld [vmem:[%s2 + $0x40] sm:$0xff]
    %v2347 = vld [vmem:[%s2 + $0x48] sm:$0xff]
    %v2348 = vld [vmem:[%s2 + $0x50] sm:$0xff]
    %v2349 = vld [vmem:[%s2 + $0x58] sm:$0xff]
    %v2350 = vld [vmem:[%s2 + $0x60] sm:$0xff]
    %v2351 = vld [vmem:[%s2 + $0x68] sm:$0xff]
    %v2352 = vld [vmem:[%s2 + $0x70] sm:$0xff]
    %v2353 = vld [vmem:[%s2 + $0x78] sm:$0xff]
    %v2354 = vpack.c.bf16 %v2339, %v2338
    %v2355 = vpack.c.bf16 %v2341, %v2340
    %v2356 = vpack.c.bf16 %v2343, %v2342
    %v2357 = vpack.c.bf16 %v2345, %v2344
    %v2358 = vpack.c.bf16 %v2347, %v2346
    %v2359 = vpack.c.bf16 %v2349, %v2348
    %v2360 = vpack.c.bf16 %v2351, %v2350
    %v2361 = vpack.c.bf16 %v2353, %v2352
    %v2363 = vsel %vm2235, %v2354, 0
    %v2366 = vsel %vm2235, %v2355, 0
    %v2369 = vsel %vm2235, %v2356, 0
    %v2372 = vsel %vm2235, %v2357, 0
    %v2375 = vsel %vm2235, %v2358, 0
    %v2378 = vsel %vm2235, %v2359, 0
    %v2381 = vsel %vm2235, %v2360, 0
    %v2384 = vsel %vm2235, %v2361, 0
    %2386 = vmatpush.bf16.msra.mxu0 0
    %2387 = vmatpush.bf16.msra.mxu0 0
    %2388 = vmatpush.bf16.msra.mxu0 0
    %2389 = vmatpush.bf16.msra.mxu0 0
    %2390 = vmatpush.bf16.msra.mxu0 0
    %2391 = vmatpush.bf16.msra.mxu0 0
    %2392 = vmatpush.bf16.msra.mxu0 0
    %2393 = vmatpush.bf16.msra.mxu0 %v2287
    %2394 = vmatmul.bf16.gmra.mxu0 %v2363
    %v2395 = vpop.f32.mrf.mxu0
    %v2396 = vadd.f32 0.0, %v2395
    %v2397 = vpop.f32.mrf.mxu0
    %v2398 = vadd.f32 0.0, %v2397
    %2399 = vmatmul.bf16.gmra.mxu0 %v2366
    %v2400 = vpop.f32.mrf.mxu0
    %v2401 = vadd.f32 0.0, %v2400
    %v2402 = vpop.f32.mrf.mxu0
    %v2403 = vadd.f32 0.0, %v2402
    %2404 = vmatmul.bf16.gmra.mxu0 %v2369
    %v2405 = vpop.f32.mrf.mxu0
    %v2406 = vadd.f32 0.0, %v2405
    %v2407 = vpop.f32.mrf.mxu0
    %v2408 = vadd.f32 0.0, %v2407
    %2409 = vmatmul.bf16.gmra.mxu0 %v2372
    %v2410 = vpop.f32.mrf.mxu0
    %v2411 = vadd.f32 0.0, %v2410
    %v2412 = vpop.f32.mrf.mxu0
    %v2413 = vadd.f32 0.0, %v2412
    %2414 = vmatmul.bf16.gmra.mxu0 %v2375
    %v2415 = vpop.f32.mrf.mxu0
    %v2416 = vadd.f32 0.0, %v2415
    %v2417 = vpop.f32.mrf.mxu0
    %v2418 = vadd.f32 0.0, %v2417
    %2419 = vmatmul.bf16.gmra.mxu0 %v2378
    %v2420 = vpop.f32.mrf.mxu0
    %v2421 = vadd.f32 0.0, %v2420
    %v2422 = vpop.f32.mrf.mxu0
    %v2423 = vadd.f32 0.0, %v2422
    %2424 = vmatmul.bf16.gmra.mxu0 %v2381
    %v2425 = vpop.f32.mrf.mxu0
    %v2426 = vadd.f32 0.0, %v2425
    %v2427 = vpop.f32.mrf.mxu0
    %v2428 = vadd.f32 0.0, %v2427
    %2429 = vmatmul.bf16.gmra.mxu0 %v2384
    %v2430 = vpop.f32.mrf.mxu0
    %v2431 = vadd.f32 0.0, %v2430
    %v2432 = vpop.f32.mrf.mxu0
    %v2433 = vadd.f32 0.0, %v2432
    %2434 = vdwg.mxu0
    %2435 = vxpose.xlu0.b32.start [1/16] %v2299, 128
    %2436 = vxpose.xlu0.b32.cont [2/16] %v2301, 128
    %2437 = vxpose.xlu0.b32.cont [3/16] %v2304, 128
    %2438 = vxpose.xlu0.b32.cont [4/16] %v2306, 128
    %2439 = vxpose.xlu0.b32.cont [5/16] %v2309, 128
    %2440 = vxpose.xlu0.b32.cont [6/16] %v2311, 128
    %2441 = vxpose.xlu0.b32.cont [7/16] %v2314, 128
    %2442 = vxpose.xlu0.b32.cont [8/16] %v2316, 128
    %2443 = vxpose.xlu0.b32.cont [9/16] 0.0, 128
    %2444 = vxpose.xlu0.b32.cont [10/16] 0.0, 128
    %2445 = vxpose.xlu0.b32.cont [11/16] 0.0, 128
    %2446 = vxpose.xlu0.b32.cont [12/16] 0.0, 128
    %2447 = vxpose.xlu0.b32.cont [13/16] 0.0, 128
    %2448 = vxpose.xlu0.b32.cont [14/16] 0.0, 128
    %2449 = vxpose.xlu0.b32.cont [15/16] 0.0, 128
    %2450 = vxpose.xlu0.b32.end [16/16] 0.0, 128
    %v2451 = vpop.trf.xlu0
    %v2452 = vpop.trf.xlu0
    %v2453 = vpop.trf.xlu0
    %v2454 = vpop.trf.xlu0
    %v2455 = vpop.trf.xlu0
    %v2456 = vpop.trf.xlu0
    %v2457 = vpop.trf.xlu0
    %v2458 = vpop.trf.xlu0
    %v2459 = vpop.trf.xlu0
    %v2460 = vpop.trf.xlu0
    %v2461 = vpop.trf.xlu0
    %v2462 = vpop.trf.xlu0
    %v2463 = vpop.trf.xlu0
    %v2464 = vpop.trf.xlu0
    %v2465 = vpop.trf.xlu0
    %v2466 = vpop.trf.xlu0
    %vm2467 = vcmask 523264
    %2468 = vst.msk [vmem:[%s14] sm:$0xff] %vm2467, %v2451
    %2469 = vst.msk [vmem:[%s14 + $0x8] sm:$0xff] %vm2467, %v2452
    %2470 = vst.msk [vmem:[%s14 + $0x10] sm:$0xff] %vm2467, %v2453
    %2471 = vst.msk [vmem:[%s14 + $0x18] sm:$0xff] %vm2467, %v2454
    %2472 = vst.msk [vmem:[%s14 + $0x20] sm:$0xff] %vm2467, %v2455
    %2473 = vst.msk [vmem:[%s14 + $0x28] sm:$0xff] %vm2467, %v2456
    %2474 = vst.msk [vmem:[%s14 + $0x30] sm:$0xff] %vm2467, %v2457
    %2475 = vst.msk [vmem:[%s14 + $0x38] sm:$0xff] %vm2467, %v2458
    %2476 = vst.msk [vmem:[%s14 + $0x40] sm:$0xff] %vm2467, %v2459
    %2477 = vst.msk [vmem:[%s14 + $0x48] sm:$0xff] %vm2467, %v2460
    %2478 = vst.msk [vmem:[%s14 + $0x50] sm:$0xff] %vm2467, %v2461
    %2479 = vst.msk [vmem:[%s14 + $0x58] sm:$0xff] %vm2467, %v2462
    %2480 = vst.msk [vmem:[%s14 + $0x60] sm:$0xff] %vm2467, %v2463
    %2481 = vst.msk [vmem:[%s14 + $0x68] sm:$0xff] %vm2467, %v2464
    %2482 = vst.msk [vmem:[%s14 + $0x70] sm:$0xff] %vm2467, %v2465
    %2483 = vst.msk [vmem:[%s14 + $0x78] sm:$0xff] %vm2467, %v2466
    %2484 = vxpose.xlu0.b32.start [1/16] %v2396, 128
    %2485 = vxpose.xlu0.b32.cont [2/16] %v2398, 128
    %2486 = vxpose.xlu0.b32.cont [3/16] %v2401, 128
    %2487 = vxpose.xlu0.b32.cont [4/16] %v2403, 128
    %2488 = vxpose.xlu0.b32.cont [5/16] %v2406, 128
    %2489 = vxpose.xlu0.b32.cont [6/16] %v2408, 128
    %2490 = vxpose.xlu0.b32.cont [7/16] %v2411, 128
    %2491 = vxpose.xlu0.b32.cont [8/16] %v2413, 128
    %2492 = vxpose.xlu0.b32.cont [9/16] 0.0, 128
    %2493 = vxpose.xlu0.b32.cont [10/16] 0.0, 128
    %2494 = vxpose.xlu0.b32.cont [11/16] 0.0, 128
    %2495 = vxpose.xlu0.b32.cont [12/16] 0.0, 128
    %2496 = vxpose.xlu0.b32.cont [13/16] 0.0, 128
    %2497 = vxpose.xlu0.b32.cont [14/16] 0.0, 128
    %2498 = vxpose.xlu0.b32.cont [15/16] 0.0, 128
    %2499 = vxpose.xlu0.b32.end [16/16] 0.0, 128
    %v2500 = vpop.trf.xlu0
    %v2501 = vpop.trf.xlu0
    %v2502 = vpop.trf.xlu0
    %v2503 = vpop.trf.xlu0
    %v2504 = vpop.trf.xlu0
    %v2505 = vpop.trf.xlu0
    %v2506 = vpop.trf.xlu0
    %v2507 = vpop.trf.xlu0
    %v2508 = vpop.trf.xlu0
    %v2509 = vpop.trf.xlu0
    %v2510 = vpop.trf.xlu0
    %v2511 = vpop.trf.xlu0
    %v2512 = vpop.trf.xlu0
    %v2513 = vpop.trf.xlu0
    %v2514 = vpop.trf.xlu0
    %v2515 = vpop.trf.xlu0
    %2516 = vst.msk [vmem:[%s15] sm:$0xff] %vm2467, %v2500
    %2517 = vst.msk [vmem:[%s15 + $0x8] sm:$0xff] %vm2467, %v2501
    %2518 = vst.msk [vmem:[%s15 + $0x10] sm:$0xff] %vm2467, %v2502
    %2519 = vst.msk [vmem:[%s15 + $0x18] sm:$0xff] %vm2467, %v2503
    %2520 = vst.msk [vmem:[%s15 + $0x20] sm:$0xff] %vm2467, %v2504
    %2521 = vst.msk [vmem:[%s15 + $0x28] sm:$0xff] %vm2467, %v2505
    %2522 = vst.msk [vmem:[%s15 + $0x30] sm:$0xff] %vm2467, %v2506
    %2523 = vst.msk [vmem:[%s15 + $0x38] sm:$0xff] %vm2467, %v2507
    %2524 = vst.msk [vmem:[%s15 + $0x40] sm:$0xff] %vm2467, %v2508
    %2525 = vst.msk [vmem:[%s15 + $0x48] sm:$0xff] %vm2467, %v2509
    %2526 = vst.msk [vmem:[%s15 + $0x50] sm:$0xff] %vm2467, %v2510
    %2527 = vst.msk [vmem:[%s15 + $0x58] sm:$0xff] %vm2467, %v2511
    %2528 = vst.msk [vmem:[%s15 + $0x60] sm:$0xff] %vm2467, %v2512
    %2529 = vst.msk [vmem:[%s15 + $0x68] sm:$0xff] %vm2467, %v2513
    %2530 = vst.msk [vmem:[%s15 + $0x70] sm:$0xff] %vm2467, %v2514
    %2531 = vst.msk [vmem:[%s15 + $0x78] sm:$0xff] %vm2467, %v2515
    %2532 = vxpose.xlu0.b32.start [1/16] %v2319, 128
    %2533 = vxpose.xlu0.b32.cont [2/16] %v2321, 128
    %2534 = vxpose.xlu0.b32.cont [3/16] %v2324, 128
    %2535 = vxpose.xlu0.b32.cont [4/16] %v2326, 128
    %2536 = vxpose.xlu0.b32.cont [5/16] %v2329, 128
    %2537 = vxpose.xlu0.b32.cont [6/16] %v2331, 128
    %2538 = vxpose.xlu0.b32.cont [7/16] %v2334, 128
    %2539 = vxpose.xlu0.b32.cont [8/16] %v2336, 128
    %2540 = vxpose.xlu0.b32.cont [9/16] 0.0, 128
    %2541 = vxpose.xlu0.b32.cont [10/16] 0.0, 128
    %2542 = vxpose.xlu0.b32.cont [11/16] 0.0, 128
    %2543 = vxpose.xlu0.b32.cont [12/16] 0.0, 128
    %2544 = vxpose.xlu0.b32.cont [13/16] 0.0, 128
    %2545 = vxpose.xlu0.b32.cont [14/16] 0.0, 128
    %2546 = vxpose.xlu0.b32.cont [15/16] 0.0, 128
    %2547 = vxpose.xlu0.b32.end [16/16] 0.0, 128
    %v2548 = vpop.trf.xlu0
    %v2549 = vpop.trf.xlu0
    %v2550 = vpop.trf.xlu0
    %v2551 = vpop.trf.xlu0
    %v2552 = vpop.trf.xlu0
    %v2553 = vpop.trf.xlu0
    %v2554 = vpop.trf.xlu0
    %v2555 = vpop.trf.xlu0
    %v2556 = vpop.trf.xlu0
    %v2557 = vpop.trf.xlu0
    %v2558 = vpop.trf.xlu0
    %v2559 = vpop.trf.xlu0
    %v2560 = vpop.trf.xlu0
    %v2561 = vpop.trf.xlu0
    %v2562 = vpop.trf.xlu0
    %v2563 = vpop.trf.xlu0
    %s2564 = scalar_lea.vmem %s14, 128
    %2565 = vst.msk [vmem:[%s2564] sm:$0xff] %vm2467, %v2548
    %2566 = vst.msk [vmem:[%s2564 + $0x8] sm:$0xff] %vm2467, %v2549
    %2567 = vst.msk [vmem:[%s2564 + $0x10] sm:$0xff] %vm2467, %v2550
    %2568 = vst.msk [vmem:[%s2564 + $0x18] sm:$0xff] %vm2467, %v2551
    %2569 = vst.msk [vmem:[%s2564 + $0x20] sm:$0xff] %vm2467, %v2552
    %2570 = vst.msk [vmem:[%s2564 + $0x28] sm:$0xff] %vm2467, %v2553
    %2571 = vst.msk [vmem:[%s2564 + $0x30] sm:$0xff] %vm2467, %v2554
    %2572 = vst.msk [vmem:[%s2564 + $0x38] sm:$0xff] %vm2467, %v2555
    %2573 = vst.msk [vmem:[%s2564 + $0x40] sm:$0xff] %vm2467, %v2556
    %2574 = vst.msk [vmem:[%s2564 + $0x48] sm:$0xff] %vm2467, %v2557
    %2575 = vst.msk [vmem:[%s2564 + $0x50] sm:$0xff] %vm2467, %v2558
    %2576 = vst.msk [vmem:[%s2564 + $0x58] sm:$0xff] %vm2467, %v2559
    %2577 = vst.msk [vmem:[%s2564 + $0x60] sm:$0xff] %vm2467, %v2560
    %2578 = vst.msk [vmem:[%s2564 + $0x68] sm:$0xff] %vm2467, %v2561
    %2579 = vst.msk [vmem:[%s2564 + $0x70] sm:$0xff] %vm2467, %v2562
    %2580 = vst.msk [vmem:[%s2564 + $0x78] sm:$0xff] %vm2467, %v2563
    %2581 = vxpose.xlu0.b32.start [1/16] %v2416, 128
    %2582 = vxpose.xlu0.b32.cont [2/16] %v2418, 128
    %2583 = vxpose.xlu0.b32.cont [3/16] %v2421, 128
    %2584 = vxpose.xlu0.b32.cont [4/16] %v2423, 128
    %2585 = vxpose.xlu0.b32.cont [5/16] %v2426, 128
    %2586 = vxpose.xlu0.b32.cont [6/16] %v2428, 128
    %2587 = vxpose.xlu0.b32.cont [7/16] %v2431, 128
    %2588 = vxpose.xlu0.b32.cont [8/16] %v2433, 128
    %2589 = vxpose.xlu0.b32.cont [9/16] 0.0, 128
    %2590 = vxpose.xlu0.b32.cont [10/16] 0.0, 128
    %2591 = vxpose.xlu0.b32.cont [11/16] 0.0, 128
    %2592 = vxpose.xlu0.b32.cont [12/16] 0.0, 128
    %2593 = vxpose.xlu0.b32.cont [13/16] 0.0, 128
    %2594 = vxpose.xlu0.b32.cont [14/16] 0.0, 128
    %2595 = vxpose.xlu0.b32.cont [15/16] 0.0, 128
    %2596 = vxpose.xlu0.b32.end [16/16] 0.0, 128
    %v2597 = vpop.trf.xlu0
    %v2598 = vpop.trf.xlu0
    %v2599 = vpop.trf.xlu0
    %v2600 = vpop.trf.xlu0
    %v2601 = vpop.trf.xlu0
    %v2602 = vpop.trf.xlu0
    %v2603 = vpop.trf.xlu0
    %v2604 = vpop.trf.xlu0
    %v2605 = vpop.trf.xlu0
    %v2606 = vpop.trf.xlu0
    %v2607 = vpop.trf.xlu0
    %v2608 = vpop.trf.xlu0
    %v2609 = vpop.trf.xlu0
    %v2610 = vpop.trf.xlu0
    %v2611 = vpop.trf.xlu0
    %v2612 = vpop.trf.xlu0
    %s2613 = scalar_lea.vmem %s15, 128
    %2614 = vst.msk [vmem:[%s2613] sm:$0xff] %vm2467, %v2597
    %2615 = vst.msk [vmem:[%s2613 + $0x8] sm:$0xff] %vm2467, %v2598
    %2616 = vst.msk [vmem:[%s2613 + $0x10] sm:$0xff] %vm2467, %v2599
    %2617 = vst.msk [vmem:[%s2613 + $0x18] sm:$0xff] %vm2467, %v2600
    %2618 = vst.msk [vmem:[%s2613 + $0x20] sm:$0xff] %vm2467, %v2601
    %2619 = vst.msk [vmem:[%s2613 + $0x28] sm:$0xff] %vm2467, %v2602
    %2620 = vst.msk [vmem:[%s2613 + $0x30] sm:$0xff] %vm2467, %v2603
    %2621 = vst.msk [vmem:[%s2613 + $0x38] sm:$0xff] %vm2467, %v2604
    %2622 = vst.msk [vmem:[%s2613 + $0x40] sm:$0xff] %vm2467, %v2605
    %2623 = vst.msk [vmem:[%s2613 + $0x48] sm:$0xff] %vm2467, %v2606
    %2624 = vst.msk [vmem:[%s2613 + $0x50] sm:$0xff] %vm2467, %v2607
    %2625 = vst.msk [vmem:[%s2613 + $0x58] sm:$0xff] %vm2467, %v2608
    %2626 = vst.msk [vmem:[%s2613 + $0x60] sm:$0xff] %vm2467, %v2609
    %2627 = vst.msk [vmem:[%s2613 + $0x68] sm:$0xff] %vm2467, %v2610
    %2628 = vst.msk [vmem:[%s2613 + $0x70] sm:$0xff] %vm2467, %v2611
    %2629 = vst.msk [vmem:[%s2613 + $0x78] sm:$0xff] %vm2467, %v2612
    // Predicated region
    $region58: #{tpu_custom_call.1} parent=1 // pred_check
      _
    $region59: #{tpu_custom_call.1} parent=1 // pred_check_branch
      %2631 = sbr.rel (0) target = $region61
    $region60: #{tpu_custom_call.1} parent=1 // pred_region
      _
    $region61: #{tpu_custom_call.1} parent=1 // pred_fallthru
      _
    // Predicated region
    $region62: #{tpu_custom_call.1} parent=1 // pred_check
      _
    $region63: #{tpu_custom_call.1} parent=1 // pred_check_branch
      %2633 = sbr.rel (0) target = $region65
    $region64: #{tpu_custom_call.1} parent=1 // pred_region
      _
    $region65: #{tpu_custom_call.1} parent=1 // pred_fallthru
      _
    // Predicated region
    $region66: #{tpu_custom_call.1} parent=1 // pred_check
      _
    $region67: #{tpu_custom_call.1} parent=1 // pred_check_branch
      %2635 = sbr.rel (0) target = $region69
    $region68: #{tpu_custom_call.1} parent=1 // pred_region
      _
    $region69: #{tpu_custom_call.1} parent=1 // pred_fallthru
      _
    // Predicated region
    $region70: #{tpu_custom_call.1} parent=1 // pred_check
      _
    $region71: #{tpu_custom_call.1} parent=1 // pred_check_branch
      %2637 = sbr.rel (0) target = $region73
    $region72: #{tpu_custom_call.1} parent=1 // pred_region
      _
    $region73: #{tpu_custom_call.1} parent=1 // pred_fallthru
      _
    // Predicated region
    $region74: #{tpu_custom_call.1} parent=1 // pred_check
      _
    $region75: #{tpu_custom_call.1} parent=1 // pred_check_branch
      %2639 = sbr.rel (0) target = $region77
    $region76: #{tpu_custom_call.1} parent=1 // pred_region
      _
    $region77: #{tpu_custom_call.1} parent=1 // pred_fallthru
      _
    // Predicated region
    $region78: #{tpu_custom_call.1} parent=1 // pred_check
      _
    $region79: #{tpu_custom_call.1} parent=1 // pred_check_branch
      %2641 = sbr.rel (0) target = $region81
    $region80: #{tpu_custom_call.1} parent=1 // pred_region
      _
    $region81: #{tpu_custom_call.1} parent=1 // pred_fallthru
      _
    %2642 = vsyncpa [#allocation4], 1

</llo_original>
